<compile_context>
chip_gen: v6e
topology: v6e:2x2x1
jax: 0.10.0
libtpu: 0.0.40
codegen_flags: <defaults>
</compile_context>

<pallas_src>
import functools

import jax
import jax.numpy as jnp
from jax import lax
from jax.experimental import pallas as pl
from jax.experimental.pallas import tpu as pltpu


# ----------------------------------------------------------------------------
# Glue: bilinear 2x downsample matching F.interpolate(..., align_corners=True)
# ----------------------------------------------------------------------------
# TODO(synk): the bilinear downsample is a cheap data-dependent gather; it is
# kept in plain JAX (one pass over the foreground) rather than inside the
# Pallas kernel.
def _bilinear_downsample_align_corners(x, out_h, out_w):
    # x: (B, H, W, C) -> (B, out_h, out_w, C)
    B, H, W, C = x.shape

    def coords(n_out, n_in):
        if n_out == 1:
            return jnp.zeros((1,), jnp.float32)
        return jnp.arange(n_out, dtype=jnp.float32) * ((n_in - 1) / (n_out - 1))

    ys, xs = coords(out_h, H), coords(out_w, W)
    y0 = jnp.floor(ys).astype(jnp.int32)
    x0 = jnp.floor(xs).astype(jnp.int32)
    y1 = jnp.minimum(y0 + 1, H - 1)
    x1 = jnp.minimum(x0 + 1, W - 1)
    wy = (ys - y0.astype(jnp.float32)).reshape(1, out_h, 1, 1)
    wx = (xs - x0.astype(jnp.float32)).reshape(1, 1, out_w, 1)

    top = jnp.take(x, y0, axis=1)
    bot = jnp.take(x, y1, axis=1)

    def horiz(r):
        return jnp.take(r, x0, axis=2) * (1.0 - wx) + jnp.take(r, x1, axis=2) * wx

    return horiz(top) * (1.0 - wy) + horiz(bot) * wy


# ----------------------------------------------------------------------------
# Fused RAL kernel: one batch element per grid step, everything stays in VMEM
# ----------------------------------------------------------------------------
def _ral_kernel(fg_ref, bgr_ref, o_ref, *, Hf, Wf, C, scale):
    """fg_ref : (1, Hf+2, Wf+2, C)  zero-padded downsampled foreground (NHWC)
       bgr_ref: (1, 4, Hf+1, Wf+1, C) pixel-unshuffled zero-padded background:
                bgr[0, 2*r+s, u, v, c] == bg_pad[2*u + r, 2*v + s, c]
       o_ref  : (1, 4, Hf, Wf, C)   output parity planes:
                o[0, 2*pr+pc, m, n, c] == out_nhwc[2*m+pr, 2*n+pc, c]
    """
    Np = Hf * Wf
    f32 = jnp.float32
    hi = lax.Precision.HIGHEST

    fg = fg_ref[0]                                            # (Hf+2, Wf+2, C)

    # ---- im2col of the 3x3 foreground patches: P[q, tap*C + c] --------------
    cols = []
    for dy in range(3):
        for dx in range(3):
            cols.append(fg[dy:dy + Hf, dx:dx + Wf, :].reshape(Np, C))
    P = jnp.concatenate(cols, axis=1)                         # (Np, 9*C)

    # per-patch L2 normalisation of the filter side (torch: escape_NaN = 1e-4)
    n2 = jnp.sum(P * P, axis=1, keepdims=True)                # (Np, 1)
    inv_n = 1.0 / jnp.maximum(jnp.sqrt(n2), 1e-4)
    Pn = P * inv_n

    # ---- score map: S[q, p] = <patch(q), patch(p)/||patch(p)||> -------------
    S = lax.dot_general(P, Pn, (((1,), (1,)), ((), ())),
                        precision=hi, preferred_element_type=f32)  # (Np, Np)
    S = S * scale

    # softmax over the patch axis p, then clamp (matches the torch module)
    m = jnp.max(S, axis=1, keepdims=True)
    e = jnp.exp(S - m)
    A = e / jnp.sum(e, axis=1, keepdims=True)
    A = jnp.maximum(A, 1e-8)

    # ---- background patch bank Bm[p, (ky*4+kx)*C + c] -----------------------
    bgr = bgr_ref[0]                                          # (4, Hf+1, Wf+1, C)
    bcols = []
    for ky in range(4):
        i, r = divmod(ky, 2)                                  # ky = 2*i + r
        for kx in range(4):
            j, s = divmod(kx, 2)                              # kx = 2*j + s
            tap = bgr[2 * r + s, i:i + Hf, j:j + Wf, :]       # contiguous slice
            bcols.append(tap.reshape(Np, C))
    Bm = jnp.concatenate(bcols, axis=1)                       # (Np, 16*C)

    # one lane-dense MXU matmul instead of 16 narrow ones
    O = jnp.dot(A, Bm, precision=hi, preferred_element_type=f32)   # (Np, 16*C)

    # ---- col2im: overlap-add of the 4x4 / stride-2 / pad-1 transposed conv --
    def slab(ky, kx):
        t = ky * 4 + kx
        return O[:, t * C:(t + 1) * C].reshape(Hf, Wf, C)

    zrow = jnp.zeros((1, Wf, C), f32)
    zcol = jnp.zeros((Hf, 1, C), f32)

    def shifted(x, dy, dx):
        # y[m, n] = x[m + dy, n + dx], zero outside the slab
        if dy == 1:
            x = jnp.concatenate([x[1:], zrow], axis=0)
        elif dy == -1:
            x = jnp.concatenate([zrow, x[:-1]], axis=0)
        if dx == 1:
            x = jnp.concatenate([x[:, 1:], zcol], axis=1)
        elif dx == -1:
            x = jnp.concatenate([zcol, x[:, :-1]], axis=1)
        return x

    # output row 2m+pr gathers taps (ky, dy): S_ky[m + dy]; same for columns.
    taps = {0: ((1, 0), (3, -1)), 1: ((0, 1), (2, 0))}

    for pr in (0, 1):
        for pc in (0, 1):
            parts = [shifted(slab(ky, kx), dy, dx)
                     for ky, dy in taps[pr] for kx, dx in taps[pc]]
            q = parts[0] + parts[1] + parts[2] + parts[3]
            o_ref[0, 2 * pr + pc] = q * 0.25                  # torch: "/ 4.0"


# ----------------------------------------------------------------------------
# RAL forward (NCHW in / NCHW out, matching the PyTorch module defaults)
# ----------------------------------------------------------------------------
def ral_forward(background, foreground, *, rate=2, kernel_size=3, stride=1,
                softmax_scale=10.0):
    assert kernel_size == 3 and stride == 1 and rate == 2, \
        "kernel implements the module defaults (kernel_size=3, stride=1, rate=2)"
    B, C, Hb, Wb = background.shape
    _, _, Hfg, Wfg = foreground.shape
    Hf, Wf = int(Hfg * (1.0 / rate)), int(Wfg * (1.0 / rate))
    assert (Hf, Wf) == (Hb // rate, Wb // rate) and Hb % 2 == 0 and Wb % 2 == 0, \
        "foreground/background sizes must match (patch counts must agree)"

    # NCHW -> NHWC (channels on the lane axis)
    fg = jnp.transpose(foreground, (0, 2, 3, 1))
    bg = jnp.transpose(background, (0, 2, 3, 1))

    # downsample + single zero-pad of the foreground
    fg_ds = _bilinear_downsample_align_corners(fg, Hf, Wf)
    fg_pad = jnp.pad(fg_ds, ((0, 0), (1, 1), (1, 1), (0, 0)))  # (B, Hf+2, Wf+2, C)

    # zero-pad and pixel-unshuffle the background ONCE in XLA so every
    # 4x4/stride-2 patch tap becomes a contiguous slice inside the kernel
    # (no strided VMEM access, no per-patch HBM re-reads).
    bg_pad = jnp.pad(bg, ((0, 0), (1, 1), (1, 1), (0, 0)))     # (B, Hb+2, Wb+2, C)
    bg_r = bg_pad.reshape(B, Hf + 1, 2, Wf + 1, 2, C)
    bg_r = jnp.transpose(bg_r, (0, 2, 4, 1, 3, 5)).reshape(B, 4, Hf + 1, Wf + 1, C)

    kern = functools.partial(_ral_kernel, Hf=Hf, Wf=Wf, C=C,
                             scale=float(softmax_scale))
    outq = pl.pallas_call(
        kern,
        out_shape=jax.ShapeDtypeStruct((B, 4, Hf, Wf, C), jnp.float32),
        grid=(B,),
        in_specs=[
            pl.BlockSpec((1, Hf + 2, Wf + 2, C), lambda b: (b, 0, 0, 0)),
            pl.BlockSpec((1, 4, Hf + 1, Wf + 1, C), lambda b: (b, 0, 0, 0, 0)),
        ],
        out_specs=pl.BlockSpec((1, 4, Hf, Wf, C), lambda b: (b, 0, 0, 0, 0)),
        compiler_params=pltpu.CompilerParams(dimension_semantics=("parallel",)),
    )(fg_pad, bg_r)

    # outq[b, 2*pr+pc, m, n, c] == out_nhwc[b, 2m+pr, 2n+pc, c]
    # fold the 2x pixel-shuffle into the NHWC->NCHW transpose (single XLA op).
    out = outq.reshape(B, 2, 2, Hf, Wf, C)
    out = jnp.transpose(out, (0, 5, 3, 1, 4, 2)).reshape(B, C, Hb, Wb)
    return out


# ----------------------------------------------------------------------------
# Pure-JAX reference (mirrors the PyTorch forward op-by-op)
# ----------------------------------------------------------------------------
def ral_ref(background, foreground, *, rate=2, softmax_scale=10.0):
    B, C, Hb, Wb = background.shape
    Hf, Wf = Hb // rate, Wb // rate
    Np = Hf * Wf
    hi = lax.Precision.HIGHEST

    fg_ds = _bilinear_downsample_align_corners(
        jnp.transpose(foreground, (0, 2, 3, 1)), Hf, Wf)
    fg_ds = jnp.transpose(fg_ds, (0, 3, 1, 2))                # (B, C, Hf, Wf)

    def per_item(fg_b, bg_b):                                 # (C,Hf,Wf), (C,Hb,Wb)
        fpad = jnp.pad(fg_b, ((0, 0), (1, 1), (1, 1)))
        pat = jnp.stack([fpad[:, dy:dy + Hf, dx:dx + Wf]
                         for dy in range(3) for dx in range(3)], axis=0)
        pat = pat.reshape(3, 3, C, Hf, Wf)
        w = jnp.transpose(pat, (3, 4, 2, 0, 1)).reshape(Np, C, 3, 3)
        norm = jnp.sqrt(jnp.sum(w * w, axis=(1, 2, 3), keepdims=True))
        wn = w / jnp.maximum(norm, 1e-4)
        score = lax.conv_general_dilated(
            fg_b[None], wn, (1, 1), [(1, 1), (1, 1)],
            dimension_numbers=("NCHW", "OIHW", "NCHW"), precision=hi)[0]
        att = jax.nn.softmax(score * softmax_scale, axis=0)   # (Np, Hf, Wf)
        att = jnp.maximum(att, 1e-8)

        bpad = jnp.pad(bg_b, ((0, 0), (1, 1), (1, 1)))
        out = jnp.zeros((C, Hb + 2, Wb + 2), jnp.float32)
        for ky in range(4):
            for kx in range(4):
                slab = bpad[:, ky:ky + 2 * Hf:2, kx:kx + 2 * Wf:2]  # (C, Hf, Wf)
                contrib = jnp.einsum('pyx,cp->cyx', att, slab.reshape(C, Np),
                                     precision=hi)
                out = out.at[:, ky:ky + 2 * Hf:2, kx:kx + 2 * Wf:2].add(contrib)
        return out[:, 1:Hb + 1, 1:Wb + 1] / 4.0

    return jax.vmap(per_item)(fg_ds, background)


# ----------------------------------------------------------------------------
if __name__ == "__main__":
    B, C, H, W = 2, 4, 16, 16
    key = jax.random.PRNGKey(0)
    kb, kf = jax.random.split(key)
    background = jax.random.normal(kb, (B, C, H, W), dtype=jnp.float32)
    foreground = jax.random.normal(kf, (B, C, H, W), dtype=jnp.float32)

    out = jax.block_until_ready(jax.jit(ral_forward)(background, foreground))
    ref = jax.block_until_ready(jax.jit(ral_ref)(background, foreground))

    assert out.shape == (B, C, H, W)
    assert bool(jnp.isfinite(out).all())
    max_err = float(jnp.max(jnp.abs(out - ref)))
    assert bool(jnp.allclose(out, ref, atol=1e-3, rtol=1e-3)), \
        f"mismatch vs reference (max abs err {max_err})"
    print("KERNEL_OK")
</pallas_src>

<mosaic_0001>
module attributes {stable_mosaic.version = 11 : i64} {
  func.func @_ral_kernel(%arg0: i32, %arg1: memref<1x10x10x4xf32, #tpu.memory_space<vmem>>, %arg2: memref<1x4x9x9x4xf32, #tpu.memory_space<vmem>>, %arg3: memref<1x4x8x8x4xf32, #tpu.memory_space<vmem>>) attributes {dimension_semantics = [#tpu.dimension_semantics<parallel>], iteration_bounds = array<i64: 2>, scalar_prefetch = 0 : i64, scratch_operands = 0 : i64, tpu.core_type = #tpu.core_type<tc>, window_params = [{transform_indices = @transform_0, window_bounds = array<i64: 1, 10, 10, 4>}, {transform_indices = @transform_1, window_bounds = array<i64: 1, 4, 9, 9, 4>}, {transform_indices = @transform_2, window_bounds = array<i64: 1, 4, 8, 8, 4>}]} {
    %c0 = arith.constant 0 : index
    %c0_0 = arith.constant 0 : index
    %c0_1 = arith.constant 0 : index
    %c0_2 = arith.constant 0 : index
    %0 = vector.load %arg1[%c0, %c0_0, %c0_1, %c0_2] : memref<1x10x10x4xf32, #tpu.memory_space<vmem>>, vector<1x10x10x4xf32>
    %1 = vector.shape_cast %0 : vector<1x10x10x4xf32> to vector<10x10x4xf32>
    %2 = vector.extract_strided_slice %1 {offsets = [0, 0, 0], sizes = [8, 8, 4], strides = [1, 1, 1]} : vector<10x10x4xf32> to vector<8x8x4xf32>
    %3 = vector.shape_cast %2 : vector<8x8x4xf32> to vector<64x4xf32>
    %4 = vector.extract_strided_slice %1 {offsets = [0, 1, 0], sizes = [8, 8, 4], strides = [1, 1, 1]} : vector<10x10x4xf32> to vector<8x8x4xf32>
    %5 = vector.shape_cast %4 : vector<8x8x4xf32> to vector<64x4xf32>
    %6 = vector.extract_strided_slice %1 {offsets = [0, 2, 0], sizes = [8, 8, 4], strides = [1, 1, 1]} : vector<10x10x4xf32> to vector<8x8x4xf32>
    %7 = vector.shape_cast %6 : vector<8x8x4xf32> to vector<64x4xf32>
    %8 = vector.extract_strided_slice %1 {offsets = [1, 0, 0], sizes = [8, 8, 4], strides = [1, 1, 1]} : vector<10x10x4xf32> to vector<8x8x4xf32>
    %9 = vector.shape_cast %8 : vector<8x8x4xf32> to vector<64x4xf32>
    %10 = vector.extract_strided_slice %1 {offsets = [1, 1, 0], sizes = [8, 8, 4], strides = [1, 1, 1]} : vector<10x10x4xf32> to vector<8x8x4xf32>
    %11 = vector.shape_cast %10 : vector<8x8x4xf32> to vector<64x4xf32>
    %12 = vector.extract_strided_slice %1 {offsets = [1, 2, 0], sizes = [8, 8, 4], strides = [1, 1, 1]} : vector<10x10x4xf32> to vector<8x8x4xf32>
    %13 = vector.shape_cast %12 : vector<8x8x4xf32> to vector<64x4xf32>
    %14 = vector.extract_strided_slice %1 {offsets = [2, 0, 0], sizes = [8, 8, 4], strides = [1, 1, 1]} : vector<10x10x4xf32> to vector<8x8x4xf32>
    %15 = vector.shape_cast %14 : vector<8x8x4xf32> to vector<64x4xf32>
    %16 = vector.extract_strided_slice %1 {offsets = [2, 1, 0], sizes = [8, 8, 4], strides = [1, 1, 1]} : vector<10x10x4xf32> to vector<8x8x4xf32>
    %17 = vector.shape_cast %16 : vector<8x8x4xf32> to vector<64x4xf32>
    %18 = vector.extract_strided_slice %1 {offsets = [2, 2, 0], sizes = [8, 8, 4], strides = [1, 1, 1]} : vector<10x10x4xf32> to vector<8x8x4xf32>
    %19 = vector.shape_cast %18 : vector<8x8x4xf32> to vector<64x4xf32>
    %20 = tpu.concatenate %3, %5, %7, %9, %11, %13, %15, %17, %19 in 1 : vector<64x4xf32>, vector<64x4xf32>, vector<64x4xf32>, vector<64x4xf32>, vector<64x4xf32>, vector<64x4xf32>, vector<64x4xf32>, vector<64x4xf32>, vector<64x4xf32> -> vector<64x36xf32>
    %21 = arith.mulf %20, %20 : vector<64x36xf32>
    %cst = arith.constant dense<0.000000e+00> : vector<64xf32>
    %22 = vector.multi_reduction <add>, %21, %cst [1] : vector<64x36xf32> to vector<64xf32>
    %23 = vector.shape_cast %22 : vector<64xf32> to vector<64x1xf32>
    %24 = math.sqrt %23 : vector<64x1xf32>
    %cst_3 = arith.constant 9.99999974E-5 : f32
    %25 = vector.broadcast %cst_3 : f32 to vector<64x1xf32>
    %26 = arith.maximumf %24, %25 : vector<64x1xf32>
    %cst_4 = arith.constant 1.000000e+00 : f32
    %27 = vector.broadcast %cst_4 : f32 to vector<64x1xf32>
    %28 = arith.divf %27, %26 : vector<64x1xf32>
    %29 = vector.broadcast %28 : vector<64x1xf32> to vector<64x36xf32>
    %30 = arith.mulf %20, %29 : vector<64x36xf32>
    %cst_5 = arith.constant dense<0.000000e+00> : vector<64x64xf32>
    %31 = tpu.matmul %20, %30, %cst_5 {dimension_numbers = #tpu.dot_dimension_numbers<[1], [1], [0], [0], [0, 0, 1, 0], [], []>, precision = #tpu.contract_precision<fp32>} : vector<64x36xf32>, vector<64x36xf32>, vector<64x64xf32> -> vector<64x64xf32>
    %cst_6 = arith.constant 1.000000e+01 : f32
    %32 = vector.broadcast %cst_6 : f32 to vector<64x64xf32>
    %33 = arith.mulf %31, %32 : vector<64x64xf32>
    %cst_7 = arith.constant dense<0xFF800000> : vector<64xf32>
    %34 = vector.multi_reduction <maximumf>, %33, %cst_7 [1] : vector<64x64xf32> to vector<64xf32>
    %35 = vector.shape_cast %34 : vector<64xf32> to vector<64x1xf32>
    %36 = vector.broadcast %35 : vector<64x1xf32> to vector<64x64xf32>
    %37 = arith.subf %33, %36 : vector<64x64xf32>
    %38 = math.exp %37 : vector<64x64xf32>
    %cst_8 = arith.constant dense<0.000000e+00> : vector<64xf32>
    %39 = vector.multi_reduction <add>, %38, %cst_8 [1] : vector<64x64xf32> to vector<64xf32>
    %40 = vector.shape_cast %39 : vector<64xf32> to vector<64x1xf32>
    %41 = vector.broadcast %40 : vector<64x1xf32> to vector<64x64xf32>
    %42 = arith.divf %38, %41 : vector<64x64xf32>
    %cst_9 = arith.constant 9.99999993E-9 : f32
    %43 = vector.broadcast %cst_9 : f32 to vector<64x64xf32>
    %44 = arith.maximumf %42, %43 : vector<64x64xf32>
    %c0_10 = arith.constant 0 : index
    %c0_11 = arith.constant 0 : index
    %c0_12 = arith.constant 0 : index
    %c0_13 = arith.constant 0 : index
    %c0_14 = arith.constant 0 : index
    %45 = vector.load %arg2[%c0_10, %c0_11, %c0_12, %c0_13, %c0_14] : memref<1x4x9x9x4xf32, #tpu.memory_space<vmem>>, vector<1x4x9x9x4xf32>
    %46 = vector.shape_cast %45 : vector<1x4x9x9x4xf32> to vector<4x9x9x4xf32>
    %47 = vector.extract_strided_slice %46 {offsets = [0, 0, 0, 0], sizes = [1, 8, 8, 4], strides = [1, 1, 1, 1]} : vector<4x9x9x4xf32> to vector<1x8x8x4xf32>
    %48 = vector.shape_cast %47 : vector<1x8x8x4xf32> to vector<8x8x4xf32>
    %49 = vector.shape_cast %48 : vector<8x8x4xf32> to vector<64x4xf32>
    %50 = vector.extract_strided_slice %46 {offsets = [1, 0, 0, 0], sizes = [1, 8, 8, 4], strides = [1, 1, 1, 1]} : vector<4x9x9x4xf32> to vector<1x8x8x4xf32>
    %51 = vector.shape_cast %50 : vector<1x8x8x4xf32> to vector<8x8x4xf32>
    %52 = vector.shape_cast %51 : vector<8x8x4xf32> to vector<64x4xf32>
    %53 = vector.extract_strided_slice %46 {offsets = [0, 0, 1, 0], sizes = [1, 8, 8, 4], strides = [1, 1, 1, 1]} : vector<4x9x9x4xf32> to vector<1x8x8x4xf32>
    %54 = vector.shape_cast %53 : vector<1x8x8x4xf32> to vector<8x8x4xf32>
    %55 = vector.shape_cast %54 : vector<8x8x4xf32> to vector<64x4xf32>
    %56 = vector.extract_strided_slice %46 {offsets = [1, 0, 1, 0], sizes = [1, 8, 8, 4], strides = [1, 1, 1, 1]} : vector<4x9x9x4xf32> to vector<1x8x8x4xf32>
    %57 = vector.shape_cast %56 : vector<1x8x8x4xf32> to vector<8x8x4xf32>
    %58 = vector.shape_cast %57 : vector<8x8x4xf32> to vector<64x4xf32>
    %59 = vector.extract_strided_slice %46 {offsets = [2, 0, 0, 0], sizes = [1, 8, 8, 4], strides = [1, 1, 1, 1]} : vector<4x9x9x4xf32> to vector<1x8x8x4xf32>
    %60 = vector.shape_cast %59 : vector<1x8x8x4xf32> to vector<8x8x4xf32>
    %61 = vector.shape_cast %60 : vector<8x8x4xf32> to vector<64x4xf32>
    %62 = vector.extract_strided_slice %46 {offsets = [3, 0, 0, 0], sizes = [1, 8, 8, 4], strides = [1, 1, 1, 1]} : vector<4x9x9x4xf32> to vector<1x8x8x4xf32>
    %63 = vector.shape_cast %62 : vector<1x8x8x4xf32> to vector<8x8x4xf32>
    %64 = vector.shape_cast %63 : vector<8x8x4xf32> to vector<64x4xf32>
    %65 = vector.extract_strided_slice %46 {offsets = [2, 0, 1, 0], sizes = [1, 8, 8, 4], strides = [1, 1, 1, 1]} : vector<4x9x9x4xf32> to vector<1x8x8x4xf32>
    %66 = vector.shape_cast %65 : vector<1x8x8x4xf32> to vector<8x8x4xf32>
    %67 = vector.shape_cast %66 : vector<8x8x4xf32> to vector<64x4xf32>
    %68 = vector.extract_strided_slice %46 {offsets = [3, 0, 1, 0], sizes = [1, 8, 8, 4], strides = [1, 1, 1, 1]} : vector<4x9x9x4xf32> to vector<1x8x8x4xf32>
    %69 = vector.shape_cast %68 : vector<1x8x8x4xf32> to vector<8x8x4xf32>
    %70 = vector.shape_cast %69 : vector<8x8x4xf32> to vector<64x4xf32>
    %71 = vector.extract_strided_slice %46 {offsets = [0, 1, 0, 0], sizes = [1, 8, 8, 4], strides = [1, 1, 1, 1]} : vector<4x9x9x4xf32> to vector<1x8x8x4xf32>
    %72 = vector.shape_cast %71 : vector<1x8x8x4xf32> to vector<8x8x4xf32>
    %73 = vector.shape_cast %72 : vector<8x8x4xf32> to vector<64x4xf32>
    %74 = vector.extract_strided_slice %46 {offsets = [1, 1, 0, 0], sizes = [1, 8, 8, 4], strides = [1, 1, 1, 1]} : vector<4x9x9x4xf32> to vector<1x8x8x4xf32>
    %75 = vector.shape_cast %74 : vector<1x8x8x4xf32> to vector<8x8x4xf32>
    %76 = vector.shape_cast %75 : vector<8x8x4xf32> to vector<64x4xf32>
    %77 = vector.extract_strided_slice %46 {offsets = [0, 1, 1, 0], sizes = [1, 8, 8, 4], strides = [1, 1, 1, 1]} : vector<4x9x9x4xf32> to vector<1x8x8x4xf32>
    %78 = vector.shape_cast %77 : vector<1x8x8x4xf32> to vector<8x8x4xf32>
    %79 = vector.shape_cast %78 : vector<8x8x4xf32> to vector<64x4xf32>
    %80 = vector.extract_strided_slice %46 {offsets = [1, 1, 1, 0], sizes = [1, 8, 8, 4], strides = [1, 1, 1, 1]} : vector<4x9x9x4xf32> to vector<1x8x8x4xf32>
    %81 = vector.shape_cast %80 : vector<1x8x8x4xf32> to vector<8x8x4xf32>
    %82 = vector.shape_cast %81 : vector<8x8x4xf32> to vector<64x4xf32>
    %83 = vector.extract_strided_slice %46 {offsets = [2, 1, 0, 0], sizes = [1, 8, 8, 4], strides = [1, 1, 1, 1]} : vector<4x9x9x4xf32> to vector<1x8x8x4xf32>
    %84 = vector.shape_cast %83 : vector<1x8x8x4xf32> to vector<8x8x4xf32>
    %85 = vector.shape_cast %84 : vector<8x8x4xf32> to vector<64x4xf32>
    %86 = vector.extract_strided_slice %46 {offsets = [3, 1, 0, 0], sizes = [1, 8, 8, 4], strides = [1, 1, 1, 1]} : vector<4x9x9x4xf32> to vector<1x8x8x4xf32>
    %87 = vector.shape_cast %86 : vector<1x8x8x4xf32> to vector<8x8x4xf32>
    %88 = vector.shape_cast %87 : vector<8x8x4xf32> to vector<64x4xf32>
    %89 = vector.extract_strided_slice %46 {offsets = [2, 1, 1, 0], sizes = [1, 8, 8, 4], strides = [1, 1, 1, 1]} : vector<4x9x9x4xf32> to vector<1x8x8x4xf32>
    %90 = vector.shape_cast %89 : vector<1x8x8x4xf32> to vector<8x8x4xf32>
    %91 = vector.shape_cast %90 : vector<8x8x4xf32> to vector<64x4xf32>
    %92 = vector.extract_strided_slice %46 {offsets = [3, 1, 1, 0], sizes = [1, 8, 8, 4], strides = [1, 1, 1, 1]} : vector<4x9x9x4xf32> to vector<1x8x8x4xf32>
    %93 = vector.shape_cast %92 : vector<1x8x8x4xf32> to vector<8x8x4xf32>
    %94 = vector.shape_cast %93 : vector<8x8x4xf32> to vector<64x4xf32>
    %95 = tpu.concatenate %49, %52, %55, %58, %61, %64, %67, %70, %73, %76, %79, %82, %85, %88, %91, %94 in 1 : vector<64x4xf32>, vector<64x4xf32>, vector<64x4xf32>, vector<64x4xf32>, vector<64x4xf32>, vector<64x4xf32>, vector<64x4xf32>, vector<64x4xf32>, vector<64x4xf32>, vector<64x4xf32>, vector<64x4xf32>, vector<64x4xf32>, vector<64x4xf32>, vector<64x4xf32>, vector<64x4xf32>, vector<64x4xf32> -> vector<64x64xf32>
    %cst_15 = arith.constant dense<0.000000e+00> : vector<64x64xf32>
    %96 = tpu.matmul %44, %95, %cst_15 {dimension_numbers = #tpu.dot_dimension_numbers<[1], [0], [0], [1], [0, 0, 1, 1], [], []>, precision = #tpu.contract_precision<fp32>} : vector<64x64xf32>, vector<64x64xf32>, vector<64x64xf32> -> vector<64x64xf32>
    %cst_16 = arith.constant 0.000000e+00 : f32
    %97 = vector.broadcast %cst_16 : f32 to vector<1x8x4xf32>
    %cst_17 = arith.constant 0.000000e+00 : f32
    %98 = vector.broadcast %cst_17 : f32 to vector<8x1x4xf32>
    %99 = vector.extract_strided_slice %96 {offsets = [0, 20], sizes = [64, 4], strides = [1, 1]} : vector<64x64xf32> to vector<64x4xf32>
    %100 = vector.shape_cast %99 : vector<64x4xf32> to vector<8x8x4xf32>
    %101 = vector.extract_strided_slice %96 {offsets = [0, 28], sizes = [64, 4], strides = [1, 1]} : vector<64x64xf32> to vector<64x4xf32>
    %102 = vector.shape_cast %101 : vector<64x4xf32> to vector<8x8x4xf32>
    %103 = vector.extract_strided_slice %102 {offsets = [0, 0, 0], sizes = [8, 7, 4], strides = [1, 1, 1]} : vector<8x8x4xf32> to vector<8x7x4xf32>
    %104 = tpu.concatenate %98, %103 in 1 : vector<8x1x4xf32>, vector<8x7x4xf32> -> vector<8x8x4xf32>
    %105 = vector.extract_strided_slice %96 {offsets = [0, 52], sizes = [64, 4], strides = [1, 1]} : vector<64x64xf32> to vector<64x4xf32>
    %106 = vector.shape_cast %105 : vector<64x4xf32> to vector<8x8x4xf32>
    %107 = vector.extract_strided_slice %106 {offsets = [0, 0, 0], sizes = [7, 8, 4], strides = [1, 1, 1]} : vector<8x8x4xf32> to vector<7x8x4xf32>
    %108 = tpu.concatenate %97, %107 in 0 : vector<1x8x4xf32>, vector<7x8x4xf32> -> vector<8x8x4xf32>
    %109 = vector.extract_strided_slice %96 {offsets = [0, 60], sizes = [64, 4], strides = [1, 1]} : vector<64x64xf32> to vector<64x4xf32>
    %110 = vector.shape_cast %109 : vector<64x4xf32> to vector<8x8x4xf32>
    %111 = vector.extract_strided_slice %110 {offsets = [0, 0, 0], sizes = [7, 8, 4], strides = [1, 1, 1]} : vector<8x8x4xf32> to vector<7x8x4xf32>
    %112 = tpu.concatenate %97, %111 in 0 : vector<1x8x4xf32>, vector<7x8x4xf32> -> vector<8x8x4xf32>
    %113 = vector.extract_strided_slice %112 {offsets = [0, 0, 0], sizes = [8, 7, 4], strides = [1, 1, 1]} : vector<8x8x4xf32> to vector<8x7x4xf32>
    %114 = tpu.concatenate %98, %113 in 1 : vector<8x1x4xf32>, vector<8x7x4xf32> -> vector<8x8x4xf32>
    %115 = arith.addf %100, %104 : vector<8x8x4xf32>
    %116 = arith.addf %115, %108 : vector<8x8x4xf32>
    %117 = arith.addf %116, %114 : vector<8x8x4xf32>
    %cst_18 = arith.constant 2.500000e-01 : f32
    %118 = vector.broadcast %cst_18 : f32 to vector<8x8x4xf32>
    %119 = arith.mulf %117, %118 : vector<8x8x4xf32>
    %c0_19 = arith.constant 0 : index
    %c0_20 = arith.constant 0 : index
    %c0_21 = arith.constant 0 : index
    %c0_22 = arith.constant 0 : index
    %c0_23 = arith.constant 0 : index
    %120 = vector.load %arg3[%c0_19, %c0_20, %c0_21, %c0_22, %c0_23] : memref<1x4x8x8x4xf32, #tpu.memory_space<vmem>>, vector<1x1x8x8x4xf32>
    %121 = vector.shape_cast %120 : vector<1x1x8x8x4xf32> to vector<8x8x4xf32>
    %122 = vector.shape_cast %119 : vector<8x8x4xf32> to vector<1x1x8x8x4xf32>
    tpu.vector_store %arg3[%c0_19, %c0_20, %c0_21, %c0_22, %c0_23], %122 {strides = array<i32>} : memref<1x4x8x8x4xf32, #tpu.memory_space<vmem>>, vector<1x1x8x8x4xf32>,
    %123 = vector.extract_strided_slice %96 {offsets = [0, 16], sizes = [64, 4], strides = [1, 1]} : vector<64x64xf32> to vector<64x4xf32>
    %124 = vector.shape_cast %123 : vector<64x4xf32> to vector<8x8x4xf32>
    %125 = vector.extract_strided_slice %124 {offsets = [0, 1, 0], sizes = [8, 7, 4], strides = [1, 1, 1]} : vector<8x8x4xf32> to vector<8x7x4xf32>
    %126 = tpu.concatenate %125, %98 in 1 : vector<8x7x4xf32>, vector<8x1x4xf32> -> vector<8x8x4xf32>
    %127 = vector.extract_strided_slice %96 {offsets = [0, 24], sizes = [64, 4], strides = [1, 1]} : vector<64x64xf32> to vector<64x4xf32>
    %128 = vector.shape_cast %127 : vector<64x4xf32> to vector<8x8x4xf32>
    %129 = vector.extract_strided_slice %96 {offsets = [0, 48], sizes = [64, 4], strides = [1, 1]} : vector<64x64xf32> to vector<64x4xf32>
    %130 = vector.shape_cast %129 : vector<64x4xf32> to vector<8x8x4xf32>
    %131 = vector.extract_strided_slice %130 {offsets = [0, 0, 0], sizes = [7, 8, 4], strides = [1, 1, 1]} : vector<8x8x4xf32> to vector<7x8x4xf32>
    %132 = tpu.concatenate %97, %131 in 0 : vector<1x8x4xf32>, vector<7x8x4xf32> -> vector<8x8x4xf32>
    %133 = vector.extract_strided_slice %132 {offsets = [0, 1, 0], sizes = [8, 7, 4], strides = [1, 1, 1]} : vector<8x8x4xf32> to vector<8x7x4xf32>
    %134 = tpu.concatenate %133, %98 in 1 : vector<8x7x4xf32>, vector<8x1x4xf32> -> vector<8x8x4xf32>
    %135 = vector.extract_strided_slice %96 {offsets = [0, 56], sizes = [64, 4], strides = [1, 1]} : vector<64x64xf32> to vector<64x4xf32>
    %136 = vector.shape_cast %135 : vector<64x4xf32> to vector<8x8x4xf32>
    %137 = vector.extract_strided_slice %136 {offsets = [0, 0, 0], sizes = [7, 8, 4], strides = [1, 1, 1]} : vector<8x8x4xf32> to vector<7x8x4xf32>
    %138 = tpu.concatenate %97, %137 in 0 : vector<1x8x4xf32>, vector<7x8x4xf32> -> vector<8x8x4xf32>
    %139 = arith.addf %126, %128 : vector<8x8x4xf32>
    %140 = arith.addf %139, %134 : vector<8x8x4xf32>
    %141 = arith.addf %140, %138 : vector<8x8x4xf32>
    %cst_24 = arith.constant 2.500000e-01 : f32
    %142 = vector.broadcast %cst_24 : f32 to vector<8x8x4xf32>
    %143 = arith.mulf %141, %142 : vector<8x8x4xf32>
    %c0_25 = arith.constant 0 : index
    %c1 = arith.constant 1 : index
    %c0_26 = arith.constant 0 : index
    %c0_27 = arith.constant 0 : index
    %c0_28 = arith.constant 0 : index
    %144 = vector.load %arg3[%c0_25, %c1, %c0_26, %c0_27, %c0_28] : memref<1x4x8x8x4xf32, #tpu.memory_space<vmem>>, vector<1x1x8x8x4xf32>
    %145 = vector.shape_cast %144 : vector<1x1x8x8x4xf32> to vector<8x8x4xf32>
    %146 = vector.shape_cast %143 : vector<8x8x4xf32> to vector<1x1x8x8x4xf32>
    tpu.vector_store %arg3[%c0_25, %c1, %c0_26, %c0_27, %c0_28], %146 {strides = array<i32>} : memref<1x4x8x8x4xf32, #tpu.memory_space<vmem>>, vector<1x1x8x8x4xf32>,
    %147 = vector.extract_strided_slice %96 {offsets = [0, 4], sizes = [64, 4], strides = [1, 1]} : vector<64x64xf32> to vector<64x4xf32>
    %148 = vector.shape_cast %147 : vector<64x4xf32> to vector<8x8x4xf32>
    %149 = vector.extract_strided_slice %148 {offsets = [1, 0, 0], sizes = [7, 8, 4], strides = [1, 1, 1]} : vector<8x8x4xf32> to vector<7x8x4xf32>
    %150 = tpu.concatenate %149, %97 in 0 : vector<7x8x4xf32>, vector<1x8x4xf32> -> vector<8x8x4xf32>
    %151 = vector.extract_strided_slice %96 {offsets = [0, 12], sizes = [64, 4], strides = [1, 1]} : vector<64x64xf32> to vector<64x4xf32>
    %152 = vector.shape_cast %151 : vector<64x4xf32> to vector<8x8x4xf32>
    %153 = vector.extract_strided_slice %152 {offsets = [1, 0, 0], sizes = [7, 8, 4], strides = [1, 1, 1]} : vector<8x8x4xf32> to vector<7x8x4xf32>
    %154 = tpu.concatenate %153, %97 in 0 : vector<7x8x4xf32>, vector<1x8x4xf32> -> vector<8x8x4xf32>
    %155 = vector.extract_strided_slice %154 {offsets = [0, 0, 0], sizes = [8, 7, 4], strides = [1, 1, 1]} : vector<8x8x4xf32> to vector<8x7x4xf32>
    %156 = tpu.concatenate %98, %155 in 1 : vector<8x1x4xf32>, vector<8x7x4xf32> -> vector<8x8x4xf32>
    %157 = vector.extract_strided_slice %96 {offsets = [0, 36], sizes = [64, 4], strides = [1, 1]} : vector<64x64xf32> to vector<64x4xf32>
    %158 = vector.shape_cast %157 : vector<64x4xf32> to vector<8x8x4xf32>
    %159 = vector.extract_strided_slice %96 {offsets = [0, 44], sizes = [64, 4], strides = [1, 1]} : vector<64x64xf32> to vector<64x4xf32>
    %160 = vector.shape_cast %159 : vector<64x4xf32> to vector<8x8x4xf32>
    %161 = vector.extract_strided_slice %160 {offsets = [0, 0, 0], sizes = [8, 7, 4], strides = [1, 1, 1]} : vector<8x8x4xf32> to vector<8x7x4xf32>
    %162 = tpu.concatenate %98, %161 in 1 : vector<8x1x4xf32>, vector<8x7x4xf32> -> vector<8x8x4xf32>
    %163 = arith.addf %150, %156 : vector<8x8x4xf32>
    %164 = arith.addf %163, %158 : vector<8x8x4xf32>
    %165 = arith.addf %164, %162 : vector<8x8x4xf32>
    %cst_29 = arith.constant 2.500000e-01 : f32
    %166 = vector.broadcast %cst_29 : f32 to vector<8x8x4xf32>
    %167 = arith.mulf %165, %166 : vector<8x8x4xf32>
    %c0_30 = arith.constant 0 : index
    %c2 = arith.constant 2 : index
    %c0_31 = arith.constant 0 : index
    %c0_32 = arith.constant 0 : index
    %c0_33 = arith.constant 0 : index
    %168 = vector.load %arg3[%c0_30, %c2, %c0_31, %c0_32, %c0_33] : memref<1x4x8x8x4xf32, #tpu.memory_space<vmem>>, vector<1x1x8x8x4xf32>
    %169 = vector.shape_cast %168 : vector<1x1x8x8x4xf32> to vector<8x8x4xf32>
    %170 = vector.shape_cast %167 : vector<8x8x4xf32> to vector<1x1x8x8x4xf32>
    tpu.vector_store %arg3[%c0_30, %c2, %c0_31, %c0_32, %c0_33], %170 {strides = array<i32>} : memref<1x4x8x8x4xf32, #tpu.memory_space<vmem>>, vector<1x1x8x8x4xf32>,
    %171 = vector.extract_strided_slice %96 {offsets = [0, 0], sizes = [64, 4], strides = [1, 1]} : vector<64x64xf32> to vector<64x4xf32>
    %172 = vector.shape_cast %171 : vector<64x4xf32> to vector<8x8x4xf32>
    %173 = vector.extract_strided_slice %172 {offsets = [1, 0, 0], sizes = [7, 8, 4], strides = [1, 1, 1]} : vector<8x8x4xf32> to vector<7x8x4xf32>
    %174 = tpu.concatenate %173, %97 in 0 : vector<7x8x4xf32>, vector<1x8x4xf32> -> vector<8x8x4xf32>
    %175 = vector.extract_strided_slice %174 {offsets = [0, 1, 0], sizes = [8, 7, 4], strides = [1, 1, 1]} : vector<8x8x4xf32> to vector<8x7x4xf32>
    %176 = tpu.concatenate %175, %98 in 1 : vector<8x7x4xf32>, vector<8x1x4xf32> -> vector<8x8x4xf32>
    %177 = vector.extract_strided_slice %96 {offsets = [0, 8], sizes = [64, 4], strides = [1, 1]} : vector<64x64xf32> to vector<64x4xf32>
    %178 = vector.shape_cast %177 : vector<64x4xf32> to vector<8x8x4xf32>
    %179 = vector.extract_strided_slice %178 {offsets = [1, 0, 0], sizes = [7, 8, 4], strides = [1, 1, 1]} : vector<8x8x4xf32> to vector<7x8x4xf32>
    %180 = tpu.concatenate %179, %97 in 0 : vector<7x8x4xf32>, vector<1x8x4xf32> -> vector<8x8x4xf32>
    %181 = vector.extract_strided_slice %96 {offsets = [0, 32], sizes = [64, 4], strides = [1, 1]} : vector<64x64xf32> to vector<64x4xf32>
    %182 = vector.shape_cast %181 : vector<64x4xf32> to vector<8x8x4xf32>
    %183 = vector.extract_strided_slice %182 {offsets = [0, 1, 0], sizes = [8, 7, 4], strides = [1, 1, 1]} : vector<8x8x4xf32> to vector<8x7x4xf32>
    %184 = tpu.concatenate %183, %98 in 1 : vector<8x7x4xf32>, vector<8x1x4xf32> -> vector<8x8x4xf32>
    %185 = vector.extract_strided_slice %96 {offsets = [0, 40], sizes = [64, 4], strides = [1, 1]} : vector<64x64xf32> to vector<64x4xf32>
    %186 = vector.shape_cast %185 : vector<64x4xf32> to vector<8x8x4xf32>
    %187 = arith.addf %176, %180 : vector<8x8x4xf32>
    %188 = arith.addf %187, %184 : vector<8x8x4xf32>
    %189 = arith.addf %188, %186 : vector<8x8x4xf32>
    %cst_34 = arith.constant 2.500000e-01 : f32
    %190 = vector.broadcast %cst_34 : f32 to vector<8x8x4xf32>
    %191 = arith.mulf %189, %190 : vector<8x8x4xf32>
    %c0_35 = arith.constant 0 : index
    %c3 = arith.constant 3 : index
    %c0_36 = arith.constant 0 : index
    %c0_37 = arith.constant 0 : index
    %c0_38 = arith.constant 0 : index
    %192 = vector.load %arg3[%c0_35, %c3, %c0_36, %c0_37, %c0_38] : memref<1x4x8x8x4xf32, #tpu.memory_space<vmem>>, vector<1x1x8x8x4xf32>
    %193 = vector.shape_cast %192 : vector<1x1x8x8x4xf32> to vector<8x8x4xf32>
    %194 = vector.shape_cast %191 : vector<8x8x4xf32> to vector<1x1x8x8x4xf32>
    tpu.vector_store %arg3[%c0_35, %c3, %c0_36, %c0_37, %c0_38], %194 {strides = array<i32>} : memref<1x4x8x8x4xf32, #tpu.memory_space<vmem>>, vector<1x1x8x8x4xf32>,
    return
  }
  func.func @transform_0(%arg0: i32) -> (i32, i32, i32, i32) {
    %c0_i32 = arith.constant 0 : i32
    %c0_i32_0 = arith.constant 0 : i32
    %c0_i32_1 = arith.constant 0 : i32
    %c0_i32_2 = arith.constant 0 : i32
    return %arg0, %c0_i32, %c0_i32_0, %c0_i32_1 : i32, i32, i32, i32
  }
  func.func @transform_1(%arg0: i32) -> (i32, i32, i32, i32, i32) {
    %c0_i32 = arith.constant 0 : i32
    %c0_i32_0 = arith.constant 0 : i32
    %c0_i32_1 = arith.constant 0 : i32
    %c0_i32_2 = arith.constant 0 : i32
    %c0_i32_3 = arith.constant 0 : i32
    return %arg0, %c0_i32, %c0_i32_0, %c0_i32_1, %c0_i32_2 : i32, i32, i32, i32, i32
  }
  func.func @transform_2(%arg0: i32) -> (i32, i32, i32, i32, i32) {
    %c0_i32 = arith.constant 0 : i32
    %c0_i32_0 = arith.constant 0 : i32
    %c0_i32_1 = arith.constant 0 : i32
    %c0_i32_2 = arith.constant 0 : i32
    %c0_i32_3 = arith.constant 0 : i32
    return %arg0, %c0_i32, %c0_i32_0, %c0_i32_1, %c0_i32_2 : i32, i32, i32, i32, i32
  }
}

</mosaic_0001>

<llo_original>
// kernel: ral_forward.1
$region0: #{ral_forward.1}
  #allocation0 [shape = 'u32[]', space=smem, size = 0x4, offset = 0x4, fixed_abs, tag = 'smem constant byte address 0x4 - core index']
  #allocation1 [shape = 'u32[144,128]{1,0:T(1,128)}', space=vmem, size = 0x12000, scoped, tag = 'internal scratch']
  %s0 = inlined_call_operand.vmem [shape: f32[2,10,10,4], index: 0, kind: input, shape index: {}]
  %s1 = inlined_call_operand.vmem [shape: f32[2,4,9,9,4], index: 1, kind: input, shape index: {}]
  %s2 = inlined_call_operand.vmem [shape: f32[2,4,8,8,4], index: 2, kind: output, shape index: {}]
  %s3 = sld [smem:[#allocation0]]
  $region41: #{ral_forward.1} parent=0
    _
  %s5 = ssub.s32 1, %s3
  %s6 = scalar_select 0, %s5, %s3
  loop: start=0, step=1, limit=4
  $region2: #{ral_forward.1} parent=0 // loop_pre_header
    _
  $region3: #{ral_forward.1} parent=0 // loop_header
    %s8 = sphi 0, %s12
    %p9 = scmp.ge.s32.totalorder %s8, 4
    %s18 = sphi 0, %s20
    %s21 = sphi 0, %s18
    %s22 = sphi 0, %s21
    %s38 = sphi 0, %s22
    %s44 = sphi 0, %s46
    %s47 = sphi 0, %s44
    %s48 = sphi 0, %s47
    %s64 = sphi 0, %s48
    %s70 = sphi 0, %s72
    %s73 = sphi 0, %s70
    %s74 = sphi 0, %s73
    %s90 = sphi 0, %s74
  $region4: #{ral_forward.1} parent=0 // loop_header_branch
    %11 = sbr.rel (%p9) target = $region8
  $region5: #{ral_forward.1} parent=0 // loop_body
    %s13 = ssub.s32 %s8, 1
    %s14 = ssub.s32 %s8, 2
    %s15 = sadd.s32 %s8, 1
    %s16 = ssub.s32 %s8, %s15
    %p17 = scmp.eq.s32.totalorder %s16, 0
    %s19 = sadd.s32 %s18, 1
    %s20 = scalar_select %p17, %s18, %s19
    %p23 = pneg %p17
    %p24 = scmp.eq.s32.totalorder %s8, 1
    %p25 = por %p23, %p24
    %p26 = scmp.ne.s32.totalorder %s18, %s21
    %p27 = scmp.eq.s32.totalorder %s8, 0
    %p28 = por %p26, %p27
    %p29 = scmp.ne.s32.totalorder %s18, %s21
    %p30 = scmp.eq.s32.totalorder %s13, 1
    %p31 = por %p29, %p30
    %p32 = scmp.ne.s32.totalorder %s21, %s22
    %p33 = scmp.eq.s32.totalorder %s13, 0
    %p34 = por %p32, %p33
    %p35 = scmp.ne.s32.totalorder %s21, %s22
    %p36 = scmp.eq.s32.totalorder %s14, 1
    %p37 = por %p35, %p36
    %p39 = scmp.ne.s32.totalorder %s22, %s38
    %p40 = scmp.eq.s32.totalorder %s14, 0
    %p41 = por %p39, %p40
    %s42 = ssub.s32 %s8, %s15
    %p43 = scmp.eq.s32.totalorder %s42, 0
    %s45 = sadd.s32 %s44, 1
    %s46 = scalar_select %p43, %s44, %s45
    %p49 = pneg %p43
    %p50 = scmp.eq.s32.totalorder %s8, 1
    %p51 = por %p49, %p50
    %p52 = scmp.ne.s32.totalorder %s44, %s47
    %p53 = scmp.eq.s32.totalorder %s8, 0
    %p54 = por %p52, %p53
    %p55 = scmp.ne.s32.totalorder %s44, %s47
    %p56 = scmp.eq.s32.totalorder %s13, 1
    %p57 = por %p55, %p56
    %p58 = scmp.ne.s32.totalorder %s47, %s48
    %p59 = scmp.eq.s32.totalorder %s13, 0
    %p60 = por %p58, %p59
    %p61 = scmp.ne.s32.totalorder %s47, %s48
    %p62 = scmp.eq.s32.totalorder %s14, 1
    %p63 = por %p61, %p62
    %p65 = scmp.ne.s32.totalorder %s48, %s64
    %p66 = scmp.eq.s32.totalorder %s14, 0
    %p67 = por %p65, %p66
    %s68 = ssub.s32 %s8, %s15
    %p69 = scmp.eq.s32.totalorder %s68, 0
    %s71 = sadd.s32 %s70, 1
    %s72 = scalar_select %p69, %s70, %s71
    %p75 = pneg %p69
    %p76 = scmp.eq.s32.totalorder %s8, 1
    %p77 = por %p75, %p76
    %p78 = scmp.ne.s32.totalorder %s70, %s73
    %p79 = scmp.eq.s32.totalorder %s8, 0
    %p80 = por %p78, %p79
    %p81 = scmp.ne.s32.totalorder %s70, %s73
    %p82 = scmp.eq.s32.totalorder %s13, 1
    %p83 = por %p81, %p82
    %p84 = scmp.ne.s32.totalorder %s73, %s74
    %p85 = scmp.eq.s32.totalorder %s13, 0
    %p86 = por %p84, %p85
    %p87 = scmp.ne.s32.totalorder %s73, %s74
    %p88 = scmp.eq.s32.totalorder %s14, 1
    %p89 = por %p87, %p88
    %p91 = scmp.ne.s32.totalorder %s74, %s90
    %p92 = scmp.eq.s32.totalorder %s14, 0
    %p93 = por %p91, %p92
    %p94 = scmp.le.s32.totalorder 1, %s8
    %p95 = scmp.lt.s32.totalorder %s8, 3
    %p96 = pnand %p94, %p95
    %p97 = pneg %p96
    // Predicated region
    $region9: #{ral_forward.1} parent=5 // pred_check
      _
    $region10: #{ral_forward.1} parent=5 // pred_check_branch
      %99 = sbr.rel (%p96) target = $region12
    $region11: #{ral_forward.1} parent=5 // pred_region
      %s100 = ssub.s32 %s8, 1
    $region12: #{ral_forward.1} parent=5 // pred_fallthru
      _
    %p101 = scmp.lt.s32.totalorder %s8, 2
    // Predicated region
    $region13: #{ral_forward.1} parent=5 // pred_check
      %p102 = pneg %p101
    $region14: #{ral_forward.1} parent=5 // pred_check_branch
      %104 = sbr.rel (%p102) target = $region16
    $region15: #{ral_forward.1} parent=5 // pred_region
      // Predicated region
      $region17: #{ral_forward.1} parent=15 // pred_check
        %p105 = pneg %p28
      $region18: #{ral_forward.1} parent=15 // pred_check_branch
        %107 = sbr.rel (%p105) target = $region20
      $region19: #{ral_forward.1} parent=15 // pred_region
        %p108 = scmp.lt.s32.totalorder %s8, 1
        %s109 = scalar_select %p108, %s8, 1
        %s110 = smul.addr %s109, 20
        %s111 = smul.addr %s110, 8
        %s112 = scalar_lea.vmem %s0, %s111
      $region20: #{ral_forward.1} parent=15 // pred_fallthru
        _
      // Predicated region
      $region21: #{ral_forward.1} parent=15 // pred_check
        %p113 = pneg %p54
      $region22: #{ral_forward.1} parent=15 // pred_check_branch
        %115 = sbr.rel (%p113) target = $region24
      $region23: #{ral_forward.1} parent=15 // pred_region
        %p116 = scmp.lt.s32.totalorder %s8, 1
        %s117 = scalar_select %p116, %s8, 1
        %s118 = smul.addr %s117, 72
        %s119 = smul.addr %s118, 8
        %s120 = scalar_lea.vmem %s1, %s119
      $region24: #{ral_forward.1} parent=15 // pred_fallthru
        _
    $region16: #{ral_forward.1} parent=5 // pred_fallthru
      _
    %p121 = scmp.le.s32.totalorder 1, %s8
    %p122 = scmp.lt.s32.totalorder %s8, 3
    %p123 = pnand %p121, %p122
    %p124 = pneg %p123
    // Predicated region
    $region25: #{ral_forward.1} parent=5 // pred_check
      _
    $region26: #{ral_forward.1} parent=5 // pred_check_branch
      %126 = sbr.rel (%p123) target = $region28
    $region27: #{ral_forward.1} parent=5 // pred_region
      %s127 = ssub.s32 %s8, 1
      %p128 = scmp.lt.s32.totalorder %s13, 1
      %s129 = scalar_select %p128, %s13, 1
      %s130 = smul.addr %s129, 20
      %s131 = smul.addr %s130, 8
      %s132 = scalar_lea.vmem %s0, %s131
      %p133 = pneg %p34
      %p134 = pneg %p31
      %p135 = scmp.lt.s32.totalorder %s13, 1
      %s136 = scalar_select %p135, %s13, 1
      %s137 = smul.addr %s136, 72
      %s138 = smul.addr %s137, 8
      %s139 = scalar_lea.vmem %s1, %s138
      %p140 = pneg %p60
      %p141 = pneg %p57
      %p142 = pneg %p86
      %p143 = pneg %p83
      %p144 = scmp.lt.s32.totalorder %s13, 1
      %s145 = scalar_select %p144, %s13, 1
      %s146 = smul.addr %s145, 32
      %s147 = smul.addr %s146, 8
      %s148 = scalar_lea.vmem %s2, %s147
      %p149 = scmp.lt.s32.totalorder %s13, 1
      %s150 = scalar_select %p149, %s13, 1
      %s151 = smul.addr %s150, 20
      %s152 = smul.addr %s151, 8
      %s153 = scalar_lea.vmem %s0, %s152
      %p154 = scmp.lt.s32.totalorder %s13, 1
      %s155 = scalar_select %p154, %s13, 1
      %s156 = smul.addr %s155, 72
      %s157 = smul.addr %s156, 8
      %s158 = scalar_lea.vmem %s1, %s157
      %p159 = scmp.lt.s32.totalorder %s13, 1
      %s160 = scalar_select %p159, %s13, 1
      %s161 = smul.addr %s160, 32
      %s162 = smul.addr %s161, 8
      %s163 = scalar_lea.vmem %s2, %s162
      %v164 = vld [vmem:[%s153] sm:$0xff]
      %v165 = vld [vmem:[%s153 + $0x8] sm:$0x3]
      %v166 = vld [vmem:[%s153 + $0x10] sm:$0xff]
      %v167 = vld [vmem:[%s153 + $0x18] sm:$0x3]
      %v168 = vld [vmem:[%s153 + $0x20] sm:$0xff]
      %v169 = vld [vmem:[%s153 + $0x28] sm:$0x3]
      %v170 = vld [vmem:[%s153 + $0x30] sm:$0xff]
      %v171 = vld [vmem:[%s153 + $0x38] sm:$0x3]
      %v172 = vld [vmem:[%s153 + $0x40] sm:$0xff]
      %v173 = vld [vmem:[%s153 + $0x48] sm:$0x3]
      %v174 = vld [vmem:[%s153 + $0x50] sm:$0xff]
      %v175 = vld [vmem:[%s153 + $0x58] sm:$0x3]
      %v176 = vld [vmem:[%s153 + $0x60] sm:$0xff]
      %v177 = vld [vmem:[%s153 + $0x68] sm:$0x3]
      %v178 = vld [vmem:[%s153 + $0x70] sm:$0xff]
      %v179 = vld [vmem:[%s153 + $0x78] sm:$0x3]
      %v180 = vld [vmem:[%s153 + $0x80] sm:$0xff]
      %v181 = vld [vmem:[%s153 + $0x88] sm:$0x3]
      %v182 = vld [vmem:[%s153 + $0x90] sm:$0xff]
      %v183 = vld [vmem:[%s153 + $0x98] sm:$0x3]
      %vm200 = vcmask 1046528
      %v201 = vrot.slane %v164, 1
      %v202 = vrot.slane %v165, 1
      %v203 = vsel %vm200, %v201, %v202
      %v204 = vrot.slane %v166, 1
      %v205 = vrot.slane %v167, 1
      %v206 = vsel %vm200, %v204, %v205
      %v207 = vrot.slane %v168, 1
      %v208 = vrot.slane %v169, 1
      %v209 = vsel %vm200, %v207, %v208
      %v210 = vrot.slane %v170, 1
      %v211 = vrot.slane %v171, 1
      %v212 = vsel %vm200, %v210, %v211
      %v213 = vrot.slane %v172, 1
      %v214 = vrot.slane %v173, 1
      %v215 = vsel %vm200, %v213, %v214
      %v216 = vrot.slane %v174, 1
      %v217 = vrot.slane %v175, 1
      %v218 = vsel %vm200, %v216, %v217
      %v219 = vrot.slane %v176, 1
      %v220 = vrot.slane %v177, 1
      %v221 = vsel %vm200, %v219, %v220
      %v222 = vrot.slane %v178, 1
      %v223 = vrot.slane %v179, 1
      %v224 = vsel %vm200, %v222, %v223
      %vm225 = vcmask 1045504
      %v226 = vrot.slane %v164, 2
      %v227 = vrot.slane %v165, 2
      %v228 = vsel %vm225, %v226, %v227
      %v229 = vrot.slane %v166, 2
      %v230 = vrot.slane %v167, 2
      %v231 = vsel %vm225, %v229, %v230
      %v232 = vrot.slane %v168, 2
      %v233 = vrot.slane %v169, 2
      %v234 = vsel %vm225, %v232, %v233
      %v235 = vrot.slane %v170, 2
      %v236 = vrot.slane %v171, 2
      %v237 = vsel %vm225, %v235, %v236
      %v238 = vrot.slane %v172, 2
      %v239 = vrot.slane %v173, 2
      %v240 = vsel %vm225, %v238, %v239
      %v241 = vrot.slane %v174, 2
      %v242 = vrot.slane %v175, 2
      %v243 = vsel %vm225, %v241, %v242
      %v244 = vrot.slane %v176, 2
      %v245 = vrot.slane %v177, 2
      %v246 = vsel %vm225, %v244, %v245
      %v247 = vrot.slane %v178, 2
      %v248 = vrot.slane %v179, 2
      %v249 = vsel %vm225, %v247, %v248
      %v252 = vrot.slane %v180, 1
      %v253 = vrot.slane %v181, 1
      %v254 = vsel %vm200, %v252, %v253
      %v255 = vrot.slane %v180, 2
      %v256 = vrot.slane %v181, 2
      %v257 = vsel %vm225, %v255, %v256
      %v260 = vrot.slane %v182, 1
      %v261 = vrot.slane %v183, 1
      %v262 = vsel %vm200, %v260, %v261
      %v263 = vrot.slane %v182, 2
      %v264 = vrot.slane %v183, 2
      %v265 = vsel %vm225, %v263, %v264
      %266 = vrot.lane.b32.xlu0 %v203, 4
      %v267 = vpop.permute.xlu0 %266
      %268 = vrot.lane.b32.xlu0 %v206, 4
      %v269 = vpop.permute.xlu0 %268
      %270 = vrot.lane.b32.xlu0 %v209, 4
      %v271 = vpop.permute.xlu0 %270
      %272 = vrot.lane.b32.xlu0 %v212, 4
      %v273 = vpop.permute.xlu0 %272
      %274 = vrot.lane.b32.xlu0 %v215, 4
      %v275 = vpop.permute.xlu0 %274
      %276 = vrot.lane.b32.xlu0 %v218, 4
      %v277 = vpop.permute.xlu0 %276
      %278 = vrot.lane.b32.xlu0 %v221, 4
      %v279 = vpop.permute.xlu0 %278
      %280 = vrot.lane.b32.xlu0 %v224, 4
      %v281 = vpop.permute.xlu0 %280
      %290 = vrot.lane.b32.xlu0 %v228, 8
      %v291 = vpop.permute.xlu0 %290
      %292 = vrot.lane.b32.xlu0 %v231, 8
      %v293 = vpop.permute.xlu0 %292
      %294 = vrot.lane.b32.xlu0 %v234, 8
      %v295 = vpop.permute.xlu0 %294
      %296 = vrot.lane.b32.xlu0 %v237, 8
      %v297 = vpop.permute.xlu0 %296
      %298 = vrot.lane.b32.xlu0 %v240, 8
      %v299 = vpop.permute.xlu0 %298
      %300 = vrot.lane.b32.xlu0 %v243, 8
      %v301 = vpop.permute.xlu0 %300
      %302 = vrot.lane.b32.xlu0 %v246, 8
      %v303 = vpop.permute.xlu0 %302
      %304 = vrot.lane.b32.xlu0 %v249, 8
      %v305 = vpop.permute.xlu0 %304
      %314 = vrot.lane.b32.xlu0 %v166, 12
      %v315 = vpop.permute.xlu0 %314
      %316 = vrot.lane.b32.xlu0 %v168, 12
      %v317 = vpop.permute.xlu0 %316
      %318 = vrot.lane.b32.xlu0 %v170, 12
      %v319 = vpop.permute.xlu0 %318
      %320 = vrot.lane.b32.xlu0 %v172, 12
      %v321 = vpop.permute.xlu0 %320
      %322 = vrot.lane.b32.xlu0 %v174, 12
      %v323 = vpop.permute.xlu0 %322
      %324 = vrot.lane.b32.xlu0 %v176, 12
      %v325 = vpop.permute.xlu0 %324
      %326 = vrot.lane.b32.xlu0 %v178, 12
      %v327 = vpop.permute.xlu0 %326
      %328 = vrot.lane.b32.xlu0 %v180, 12
      %v329 = vpop.permute.xlu0 %328
      %338 = vrot.lane.b32.xlu0 %v206, 16
      %v339 = vpop.permute.xlu0 %338
      %340 = vrot.lane.b32.xlu0 %v209, 16
      %v341 = vpop.permute.xlu0 %340
      %342 = vrot.lane.b32.xlu0 %v212, 16
      %v343 = vpop.permute.xlu0 %342
      %344 = vrot.lane.b32.xlu0 %v215, 16
      %v345 = vpop.permute.xlu0 %344
      %346 = vrot.lane.b32.xlu0 %v218, 16
      %v347 = vpop.permute.xlu0 %346
      %348 = vrot.lane.b32.xlu0 %v221, 16
      %v349 = vpop.permute.xlu0 %348
      %350 = vrot.lane.b32.xlu0 %v224, 16
      %v351 = vpop.permute.xlu0 %350
      %352 = vrot.lane.b32.xlu0 %v254, 16
      %v353 = vpop.permute.xlu0 %352
      %362 = vrot.lane.b32.xlu0 %v231, 20
      %v363 = vpop.permute.xlu0 %362
      %364 = vrot.lane.b32.xlu0 %v234, 20
      %v365 = vpop.permute.xlu0 %364
      %366 = vrot.lane.b32.xlu0 %v237, 20
      %v367 = vpop.permute.xlu0 %366
      %368 = vrot.lane.b32.xlu0 %v240, 20
      %v369 = vpop.permute.xlu0 %368
      %370 = vrot.lane.b32.xlu0 %v243, 20
      %v371 = vpop.permute.xlu0 %370
      %372 = vrot.lane.b32.xlu0 %v246, 20
      %v373 = vpop.permute.xlu0 %372
      %374 = vrot.lane.b32.xlu0 %v249, 20
      %v375 = vpop.permute.xlu0 %374
      %376 = vrot.lane.b32.xlu0 %v257, 20
      %v377 = vpop.permute.xlu0 %376
      %386 = vrot.lane.b32.xlu0 %v168, 24
      %v387 = vpop.permute.xlu0 %386
      %388 = vrot.lane.b32.xlu0 %v170, 24
      %v389 = vpop.permute.xlu0 %388
      %390 = vrot.lane.b32.xlu0 %v172, 24
      %v391 = vpop.permute.xlu0 %390
      %392 = vrot.lane.b32.xlu0 %v174, 24
      %v393 = vpop.permute.xlu0 %392
      %394 = vrot.lane.b32.xlu0 %v176, 24
      %v395 = vpop.permute.xlu0 %394
      %396 = vrot.lane.b32.xlu0 %v178, 24
      %v397 = vpop.permute.xlu0 %396
      %398 = vrot.lane.b32.xlu0 %v180, 24
      %v399 = vpop.permute.xlu0 %398
      %400 = vrot.lane.b32.xlu0 %v182, 24
      %v401 = vpop.permute.xlu0 %400
      %410 = vrot.lane.b32.xlu0 %v209, 28
      %v411 = vpop.permute.xlu0 %410
      %412 = vrot.lane.b32.xlu0 %v212, 28
      %v413 = vpop.permute.xlu0 %412
      %414 = vrot.lane.b32.xlu0 %v215, 28
      %v415 = vpop.permute.xlu0 %414
      %416 = vrot.lane.b32.xlu0 %v218, 28
      %v417 = vpop.permute.xlu0 %416
      %418 = vrot.lane.b32.xlu0 %v221, 28
      %v419 = vpop.permute.xlu0 %418
      %420 = vrot.lane.b32.xlu0 %v224, 28
      %v421 = vpop.permute.xlu0 %420
      %422 = vrot.lane.b32.xlu0 %v254, 28
      %v423 = vpop.permute.xlu0 %422
      %424 = vrot.lane.b32.xlu0 %v262, 28
      %v425 = vpop.permute.xlu0 %424
      %434 = vrot.lane.b32.xlu0 %v234, 32
      %v435 = vpop.permute.xlu0 %434
      %436 = vrot.lane.b32.xlu0 %v237, 32
      %v437 = vpop.permute.xlu0 %436
      %438 = vrot.lane.b32.xlu0 %v240, 32
      %v439 = vpop.permute.xlu0 %438
      %440 = vrot.lane.b32.xlu0 %v243, 32
      %v441 = vpop.permute.xlu0 %440
      %442 = vrot.lane.b32.xlu0 %v246, 32
      %v443 = vpop.permute.xlu0 %442
      %444 = vrot.lane.b32.xlu0 %v249, 32
      %v445 = vpop.permute.xlu0 %444
      %446 = vrot.lane.b32.xlu0 %v257, 32
      %v447 = vpop.permute.xlu0 %446
      %448 = vrot.lane.b32.xlu0 %v265, 32
      %v449 = vpop.permute.xlu0 %448
      %vm458 = vcmask 31744
      %v459 = vsel %vm458, %v164, %v267
      %v460 = vsel %vm458, %v166, %v269
      %v461 = vsel %vm458, %v168, %v271
      %v462 = vsel %vm458, %v170, %v273
      %v463 = vsel %vm458, %v172, %v275
      %v464 = vsel %vm458, %v174, %v277
      %v465 = vsel %vm458, %v176, %v279
      %v466 = vsel %vm458, %v178, %v281
      %vm467 = vcmask 64512
      %v468 = vsel %vm467, %v459, %v291
      %v469 = vsel %vm467, %v460, %v293
      %v470 = vsel %vm467, %v461, %v295
      %v471 = vsel %vm467, %v462, %v297
      %v472 = vsel %vm467, %v463, %v299
      %v473 = vsel %vm467, %v464, %v301
      %v474 = vsel %vm467, %v465, %v303
      %v475 = vsel %vm467, %v466, %v305
      %vm476 = vcmask 97280
      %v477 = vsel %vm476, %v468, %v315
      %v478 = vsel %vm476, %v469, %v317
      %v479 = vsel %vm476, %v470, %v319
      %v480 = vsel %vm476, %v471, %v321
      %v481 = vsel %vm476, %v472, %v323
      %v482 = vsel %vm476, %v473, %v325
      %v483 = vsel %vm476, %v474, %v327
      %v484 = vsel %vm476, %v475, %v329
      %vm485 = vcmask 130048
      %v486 = vsel %vm485, %v477, %v339
      %v487 = vsel %vm485, %v478, %v341
      %v488 = vsel %vm485, %v479, %v343
      %v489 = vsel %vm485, %v480, %v345
      %v490 = vsel %vm485, %v481, %v347
      %v491 = vsel %vm485, %v482, %v349
      %v492 = vsel %vm485, %v483, %v351
      %v493 = vsel %vm485, %v484, %v353
      %vm494 = vcmask 162816
      %v495 = vsel %vm494, %v486, %v363
      %v496 = vsel %vm494, %v487, %v365
      %v497 = vsel %vm494, %v488, %v367
      %v498 = vsel %vm494, %v489, %v369
      %v499 = vsel %vm494, %v490, %v371
      %v500 = vsel %vm494, %v491, %v373
      %v501 = vsel %vm494, %v492, %v375
      %v502 = vsel %vm494, %v493, %v377
      %vm503 = vcmask 195584
      %v504 = vsel %vm503, %v495, %v387
      %v505 = vsel %vm503, %v496, %v389
      %v506 = vsel %vm503, %v497, %v391
      %v507 = vsel %vm503, %v498, %v393
      %v508 = vsel %vm503, %v499, %v395
      %v509 = vsel %vm503, %v500, %v397
      %v510 = vsel %vm503, %v501, %v399
      %v511 = vsel %vm503, %v502, %v401
      %vm512 = vcmask 228352
      %v513 = vsel %vm512, %v504, %v411
      %v514 = vsel %vm512, %v505, %v413
      %v515 = vsel %vm512, %v506, %v415
      %v516 = vsel %vm512, %v507, %v417
      %v517 = vsel %vm512, %v508, %v419
      %v518 = vsel %vm512, %v509, %v421
      %v519 = vsel %vm512, %v510, %v423
      %v520 = vsel %vm512, %v511, %v425
      %vm521 = vcmask 261120
      %v522 = vsel %vm521, %v513, %v435
      %v523 = vsel %vm521, %v514, %v437
      %v524 = vsel %vm521, %v515, %v439
      %v525 = vsel %vm521, %v516, %v441
      %v526 = vsel %vm521, %v517, %v443
      %v527 = vsel %vm521, %v518, %v445
      %v528 = vsel %vm521, %v519, %v447
      %v529 = vsel %vm521, %v520, %v449
      %v530 = vmul.f32 %v522, %v522
      %v531 = vmul.f32 %v523, %v523
      %v532 = vmul.f32 %v524, %v524
      %v533 = vmul.f32 %v525, %v525
      %v534 = vmul.f32 %v526, %v526
      %v535 = vmul.f32 %v527, %v527
      %v536 = vmul.f32 %v528, %v528
      %v537 = vmul.f32 %v529, %v529
      %vm538 = vcmask 293888
      %v539 = vsel %vm538, %v530, 0.0
      %540 = vadd.xlane.f32.xlu0 %v539
      %v541 = vpop.xlane.xlu0 %540
      %v542 = vsel %vm538, %v531, 0.0
      %543 = vadd.xlane.f32.xlu0 %v542
      %v544 = vpop.xlane.xlu0 %543
      %v545 = vsel %vm538, %v532, 0.0
      %546 = vadd.xlane.f32.xlu0 %v545
      %v547 = vpop.xlane.xlu0 %546
      %v548 = vsel %vm538, %v533, 0.0
      %549 = vadd.xlane.f32.xlu0 %v548
      %v550 = vpop.xlane.xlu0 %549
      %v551 = vsel %vm538, %v534, 0.0
      %552 = vadd.xlane.f32.xlu0 %v551
      %v553 = vpop.xlane.xlu0 %552
      %v554 = vsel %vm538, %v535, 0.0
      %555 = vadd.xlane.f32.xlu0 %v554
      %v556 = vpop.xlane.xlu0 %555
      %v557 = vsel %vm538, %v536, 0.0
      %558 = vadd.xlane.f32.xlu0 %v557
      %v559 = vpop.xlane.xlu0 %558
      %v560 = vsel %vm538, %v537, 0.0
      %561 = vadd.xlane.f32.xlu0 %v560
      %v562 = vpop.xlane.xlu0 %561
      %v563 = vrsqrt.pop %v541
      %v564 = vmul.f32 %v541, %v563
      %vm565 = vcmp.eq.f32.partialorder %v541, inf
      %v566 = vsel %vm565, %v541, %v564
      %vm567 = vcmp.eq.f32.partialorder %v541, 0.0
      %v568 = vand.u32 %v541, 2147483648
      %v569 = vsel %vm567, %v568, %v566
      %v570 = vrsqrt.pop %v544
      %v571 = vmul.f32 %v544, %v570
      %vm572 = vcmp.eq.f32.partialorder %v544, inf
      %v573 = vsel %vm572, %v544, %v571
      %vm574 = vcmp.eq.f32.partialorder %v544, 0.0
      %v575 = vand.u32 %v544, 2147483648
      %v576 = vsel %vm574, %v575, %v573
      %v577 = vrsqrt.pop %v547
      %v578 = vmul.f32 %v547, %v577
      %vm579 = vcmp.eq.f32.partialorder %v547, inf
      %v580 = vsel %vm579, %v547, %v578
      %vm581 = vcmp.eq.f32.partialorder %v547, 0.0
      %v582 = vand.u32 %v547, 2147483648
      %v583 = vsel %vm581, %v582, %v580
      %v584 = vrsqrt.pop %v550
      %v585 = vmul.f32 %v550, %v584
      %vm586 = vcmp.eq.f32.partialorder %v550, inf
      %v587 = vsel %vm586, %v550, %v585
      %vm588 = vcmp.eq.f32.partialorder %v550, 0.0
      %v589 = vand.u32 %v550, 2147483648
      %v590 = vsel %vm588, %v589, %v587
      %v591 = vrsqrt.pop %v553
      %v592 = vmul.f32 %v553, %v591
      %vm593 = vcmp.eq.f32.partialorder %v553, inf
      %v594 = vsel %vm593, %v553, %v592
      %vm595 = vcmp.eq.f32.partialorder %v553, 0.0
      %v596 = vand.u32 %v553, 2147483648
      %v597 = vsel %vm595, %v596, %v594
      %v598 = vrsqrt.pop %v556
      %v599 = vmul.f32 %v556, %v598
      %vm600 = vcmp.eq.f32.partialorder %v556, inf
      %v601 = vsel %vm600, %v556, %v599
      %vm602 = vcmp.eq.f32.partialorder %v556, 0.0
      %v603 = vand.u32 %v556, 2147483648
      %v604 = vsel %vm602, %v603, %v601
      %v605 = vrsqrt.pop %v559
      %v606 = vmul.f32 %v559, %v605
      %vm607 = vcmp.eq.f32.partialorder %v559, inf
      %v608 = vsel %vm607, %v559, %v606
      %vm609 = vcmp.eq.f32.partialorder %v559, 0.0
      %v610 = vand.u32 %v559, 2147483648
      %v611 = vsel %vm609, %v610, %v608
      %v612 = vrsqrt.pop %v562
      %v613 = vmul.f32 %v562, %v612
      %vm614 = vcmp.eq.f32.partialorder %v562, inf
      %v615 = vsel %vm614, %v562, %v613
      %vm616 = vcmp.eq.f32.partialorder %v562, 0.0
      %v617 = vand.u32 %v562, 2147483648
      %v618 = vsel %vm616, %v617, %v615
      %v619 = vmax.f32 %v569, 0.0001
      %v620 = vmax.f32 %v576, 0.0001
      %v621 = vmax.f32 %v583, 0.0001
      %v622 = vmax.f32 %v590, 0.0001
      %v623 = vmax.f32 %v597, 0.0001
      %v624 = vmax.f32 %v604, 0.0001
      %v625 = vmax.f32 %v611, 0.0001
      %v626 = vmax.f32 %v618, 0.0001
      %v627 = vrcp.pop %v619
      %v628 = vmul.f32 1.0, %v627
      %v629 = vrcp.pop %v620
      %v630 = vmul.f32 1.0, %v629
      %v631 = vrcp.pop %v621
      %v632 = vmul.f32 1.0, %v631
      %v633 = vrcp.pop %v622
      %v634 = vmul.f32 1.0, %v633
      %v635 = vrcp.pop %v623
      %v636 = vmul.f32 1.0, %v635
      %v637 = vrcp.pop %v624
      %v638 = vmul.f32 1.0, %v637
      %v639 = vrcp.pop %v625
      %v640 = vmul.f32 1.0, %v639
      %v641 = vrcp.pop %v626
      %v642 = vmul.f32 1.0, %v641
      %v643 = vmul.f32 %v522, %v628
      %v644 = vmul.f32 %v523, %v630
      %v645 = vmul.f32 %v524, %v632
      %v646 = vmul.f32 %v525, %v634
      %v647 = vmul.f32 %v526, %v636
      %v648 = vmul.f32 %v527, %v638
      %v649 = vmul.f32 %v528, %v640
      %v650 = vmul.f32 %v529, %v642
      %v652 = vsel %vm538, %v522, 0
      %v655 = vsel %vm538, %v523, 0
      %v658 = vsel %vm538, %v524, 0
      %v661 = vsel %vm538, %v525, 0
      %v664 = vsel %vm538, %v526, 0
      %v667 = vsel %vm538, %v527, 0
      %v670 = vsel %vm538, %v528, 0
      %v673 = vsel %vm538, %v529, 0
      %v676 = vsel %vm538, %v643, 0
      %v679 = vsel %vm538, %v644, 0
      %v682 = vsel %vm538, %v645, 0
      %v685 = vsel %vm538, %v646, 0
      %v688 = vsel %vm538, %v647, 0
      %v691 = vsel %vm538, %v648, 0
      %v694 = vsel %vm538, %v649, 0
      %v697 = vsel %vm538, %v650, 0
      %699 = vmatprep.subr.mxu0 0.0
      %700 = vmatpush1.xpose.msra.mxu0 0.0
      %701 = vmatprep.subr.mxu0 0.0
      %702 = vmatpush1.xpose.msra.mxu0 0.0
      %703 = vmatprep.subr.mxu0 0.0
      %704 = vmatpush1.xpose.msra.mxu0 0.0
      %705 = vmatprep.subr.mxu0 0.0
      %706 = vmatpush1.xpose.msra.mxu0 0.0
      %707 = vmatprep.subr.mxu0 0.0
      %708 = vmatpush1.xpose.msra.mxu0 0.0
      %709 = vmatprep.subr.mxu0 0.0
      %710 = vmatpush1.xpose.msra.mxu0 0.0
      %711 = vmatprep.subr.mxu0 0.0
      %712 = vmatpush1.xpose.msra.mxu0 0.0
      %713 = vmatprep.subr.mxu0 0.0
      %714 = vmatpush1.xpose.msra.mxu0 0.0
      %715 = vmatprep.subr.mxu0 0.0
      %v716 = vand.u32 %v697, 4294901760
      %717 = vmatpush1.xpose.msra.mxu0 %v716
      %718 = vmatprep.subr.mxu0 0.0
      %v719 = vand.u32 %v694, 4294901760
      %720 = vmatpush1.xpose.msra.mxu0 %v719
      %721 = vmatprep.subr.mxu0 0.0
      %v722 = vand.u32 %v691, 4294901760
      %723 = vmatpush1.xpose.msra.mxu0 %v722
      %724 = vmatprep.subr.mxu0 0.0
      %v725 = vand.u32 %v688, 4294901760
      %726 = vmatpush1.xpose.msra.mxu0 %v725
      %727 = vmatprep.subr.mxu0 0.0
      %v728 = vand.u32 %v685, 4294901760
      %729 = vmatpush1.xpose.msra.mxu0 %v728
      %730 = vmatprep.subr.mxu0 0.0
      %v731 = vand.u32 %v682, 4294901760
      %732 = vmatpush1.xpose.msra.mxu0 %v731
      %733 = vmatprep.subr.mxu0 0.0
      %v734 = vand.u32 %v679, 4294901760
      %735 = vmatpush1.xpose.msra.mxu0 %v734
      %736 = vmatprep.subr.mxu0 0.0
      %v737 = vand.u32 %v676, 4294901760
      %738 = vmatpush1.xpose.msra.mxu0 %v737
      %739 = vmatprep.subr.mxu0 0.0
      %740 = vmatpush2.xpose.msra.mxu0 0.0
      %741 = vmatprep.subr.mxu0 0.0
      %742 = vmatpush2.xpose.msra.mxu0 0.0
      %743 = vmatprep.subr.mxu0 0.0
      %744 = vmatpush2.xpose.msra.mxu0 0.0
      %745 = vmatprep.subr.mxu0 0.0
      %746 = vmatpush2.xpose.msra.mxu0 0.0
      %747 = vmatprep.subr.mxu0 0.0
      %748 = vmatpush2.xpose.msra.mxu0 0.0
      %749 = vmatprep.subr.mxu0 0.0
      %750 = vmatpush2.xpose.msra.mxu0 0.0
      %751 = vmatprep.subr.mxu0 0.0
      %752 = vmatpush2.xpose.msra.mxu0 0.0
      %753 = vmatprep.subr.mxu0 0.0
      %754 = vmatpush2.xpose.msra.mxu0 0.0
      %755 = vmatprep.subr.mxu0 0.0
      %756 = vmatpush2.xpose.msra.mxu0 0.0
      %757 = vmatprep.subr.mxu0 0.0
      %758 = vmatpush2.xpose.msra.mxu0 0.0
      %759 = vmatprep.subr.mxu0 0.0
      %760 = vmatpush2.xpose.msra.mxu0 0.0
      %761 = vmatprep.subr.mxu0 0.0
      %762 = vmatpush2.xpose.msra.mxu0 0.0
      %763 = vmatprep.subr.mxu0 0.0
      %764 = vmatpush2.xpose.msra.mxu0 0.0
      %765 = vmatprep.subr.mxu0 0.0
      %766 = vmatpush2.xpose.msra.mxu0 0.0
      %767 = vmatprep.subr.mxu0 0.0
      %768 = vmatpush2.xpose.msra.mxu0 0.0
      %769 = vmatprep.subr.mxu0 0.0
      %770 = vmatpush2.xpose.msra.mxu0 0.0
      %771 = vmatprep.mubr.f32.mxu0 0.0
      %v772 = vand.u32 %v652, 4294901760
      %v773 = vsub.f32 %v652, %v772
      %v774 = vand.u32 %v773, 4294901760
      %v775 = vsub.f32 %v773, %v774
      %v776 = vand.u32 %v775, 4294901760
      %777 = vmatmul.mubr.f32.gmra.mxu0 %v776
      %v778 = vpop.f32.mrf.mxu0
      %v779 = vadd.f32 0.0, %v778
      %v780 = vpop.f32.mrf.mxu0
      %781 = vmatprep.mubr.f32.mxu0 0.0
      %v782 = vand.u32 %v655, 4294901760
      %v783 = vsub.f32 %v655, %v782
      %v784 = vand.u32 %v783, 4294901760
      %v785 = vsub.f32 %v783, %v784
      %v786 = vand.u32 %v785, 4294901760
      %787 = vmatmul.mubr.f32.gmra.mxu0 %v786
      %v788 = vpop.f32.mrf.mxu0
      %v789 = vadd.f32 0.0, %v788
      %v790 = vpop.f32.mrf.mxu0
      %791 = vmatprep.mubr.f32.mxu0 0.0
      %v792 = vand.u32 %v658, 4294901760
      %v793 = vsub.f32 %v658, %v792
      %v794 = vand.u32 %v793, 4294901760
      %v795 = vsub.f32 %v793, %v794
      %v796 = vand.u32 %v795, 4294901760
      %797 = vmatmul.mubr.f32.gmra.mxu0 %v796
      %v798 = vpop.f32.mrf.mxu0
      %v799 = vadd.f32 0.0, %v798
      %v800 = vpop.f32.mrf.mxu0
      %801 = vmatprep.mubr.f32.mxu0 0.0
      %v802 = vand.u32 %v661, 4294901760
      %v803 = vsub.f32 %v661, %v802
      %v804 = vand.u32 %v803, 4294901760
      %v805 = vsub.f32 %v803, %v804
      %v806 = vand.u32 %v805, 4294901760
      %807 = vmatmul.mubr.f32.gmra.mxu0 %v806
      %v808 = vpop.f32.mrf.mxu0
      %v809 = vadd.f32 0.0, %v808
      %v810 = vpop.f32.mrf.mxu0
      %811 = vmatprep.mubr.f32.mxu0 0.0
      %v812 = vand.u32 %v664, 4294901760
      %v813 = vsub.f32 %v664, %v812
      %v814 = vand.u32 %v813, 4294901760
      %v815 = vsub.f32 %v813, %v814
      %v816 = vand.u32 %v815, 4294901760
      %817 = vmatmul.mubr.f32.gmra.mxu0 %v816
      %v818 = vpop.f32.mrf.mxu0
      %v819 = vadd.f32 0.0, %v818
      %v820 = vpop.f32.mrf.mxu0
      %821 = vmatprep.mubr.f32.mxu0 0.0
      %v822 = vand.u32 %v667, 4294901760
      %v823 = vsub.f32 %v667, %v822
      %v824 = vand.u32 %v823, 4294901760
      %v825 = vsub.f32 %v823, %v824
      %v826 = vand.u32 %v825, 4294901760
      %827 = vmatmul.mubr.f32.gmra.mxu0 %v826
      %v828 = vpop.f32.mrf.mxu0
      %v829 = vadd.f32 0.0, %v828
      %v830 = vpop.f32.mrf.mxu0
      %831 = vmatprep.mubr.f32.mxu0 0.0
      %v832 = vand.u32 %v670, 4294901760
      %v833 = vsub.f32 %v670, %v832
      %v834 = vand.u32 %v833, 4294901760
      %v835 = vsub.f32 %v833, %v834
      %v836 = vand.u32 %v835, 4294901760
      %837 = vmatmul.mubr.f32.gmra.mxu0 %v836
      %v838 = vpop.f32.mrf.mxu0
      %v839 = vadd.f32 0.0, %v838
      %v840 = vpop.f32.mrf.mxu0
      %841 = vmatprep.mubr.f32.mxu0 0.0
      %v842 = vand.u32 %v673, 4294901760
      %v843 = vsub.f32 %v673, %v842
      %v844 = vand.u32 %v843, 4294901760
      %v845 = vsub.f32 %v843, %v844
      %v846 = vand.u32 %v845, 4294901760
      %847 = vmatmul.mubr.f32.gmra.mxu0 %v846
      %v848 = vpop.f32.mrf.mxu0
      %v849 = vadd.f32 0.0, %v848
      %v850 = vpop.f32.mrf.mxu0
      %851 = vdwg.mxu0
      %852 = vmatprep.subr.mxu0 0.0
      %853 = vmatpush1.xpose.msra.mxu0 0.0
      %854 = vmatprep.subr.mxu0 0.0
      %855 = vmatpush1.xpose.msra.mxu0 0.0
      %856 = vmatprep.subr.mxu0 0.0
      %857 = vmatpush1.xpose.msra.mxu0 0.0
      %858 = vmatprep.subr.mxu0 0.0
      %859 = vmatpush1.xpose.msra.mxu0 0.0
      %860 = vmatprep.subr.mxu0 0.0
      %861 = vmatpush1.xpose.msra.mxu0 0.0
      %862 = vmatprep.subr.mxu0 0.0
      %863 = vmatpush1.xpose.msra.mxu0 0.0
      %864 = vmatprep.subr.mxu0 0.0
      %865 = vmatpush1.xpose.msra.mxu0 0.0
      %866 = vmatprep.subr.mxu0 0.0
      %867 = vmatpush1.xpose.msra.mxu0 0.0
      %868 = vmatprep.subr.mxu0 0.0
      %v869 = vand.u32 %v697, 4294901760
      %v870 = vsub.f32 %v697, %v869
      %v871 = vand.u32 %v870, 4294901760
      %v872 = vsub.f32 %v870, %v871
      %v873 = vand.u32 %v872, 4294901760
      %874 = vmatpush1.xpose.msra.mxu0 %v873
      %875 = vmatprep.subr.mxu0 0.0
      %v876 = vand.u32 %v694, 4294901760
      %v877 = vsub.f32 %v694, %v876
      %v878 = vand.u32 %v877, 4294901760
      %v879 = vsub.f32 %v877, %v878
      %v880 = vand.u32 %v879, 4294901760
      %881 = vmatpush1.xpose.msra.mxu0 %v880
      %882 = vmatprep.subr.mxu0 0.0
      %v883 = vand.u32 %v691, 4294901760
      %v884 = vsub.f32 %v691, %v883
      %v885 = vand.u32 %v884, 4294901760
      %v886 = vsub.f32 %v884, %v885
      %v887 = vand.u32 %v886, 4294901760
      %888 = vmatpush1.xpose.msra.mxu0 %v887
      %889 = vmatprep.subr.mxu0 0.0
      %v890 = vand.u32 %v688, 4294901760
      %v891 = vsub.f32 %v688, %v890
      %v892 = vand.u32 %v891, 4294901760
      %v893 = vsub.f32 %v891, %v892
      %v894 = vand.u32 %v893, 4294901760
      %895 = vmatpush1.xpose.msra.mxu0 %v894
      %896 = vmatprep.subr.mxu0 0.0
      %v897 = vand.u32 %v685, 4294901760
      %v898 = vsub.f32 %v685, %v897
      %v899 = vand.u32 %v898, 4294901760
      %v900 = vsub.f32 %v898, %v899
      %v901 = vand.u32 %v900, 4294901760
      %902 = vmatpush1.xpose.msra.mxu0 %v901
      %903 = vmatprep.subr.mxu0 0.0
      %v904 = vand.u32 %v682, 4294901760
      %v905 = vsub.f32 %v682, %v904
      %v906 = vand.u32 %v905, 4294901760
      %v907 = vsub.f32 %v905, %v906
      %v908 = vand.u32 %v907, 4294901760
      %909 = vmatpush1.xpose.msra.mxu0 %v908
      %910 = vmatprep.subr.mxu0 0.0
      %v911 = vand.u32 %v679, 4294901760
      %v912 = vsub.f32 %v679, %v911
      %v913 = vand.u32 %v912, 4294901760
      %v914 = vsub.f32 %v912, %v913
      %v915 = vand.u32 %v914, 4294901760
      %916 = vmatpush1.xpose.msra.mxu0 %v915
      %917 = vmatprep.subr.mxu0 0.0
      %v918 = vand.u32 %v676, 4294901760
      %v919 = vsub.f32 %v676, %v918
      %v920 = vand.u32 %v919, 4294901760
      %v921 = vsub.f32 %v919, %v920
      %v922 = vand.u32 %v921, 4294901760
      %923 = vmatpush1.xpose.msra.mxu0 %v922
      %924 = vmatprep.subr.mxu0 0.0
      %925 = vmatpush2.xpose.msra.mxu0 0.0
      %926 = vmatprep.subr.mxu0 0.0
      %927 = vmatpush2.xpose.msra.mxu0 0.0
      %928 = vmatprep.subr.mxu0 0.0
      %929 = vmatpush2.xpose.msra.mxu0 0.0
      %930 = vmatprep.subr.mxu0 0.0
      %931 = vmatpush2.xpose.msra.mxu0 0.0
      %932 = vmatprep.subr.mxu0 0.0
      %933 = vmatpush2.xpose.msra.mxu0 0.0
      %934 = vmatprep.subr.mxu0 0.0
      %935 = vmatpush2.xpose.msra.mxu0 0.0
      %936 = vmatprep.subr.mxu0 0.0
      %937 = vmatpush2.xpose.msra.mxu0 0.0
      %938 = vmatprep.subr.mxu0 0.0
      %939 = vmatpush2.xpose.msra.mxu0 0.0
      %940 = vmatprep.subr.mxu0 0.0
      %941 = vmatpush2.xpose.msra.mxu0 0.0
      %942 = vmatprep.subr.mxu0 0.0
      %943 = vmatpush2.xpose.msra.mxu0 0.0
      %944 = vmatprep.subr.mxu0 0.0
      %945 = vmatpush2.xpose.msra.mxu0 0.0
      %946 = vmatprep.subr.mxu0 0.0
      %947 = vmatpush2.xpose.msra.mxu0 0.0
      %948 = vmatprep.subr.mxu0 0.0
      %949 = vmatpush2.xpose.msra.mxu0 0.0
      %950 = vmatprep.subr.mxu0 0.0
      %951 = vmatpush2.xpose.msra.mxu0 0.0
      %952 = vmatprep.subr.mxu0 0.0
      %953 = vmatpush2.xpose.msra.mxu0 0.0
      %954 = vmatprep.subr.mxu0 0.0
      %955 = vmatpush2.xpose.msra.mxu0 0.0
      %956 = vmatprep.mubr.f32.mxu0 0.0
      %v957 = vand.u32 %v652, 4294901760
      %958 = vmatmul.mubr.f32.gmra.mxu0 %v957
      %v959 = vpop.f32.mrf.mxu0
      %v960 = vadd.f32 %v779, %v959
      %v961 = vpop.f32.mrf.mxu0
      %962 = vmatprep.mubr.f32.mxu0 0.0
      %v963 = vand.u32 %v655, 4294901760
      %964 = vmatmul.mubr.f32.gmra.mxu0 %v963
      %v965 = vpop.f32.mrf.mxu0
      %v966 = vadd.f32 %v789, %v965
      %v967 = vpop.f32.mrf.mxu0
      %968 = vmatprep.mubr.f32.mxu0 0.0
      %v969 = vand.u32 %v658, 4294901760
      %970 = vmatmul.mubr.f32.gmra.mxu0 %v969
      %v971 = vpop.f32.mrf.mxu0
      %v972 = vadd.f32 %v799, %v971
      %v973 = vpop.f32.mrf.mxu0
      %974 = vmatprep.mubr.f32.mxu0 0.0
      %v975 = vand.u32 %v661, 4294901760
      %976 = vmatmul.mubr.f32.gmra.mxu0 %v975
      %v977 = vpop.f32.mrf.mxu0
      %v978 = vadd.f32 %v809, %v977
      %v979 = vpop.f32.mrf.mxu0
      %980 = vmatprep.mubr.f32.mxu0 0.0
      %v981 = vand.u32 %v664, 4294901760
      %982 = vmatmul.mubr.f32.gmra.mxu0 %v981
      %v983 = vpop.f32.mrf.mxu0
      %v984 = vadd.f32 %v819, %v983
      %v985 = vpop.f32.mrf.mxu0
      %986 = vmatprep.mubr.f32.mxu0 0.0
      %v987 = vand.u32 %v667, 4294901760
      %988 = vmatmul.mubr.f32.gmra.mxu0 %v987
      %v989 = vpop.f32.mrf.mxu0
      %v990 = vadd.f32 %v829, %v989
      %v991 = vpop.f32.mrf.mxu0
      %992 = vmatprep.mubr.f32.mxu0 0.0
      %v993 = vand.u32 %v670, 4294901760
      %994 = vmatmul.mubr.f32.gmra.mxu0 %v993
      %v995 = vpop.f32.mrf.mxu0
      %v996 = vadd.f32 %v839, %v995
      %v997 = vpop.f32.mrf.mxu0
      %998 = vmatprep.mubr.f32.mxu0 0.0
      %v999 = vand.u32 %v673, 4294901760
      %1000 = vmatmul.mubr.f32.gmra.mxu0 %v999
      %v1001 = vpop.f32.mrf.mxu0
      %v1002 = vadd.f32 %v849, %v1001
      %v1003 = vpop.f32.mrf.mxu0
      %1004 = vdwg.mxu0
      %1005 = vmatprep.subr.mxu0 0.0
      %1006 = vmatpush1.xpose.msra.mxu0 0.0
      %1007 = vmatprep.subr.mxu0 0.0
      %1008 = vmatpush1.xpose.msra.mxu0 0.0
      %1009 = vmatprep.subr.mxu0 0.0
      %1010 = vmatpush1.xpose.msra.mxu0 0.0
      %1011 = vmatprep.subr.mxu0 0.0
      %1012 = vmatpush1.xpose.msra.mxu0 0.0
      %1013 = vmatprep.subr.mxu0 0.0
      %1014 = vmatpush1.xpose.msra.mxu0 0.0
      %1015 = vmatprep.subr.mxu0 0.0
      %1016 = vmatpush1.xpose.msra.mxu0 0.0
      %1017 = vmatprep.subr.mxu0 0.0
      %1018 = vmatpush1.xpose.msra.mxu0 0.0
      %1019 = vmatprep.subr.mxu0 0.0
      %1020 = vmatpush1.xpose.msra.mxu0 0.0
      %1021 = vmatprep.subr.mxu0 0.0
      %v1022 = vand.u32 %v697, 4294901760
      %v1023 = vsub.f32 %v697, %v1022
      %1024 = vmatpush1.xpose.msra.mxu0 %v1023
      %1025 = vmatprep.subr.mxu0 0.0
      %v1026 = vand.u32 %v694, 4294901760
      %v1027 = vsub.f32 %v694, %v1026
      %1028 = vmatpush1.xpose.msra.mxu0 %v1027
      %1029 = vmatprep.subr.mxu0 0.0
      %v1030 = vand.u32 %v691, 4294901760
      %v1031 = vsub.f32 %v691, %v1030
      %1032 = vmatpush1.xpose.msra.mxu0 %v1031
      %1033 = vmatprep.subr.mxu0 0.0
      %v1034 = vand.u32 %v688, 4294901760
      %v1035 = vsub.f32 %v688, %v1034
      %1036 = vmatpush1.xpose.msra.mxu0 %v1035
      %1037 = vmatprep.subr.mxu0 0.0
      %v1038 = vand.u32 %v685, 4294901760
      %v1039 = vsub.f32 %v685, %v1038
      %1040 = vmatpush1.xpose.msra.mxu0 %v1039
      %1041 = vmatprep.subr.mxu0 0.0
      %v1042 = vand.u32 %v682, 4294901760
      %v1043 = vsub.f32 %v682, %v1042
      %1044 = vmatpush1.xpose.msra.mxu0 %v1043
      %1045 = vmatprep.subr.mxu0 0.0
      %v1046 = vand.u32 %v679, 4294901760
      %v1047 = vsub.f32 %v679, %v1046
      %1048 = vmatpush1.xpose.msra.mxu0 %v1047
      %1049 = vmatprep.subr.mxu0 0.0
      %v1050 = vand.u32 %v676, 4294901760
      %v1051 = vsub.f32 %v676, %v1050
      %1052 = vmatpush1.xpose.msra.mxu0 %v1051
      %1053 = vmatprep.subr.mxu0 0.0
      %1054 = vmatpush2.xpose.msra.mxu0 0.0
      %1055 = vmatprep.subr.mxu0 0.0
      %1056 = vmatpush2.xpose.msra.mxu0 0.0
      %1057 = vmatprep.subr.mxu0 0.0
      %1058 = vmatpush2.xpose.msra.mxu0 0.0
      %1059 = vmatprep.subr.mxu0 0.0
      %1060 = vmatpush2.xpose.msra.mxu0 0.0
      %1061 = vmatprep.subr.mxu0 0.0
      %1062 = vmatpush2.xpose.msra.mxu0 0.0
      %1063 = vmatprep.subr.mxu0 0.0
      %1064 = vmatpush2.xpose.msra.mxu0 0.0
      %1065 = vmatprep.subr.mxu0 0.0
      %1066 = vmatpush2.xpose.msra.mxu0 0.0
      %1067 = vmatprep.subr.mxu0 0.0
      %1068 = vmatpush2.xpose.msra.mxu0 0.0
      %1069 = vmatprep.subr.mxu0 0.0
      %1070 = vmatpush2.xpose.msra.mxu0 0.0
      %1071 = vmatprep.subr.mxu0 0.0
      %1072 = vmatpush2.xpose.msra.mxu0 0.0
      %1073 = vmatprep.subr.mxu0 0.0
      %1074 = vmatpush2.xpose.msra.mxu0 0.0
      %1075 = vmatprep.subr.mxu0 0.0
      %1076 = vmatpush2.xpose.msra.mxu0 0.0
      %1077 = vmatprep.subr.mxu0 0.0
      %1078 = vmatpush2.xpose.msra.mxu0 0.0
      %1079 = vmatprep.subr.mxu0 0.0
      %1080 = vmatpush2.xpose.msra.mxu0 0.0
      %1081 = vmatprep.subr.mxu0 0.0
      %1082 = vmatpush2.xpose.msra.mxu0 0.0
      %1083 = vmatprep.subr.mxu0 0.0
      %1084 = vmatpush2.xpose.msra.mxu0 0.0
      %1085 = vmatprep.mubr.f32.mxu0 0.0
      %v1086 = vand.u32 %v652, 4294901760
      %v1087 = vsub.f32 %v652, %v1086
      %1088 = vmatmul.mubr.f32.gmra.mxu0 %v1087
      %v1089 = vpop.f32.mrf.mxu0
      %v1090 = vadd.f32 %v960, %v1089
      %v1091 = vpop.f32.mrf.mxu0
      %1092 = vmatprep.mubr.f32.mxu0 0.0
      %v1093 = vand.u32 %v655, 4294901760
      %v1094 = vsub.f32 %v655, %v1093
      %1095 = vmatmul.mubr.f32.gmra.mxu0 %v1094
      %v1096 = vpop.f32.mrf.mxu0
      %v1097 = vadd.f32 %v966, %v1096
      %v1098 = vpop.f32.mrf.mxu0
      %1099 = vmatprep.mubr.f32.mxu0 0.0
      %v1100 = vand.u32 %v658, 4294901760
      %v1101 = vsub.f32 %v658, %v1100
      %1102 = vmatmul.mubr.f32.gmra.mxu0 %v1101
      %v1103 = vpop.f32.mrf.mxu0
      %v1104 = vadd.f32 %v972, %v1103
      %v1105 = vpop.f32.mrf.mxu0
      %1106 = vmatprep.mubr.f32.mxu0 0.0
      %v1107 = vand.u32 %v661, 4294901760
      %v1108 = vsub.f32 %v661, %v1107
      %1109 = vmatmul.mubr.f32.gmra.mxu0 %v1108
      %v1110 = vpop.f32.mrf.mxu0
      %v1111 = vadd.f32 %v978, %v1110
      %v1112 = vpop.f32.mrf.mxu0
      %1113 = vmatprep.mubr.f32.mxu0 0.0
      %v1114 = vand.u32 %v664, 4294901760
      %v1115 = vsub.f32 %v664, %v1114
      %1116 = vmatmul.mubr.f32.gmra.mxu0 %v1115
      %v1117 = vpop.f32.mrf.mxu0
      %v1118 = vadd.f32 %v984, %v1117
      %v1119 = vpop.f32.mrf.mxu0
      %1120 = vmatprep.mubr.f32.mxu0 0.0
      %v1121 = vand.u32 %v667, 4294901760
      %v1122 = vsub.f32 %v667, %v1121
      %1123 = vmatmul.mubr.f32.gmra.mxu0 %v1122
      %v1124 = vpop.f32.mrf.mxu0
      %v1125 = vadd.f32 %v990, %v1124
      %v1126 = vpop.f32.mrf.mxu0
      %1127 = vmatprep.mubr.f32.mxu0 0.0
      %v1128 = vand.u32 %v670, 4294901760
      %v1129 = vsub.f32 %v670, %v1128
      %1130 = vmatmul.mubr.f32.gmra.mxu0 %v1129
      %v1131 = vpop.f32.mrf.mxu0
      %v1132 = vadd.f32 %v996, %v1131
      %v1133 = vpop.f32.mrf.mxu0
      %1134 = vmatprep.mubr.f32.mxu0 0.0
      %v1135 = vand.u32 %v673, 4294901760
      %v1136 = vsub.f32 %v673, %v1135
      %1137 = vmatmul.mubr.f32.gmra.mxu0 %v1136
      %v1138 = vpop.f32.mrf.mxu0
      %v1139 = vadd.f32 %v1002, %v1138
      %v1140 = vpop.f32.mrf.mxu0
      %1141 = vdwg.mxu0
      %1142 = vmatprep.subr.mxu0 0.0
      %1143 = vmatpush1.xpose.msra.mxu0 0.0
      %1144 = vmatprep.subr.mxu0 0.0
      %1145 = vmatpush1.xpose.msra.mxu0 0.0
      %1146 = vmatprep.subr.mxu0 0.0
      %1147 = vmatpush1.xpose.msra.mxu0 0.0
      %1148 = vmatprep.subr.mxu0 0.0
      %1149 = vmatpush1.xpose.msra.mxu0 0.0
      %1150 = vmatprep.subr.mxu0 0.0
      %1151 = vmatpush1.xpose.msra.mxu0 0.0
      %1152 = vmatprep.subr.mxu0 0.0
      %1153 = vmatpush1.xpose.msra.mxu0 0.0
      %1154 = vmatprep.subr.mxu0 0.0
      %1155 = vmatpush1.xpose.msra.mxu0 0.0
      %1156 = vmatprep.subr.mxu0 0.0
      %1157 = vmatpush1.xpose.msra.mxu0 0.0
      %1158 = vmatprep.subr.mxu0 0.0
      %v1159 = vand.u32 %v697, 4294901760
      %1160 = vmatpush1.xpose.msra.mxu0 %v1159
      %1161 = vmatprep.subr.mxu0 0.0
      %v1162 = vand.u32 %v694, 4294901760
      %1163 = vmatpush1.xpose.msra.mxu0 %v1162
      %1164 = vmatprep.subr.mxu0 0.0
      %v1165 = vand.u32 %v691, 4294901760
      %1166 = vmatpush1.xpose.msra.mxu0 %v1165
      %1167 = vmatprep.subr.mxu0 0.0
      %v1168 = vand.u32 %v688, 4294901760
      %1169 = vmatpush1.xpose.msra.mxu0 %v1168
      %1170 = vmatprep.subr.mxu0 0.0
      %v1171 = vand.u32 %v685, 4294901760
      %1172 = vmatpush1.xpose.msra.mxu0 %v1171
      %1173 = vmatprep.subr.mxu0 0.0
      %v1174 = vand.u32 %v682, 4294901760
      %1175 = vmatpush1.xpose.msra.mxu0 %v1174
      %1176 = vmatprep.subr.mxu0 0.0
      %v1177 = vand.u32 %v679, 4294901760
      %1178 = vmatpush1.xpose.msra.mxu0 %v1177
      %1179 = vmatprep.subr.mxu0 0.0
      %v1180 = vand.u32 %v676, 4294901760
      %1181 = vmatpush1.xpose.msra.mxu0 %v1180
      %1182 = vmatprep.subr.mxu0 0.0
      %1183 = vmatpush2.xpose.msra.mxu0 0.0
      %1184 = vmatprep.subr.mxu0 0.0
      %1185 = vmatpush2.xpose.msra.mxu0 0.0
      %1186 = vmatprep.subr.mxu0 0.0
      %1187 = vmatpush2.xpose.msra.mxu0 0.0
      %1188 = vmatprep.subr.mxu0 0.0
      %1189 = vmatpush2.xpose.msra.mxu0 0.0
      %1190 = vmatprep.subr.mxu0 0.0
      %1191 = vmatpush2.xpose.msra.mxu0 0.0
      %1192 = vmatprep.subr.mxu0 0.0
      %1193 = vmatpush2.xpose.msra.mxu0 0.0
      %1194 = vmatprep.subr.mxu0 0.0
      %1195 = vmatpush2.xpose.msra.mxu0 0.0
      %1196 = vmatprep.subr.mxu0 0.0
      %1197 = vmatpush2.xpose.msra.mxu0 0.0
      %1198 = vmatprep.subr.mxu0 0.0
      %1199 = vmatpush2.xpose.msra.mxu0 0.0
      %1200 = vmatprep.subr.mxu0 0.0
      %1201 = vmatpush2.xpose.msra.mxu0 0.0
      %1202 = vmatprep.subr.mxu0 0.0
      %1203 = vmatpush2.xpose.msra.mxu0 0.0
      %1204 = vmatprep.subr.mxu0 0.0
      %1205 = vmatpush2.xpose.msra.mxu0 0.0
      %1206 = vmatprep.subr.mxu0 0.0
      %1207 = vmatpush2.xpose.msra.mxu0 0.0
      %1208 = vmatprep.subr.mxu0 0.0
      %1209 = vmatpush2.xpose.msra.mxu0 0.0
      %1210 = vmatprep.subr.mxu0 0.0
      %1211 = vmatpush2.xpose.msra.mxu0 0.0
      %1212 = vmatprep.subr.mxu0 0.0
      %1213 = vmatpush2.xpose.msra.mxu0 0.0
      %1214 = vmatprep.mubr.f32.mxu0 0.0
      %v1215 = vand.u32 %v652, 4294901760
      %v1216 = vsub.f32 %v652, %v1215
      %v1217 = vand.u32 %v1216, 4294901760
      %1218 = vmatmul.mubr.f32.gmra.mxu0 %v1217
      %v1219 = vpop.f32.mrf.mxu0
      %v1220 = vadd.f32 %v1090, %v1219
      %v1221 = vpop.f32.mrf.mxu0
      %1222 = vmatprep.mubr.f32.mxu0 0.0
      %v1223 = vand.u32 %v655, 4294901760
      %v1224 = vsub.f32 %v655, %v1223
      %v1225 = vand.u32 %v1224, 4294901760
      %1226 = vmatmul.mubr.f32.gmra.mxu0 %v1225
      %v1227 = vpop.f32.mrf.mxu0
      %v1228 = vadd.f32 %v1097, %v1227
      %v1229 = vpop.f32.mrf.mxu0
      %1230 = vmatprep.mubr.f32.mxu0 0.0
      %v1231 = vand.u32 %v658, 4294901760
      %v1232 = vsub.f32 %v658, %v1231
      %v1233 = vand.u32 %v1232, 4294901760
      %1234 = vmatmul.mubr.f32.gmra.mxu0 %v1233
      %v1235 = vpop.f32.mrf.mxu0
      %v1236 = vadd.f32 %v1104, %v1235
      %v1237 = vpop.f32.mrf.mxu0
      %1238 = vmatprep.mubr.f32.mxu0 0.0
      %v1239 = vand.u32 %v661, 4294901760
      %v1240 = vsub.f32 %v661, %v1239
      %v1241 = vand.u32 %v1240, 4294901760
      %1242 = vmatmul.mubr.f32.gmra.mxu0 %v1241
      %v1243 = vpop.f32.mrf.mxu0
      %v1244 = vadd.f32 %v1111, %v1243
      %v1245 = vpop.f32.mrf.mxu0
      %1246 = vmatprep.mubr.f32.mxu0 0.0
      %v1247 = vand.u32 %v664, 4294901760
      %v1248 = vsub.f32 %v664, %v1247
      %v1249 = vand.u32 %v1248, 4294901760
      %1250 = vmatmul.mubr.f32.gmra.mxu0 %v1249
      %v1251 = vpop.f32.mrf.mxu0
      %v1252 = vadd.f32 %v1118, %v1251
      %v1253 = vpop.f32.mrf.mxu0
      %1254 = vmatprep.mubr.f32.mxu0 0.0
      %v1255 = vand.u32 %v667, 4294901760
      %v1256 = vsub.f32 %v667, %v1255
      %v1257 = vand.u32 %v1256, 4294901760
      %1258 = vmatmul.mubr.f32.gmra.mxu0 %v1257
      %v1259 = vpop.f32.mrf.mxu0
      %v1260 = vadd.f32 %v1125, %v1259
      %v1261 = vpop.f32.mrf.mxu0
      %1262 = vmatprep.mubr.f32.mxu0 0.0
      %v1263 = vand.u32 %v670, 4294901760
      %v1264 = vsub.f32 %v670, %v1263
      %v1265 = vand.u32 %v1264, 4294901760
      %1266 = vmatmul.mubr.f32.gmra.mxu0 %v1265
      %v1267 = vpop.f32.mrf.mxu0
      %v1268 = vadd.f32 %v1132, %v1267
      %v1269 = vpop.f32.mrf.mxu0
      %1270 = vmatprep.mubr.f32.mxu0 0.0
      %v1271 = vand.u32 %v673, 4294901760
      %v1272 = vsub.f32 %v673, %v1271
      %v1273 = vand.u32 %v1272, 4294901760
      %1274 = vmatmul.mubr.f32.gmra.mxu0 %v1273
      %v1275 = vpop.f32.mrf.mxu0
      %v1276 = vadd.f32 %v1139, %v1275
      %v1277 = vpop.f32.mrf.mxu0
      %1278 = vdwg.mxu0
      %1279 = vmatprep.subr.mxu0 0.0
      %1280 = vmatpush1.xpose.msra.mxu0 0.0
      %1281 = vmatprep.subr.mxu0 0.0
      %1282 = vmatpush1.xpose.msra.mxu0 0.0
      %1283 = vmatprep.subr.mxu0 0.0
      %1284 = vmatpush1.xpose.msra.mxu0 0.0
      %1285 = vmatprep.subr.mxu0 0.0
      %1286 = vmatpush1.xpose.msra.mxu0 0.0
      %1287 = vmatprep.subr.mxu0 0.0
      %1288 = vmatpush1.xpose.msra.mxu0 0.0
      %1289 = vmatprep.subr.mxu0 0.0
      %1290 = vmatpush1.xpose.msra.mxu0 0.0
      %1291 = vmatprep.subr.mxu0 0.0
      %1292 = vmatpush1.xpose.msra.mxu0 0.0
      %1293 = vmatprep.subr.mxu0 0.0
      %1294 = vmatpush1.xpose.msra.mxu0 0.0
      %1295 = vmatprep.subr.mxu0 0.0
      %v1296 = vand.u32 %v697, 4294901760
      %v1297 = vsub.f32 %v697, %v1296
      %v1298 = vand.u32 %v1297, 4294901760
      %1299 = vmatpush1.xpose.msra.mxu0 %v1298
      %1300 = vmatprep.subr.mxu0 0.0
      %v1301 = vand.u32 %v694, 4294901760
      %v1302 = vsub.f32 %v694, %v1301
      %v1303 = vand.u32 %v1302, 4294901760
      %1304 = vmatpush1.xpose.msra.mxu0 %v1303
      %1305 = vmatprep.subr.mxu0 0.0
      %v1306 = vand.u32 %v691, 4294901760
      %v1307 = vsub.f32 %v691, %v1306
      %v1308 = vand.u32 %v1307, 4294901760
      %1309 = vmatpush1.xpose.msra.mxu0 %v1308
      %1310 = vmatprep.subr.mxu0 0.0
      %v1311 = vand.u32 %v688, 4294901760
      %v1312 = vsub.f32 %v688, %v1311
      %v1313 = vand.u32 %v1312, 4294901760
      %1314 = vmatpush1.xpose.msra.mxu0 %v1313
      %1315 = vmatprep.subr.mxu0 0.0
      %v1316 = vand.u32 %v685, 4294901760
      %v1317 = vsub.f32 %v685, %v1316
      %v1318 = vand.u32 %v1317, 4294901760
      %1319 = vmatpush1.xpose.msra.mxu0 %v1318
      %1320 = vmatprep.subr.mxu0 0.0
      %v1321 = vand.u32 %v682, 4294901760
      %v1322 = vsub.f32 %v682, %v1321
      %v1323 = vand.u32 %v1322, 4294901760
      %1324 = vmatpush1.xpose.msra.mxu0 %v1323
      %1325 = vmatprep.subr.mxu0 0.0
      %v1326 = vand.u32 %v679, 4294901760
      %v1327 = vsub.f32 %v679, %v1326
      %v1328 = vand.u32 %v1327, 4294901760
      %1329 = vmatpush1.xpose.msra.mxu0 %v1328
      %1330 = vmatprep.subr.mxu0 0.0
      %v1331 = vand.u32 %v676, 4294901760
      %v1332 = vsub.f32 %v676, %v1331
      %v1333 = vand.u32 %v1332, 4294901760
      %1334 = vmatpush1.xpose.msra.mxu0 %v1333
      %1335 = vmatprep.subr.mxu0 0.0
      %1336 = vmatpush2.xpose.msra.mxu0 0.0
      %1337 = vmatprep.subr.mxu0 0.0
      %1338 = vmatpush2.xpose.msra.mxu0 0.0
      %1339 = vmatprep.subr.mxu0 0.0
      %1340 = vmatpush2.xpose.msra.mxu0 0.0
      %1341 = vmatprep.subr.mxu0 0.0
      %1342 = vmatpush2.xpose.msra.mxu0 0.0
      %1343 = vmatprep.subr.mxu0 0.0
      %1344 = vmatpush2.xpose.msra.mxu0 0.0
      %1345 = vmatprep.subr.mxu0 0.0
      %1346 = vmatpush2.xpose.msra.mxu0 0.0
      %1347 = vmatprep.subr.mxu0 0.0
      %1348 = vmatpush2.xpose.msra.mxu0 0.0
      %1349 = vmatprep.subr.mxu0 0.0
      %1350 = vmatpush2.xpose.msra.mxu0 0.0
      %1351 = vmatprep.subr.mxu0 0.0
      %1352 = vmatpush2.xpose.msra.mxu0 0.0
      %1353 = vmatprep.subr.mxu0 0.0
      %1354 = vmatpush2.xpose.msra.mxu0 0.0
      %1355 = vmatprep.subr.mxu0 0.0
      %1356 = vmatpush2.xpose.msra.mxu0 0.0
      %1357 = vmatprep.subr.mxu0 0.0
      %1358 = vmatpush2.xpose.msra.mxu0 0.0
      %1359 = vmatprep.subr.mxu0 0.0
      %1360 = vmatpush2.xpose.msra.mxu0 0.0
      %1361 = vmatprep.subr.mxu0 0.0
      %1362 = vmatpush2.xpose.msra.mxu0 0.0
      %1363 = vmatprep.subr.mxu0 0.0
      %1364 = vmatpush2.xpose.msra.mxu0 0.0
      %1365 = vmatprep.subr.mxu0 0.0
      %1366 = vmatpush2.xpose.msra.mxu0 0.0
      %1367 = vmatprep.mubr.f32.mxu0 0.0
      %v1368 = vand.u32 %v652, 4294901760
      %1369 = vmatmul.mubr.f32.gmra.mxu0 %v1368
      %v1370 = vpop.f32.mrf.mxu0
      %v1371 = vadd.f32 %v1220, %v1370
      %v1372 = vpop.f32.mrf.mxu0
      %1373 = vmatprep.mubr.f32.mxu0 0.0
      %v1374 = vand.u32 %v655, 4294901760
      %1375 = vmatmul.mubr.f32.gmra.mxu0 %v1374
      %v1376 = vpop.f32.mrf.mxu0
      %v1377 = vadd.f32 %v1228, %v1376
      %v1378 = vpop.f32.mrf.mxu0
      %1379 = vmatprep.mubr.f32.mxu0 0.0
      %v1380 = vand.u32 %v658, 4294901760
      %1381 = vmatmul.mubr.f32.gmra.mxu0 %v1380
      %v1382 = vpop.f32.mrf.mxu0
      %v1383 = vadd.f32 %v1236, %v1382
      %v1384 = vpop.f32.mrf.mxu0
      %1385 = vmatprep.mubr.f32.mxu0 0.0
      %v1386 = vand.u32 %v661, 4294901760
      %1387 = vmatmul.mubr.f32.gmra.mxu0 %v1386
      %v1388 = vpop.f32.mrf.mxu0
      %v1389 = vadd.f32 %v1244, %v1388
      %v1390 = vpop.f32.mrf.mxu0
      %1391 = vmatprep.mubr.f32.mxu0 0.0
      %v1392 = vand.u32 %v664, 4294901760
      %1393 = vmatmul.mubr.f32.gmra.mxu0 %v1392
      %v1394 = vpop.f32.mrf.mxu0
      %v1395 = vadd.f32 %v1252, %v1394
      %v1396 = vpop.f32.mrf.mxu0
      %1397 = vmatprep.mubr.f32.mxu0 0.0
      %v1398 = vand.u32 %v667, 4294901760
      %1399 = vmatmul.mubr.f32.gmra.mxu0 %v1398
      %v1400 = vpop.f32.mrf.mxu0
      %v1401 = vadd.f32 %v1260, %v1400
      %v1402 = vpop.f32.mrf.mxu0
      %1403 = vmatprep.mubr.f32.mxu0 0.0
      %v1404 = vand.u32 %v670, 4294901760
      %1405 = vmatmul.mubr.f32.gmra.mxu0 %v1404
      %v1406 = vpop.f32.mrf.mxu0
      %v1407 = vadd.f32 %v1268, %v1406
      %v1408 = vpop.f32.mrf.mxu0
      %1409 = vmatprep.mubr.f32.mxu0 0.0
      %v1410 = vand.u32 %v673, 4294901760
      %1411 = vmatmul.mubr.f32.gmra.mxu0 %v1410
      %v1412 = vpop.f32.mrf.mxu0
      %v1413 = vadd.f32 %v1276, %v1412
      %v1414 = vpop.f32.mrf.mxu0
      %1415 = vdwg.mxu0
      %1416 = vmatprep.subr.mxu0 0.0
      %1417 = vmatpush1.xpose.msra.mxu0 0.0
      %1418 = vmatprep.subr.mxu0 0.0
      %1419 = vmatpush1.xpose.msra.mxu0 0.0
      %1420 = vmatprep.subr.mxu0 0.0
      %1421 = vmatpush1.xpose.msra.mxu0 0.0
      %1422 = vmatprep.subr.mxu0 0.0
      %1423 = vmatpush1.xpose.msra.mxu0 0.0
      %1424 = vmatprep.subr.mxu0 0.0
      %1425 = vmatpush1.xpose.msra.mxu0 0.0
      %1426 = vmatprep.subr.mxu0 0.0
      %1427 = vmatpush1.xpose.msra.mxu0 0.0
      %1428 = vmatprep.subr.mxu0 0.0
      %1429 = vmatpush1.xpose.msra.mxu0 0.0
      %1430 = vmatprep.subr.mxu0 0.0
      %1431 = vmatpush1.xpose.msra.mxu0 0.0
      %1432 = vmatprep.subr.mxu0 0.0
      %v1433 = vand.u32 %v697, 4294901760
      %1434 = vmatpush1.xpose.msra.mxu0 %v1433
      %1435 = vmatprep.subr.mxu0 0.0
      %v1436 = vand.u32 %v694, 4294901760
      %1437 = vmatpush1.xpose.msra.mxu0 %v1436
      %1438 = vmatprep.subr.mxu0 0.0
      %v1439 = vand.u32 %v691, 4294901760
      %1440 = vmatpush1.xpose.msra.mxu0 %v1439
      %1441 = vmatprep.subr.mxu0 0.0
      %v1442 = vand.u32 %v688, 4294901760
      %1443 = vmatpush1.xpose.msra.mxu0 %v1442
      %1444 = vmatprep.subr.mxu0 0.0
      %v1445 = vand.u32 %v685, 4294901760
      %1446 = vmatpush1.xpose.msra.mxu0 %v1445
      %1447 = vmatprep.subr.mxu0 0.0
      %v1448 = vand.u32 %v682, 4294901760
      %1449 = vmatpush1.xpose.msra.mxu0 %v1448
      %1450 = vmatprep.subr.mxu0 0.0
      %v1451 = vand.u32 %v679, 4294901760
      %1452 = vmatpush1.xpose.msra.mxu0 %v1451
      %1453 = vmatprep.subr.mxu0 0.0
      %v1454 = vand.u32 %v676, 4294901760
      %1455 = vmatpush1.xpose.msra.mxu0 %v1454
      %1456 = vmatprep.subr.mxu0 0.0
      %1457 = vmatpush2.xpose.msra.mxu0 0.0
      %1458 = vmatprep.subr.mxu0 0.0
      %1459 = vmatpush2.xpose.msra.mxu0 0.0
      %1460 = vmatprep.subr.mxu0 0.0
      %1461 = vmatpush2.xpose.msra.mxu0 0.0
      %1462 = vmatprep.subr.mxu0 0.0
      %1463 = vmatpush2.xpose.msra.mxu0 0.0
      %1464 = vmatprep.subr.mxu0 0.0
      %1465 = vmatpush2.xpose.msra.mxu0 0.0
      %1466 = vmatprep.subr.mxu0 0.0
      %1467 = vmatpush2.xpose.msra.mxu0 0.0
      %1468 = vmatprep.subr.mxu0 0.0
      %1469 = vmatpush2.xpose.msra.mxu0 0.0
      %1470 = vmatprep.subr.mxu0 0.0
      %1471 = vmatpush2.xpose.msra.mxu0 0.0
      %1472 = vmatprep.subr.mxu0 0.0
      %1473 = vmatpush2.xpose.msra.mxu0 0.0
      %1474 = vmatprep.subr.mxu0 0.0
      %1475 = vmatpush2.xpose.msra.mxu0 0.0
      %1476 = vmatprep.subr.mxu0 0.0
      %1477 = vmatpush2.xpose.msra.mxu0 0.0
      %1478 = vmatprep.subr.mxu0 0.0
      %1479 = vmatpush2.xpose.msra.mxu0 0.0
      %1480 = vmatprep.subr.mxu0 0.0
      %1481 = vmatpush2.xpose.msra.mxu0 0.0
      %1482 = vmatprep.subr.mxu0 0.0
      %1483 = vmatpush2.xpose.msra.mxu0 0.0
      %1484 = vmatprep.subr.mxu0 0.0
      %1485 = vmatpush2.xpose.msra.mxu0 0.0
      %1486 = vmatprep.subr.mxu0 0.0
      %1487 = vmatpush2.xpose.msra.mxu0 0.0
      %1488 = vmatprep.mubr.f32.mxu0 0.0
      %v1489 = vand.u32 %v652, 4294901760
      %1490 = vmatmul.mubr.f32.gmra.mxu0 %v1489
      %v1491 = vpop.f32.mrf.mxu0
      %v1492 = vadd.f32 %v1371, %v1491
      %v1493 = vpop.f32.mrf.mxu0
      %1494 = vmatprep.mubr.f32.mxu0 0.0
      %v1495 = vand.u32 %v655, 4294901760
      %1496 = vmatmul.mubr.f32.gmra.mxu0 %v1495
      %v1497 = vpop.f32.mrf.mxu0
      %v1498 = vadd.f32 %v1377, %v1497
      %v1499 = vpop.f32.mrf.mxu0
      %1500 = vmatprep.mubr.f32.mxu0 0.0
      %v1501 = vand.u32 %v658, 4294901760
      %1502 = vmatmul.mubr.f32.gmra.mxu0 %v1501
      %v1503 = vpop.f32.mrf.mxu0
      %v1504 = vadd.f32 %v1383, %v1503
      %v1505 = vpop.f32.mrf.mxu0
      %1506 = vmatprep.mubr.f32.mxu0 0.0
      %v1507 = vand.u32 %v661, 4294901760
      %1508 = vmatmul.mubr.f32.gmra.mxu0 %v1507
      %v1509 = vpop.f32.mrf.mxu0
      %v1510 = vadd.f32 %v1389, %v1509
      %v1511 = vpop.f32.mrf.mxu0
      %1512 = vmatprep.mubr.f32.mxu0 0.0
      %v1513 = vand.u32 %v664, 4294901760
      %1514 = vmatmul.mubr.f32.gmra.mxu0 %v1513
      %v1515 = vpop.f32.mrf.mxu0
      %v1516 = vadd.f32 %v1395, %v1515
      %v1517 = vpop.f32.mrf.mxu0
      %1518 = vmatprep.mubr.f32.mxu0 0.0
      %v1519 = vand.u32 %v667, 4294901760
      %1520 = vmatmul.mubr.f32.gmra.mxu0 %v1519
      %v1521 = vpop.f32.mrf.mxu0
      %v1522 = vadd.f32 %v1401, %v1521
      %v1523 = vpop.f32.mrf.mxu0
      %1524 = vmatprep.mubr.f32.mxu0 0.0
      %v1525 = vand.u32 %v670, 4294901760
      %1526 = vmatmul.mubr.f32.gmra.mxu0 %v1525
      %v1527 = vpop.f32.mrf.mxu0
      %v1528 = vadd.f32 %v1407, %v1527
      %v1529 = vpop.f32.mrf.mxu0
      %1530 = vmatprep.mubr.f32.mxu0 0.0
      %v1531 = vand.u32 %v673, 4294901760
      %1532 = vmatmul.mubr.f32.gmra.mxu0 %v1531
      %v1533 = vpop.f32.mrf.mxu0
      %v1534 = vadd.f32 %v1413, %v1533
      %v1535 = vpop.f32.mrf.mxu0
      %1536 = vdwg.mxu0
      %v1537 = vmul.f32 %v1492, 10.0
      %v1538 = vmul.f32 %v1498, 10.0
      %v1539 = vmul.f32 %v1504, 10.0
      %v1540 = vmul.f32 %v1510, 10.0
      %v1541 = vmul.f32 %v1516, 10.0
      %v1542 = vmul.f32 %v1522, 10.0
      %v1543 = vmul.f32 %v1528, 10.0
      %v1544 = vmul.f32 %v1534, 10.0
      %vm1545 = vcmask 523264
      %v1546 = vsel %vm1545, %v1537, -inf
      %1547 = vmax.xlane.f32.xlu0 %v1546
      %v1548 = vpop.xlane.xlu0 %1547
      %v1549 = vsel %vm1545, %v1538, -inf
      %1550 = vmax.xlane.f32.xlu0 %v1549
      %v1551 = vpop.xlane.xlu0 %1550
      %v1552 = vsel %vm1545, %v1539, -inf
      %1553 = vmax.xlane.f32.xlu0 %v1552
      %v1554 = vpop.xlane.xlu0 %1553
      %v1555 = vsel %vm1545, %v1540, -inf
      %1556 = vmax.xlane.f32.xlu0 %v1555
      %v1557 = vpop.xlane.xlu0 %1556
      %v1558 = vsel %vm1545, %v1541, -inf
      %1559 = vmax.xlane.f32.xlu0 %v1558
      %v1560 = vpop.xlane.xlu0 %1559
      %v1561 = vsel %vm1545, %v1542, -inf
      %1562 = vmax.xlane.f32.xlu0 %v1561
      %v1563 = vpop.xlane.xlu0 %1562
      %v1564 = vsel %vm1545, %v1543, -inf
      %1565 = vmax.xlane.f32.xlu0 %v1564
      %v1566 = vpop.xlane.xlu0 %1565
      %v1567 = vsel %vm1545, %v1544, -inf
      %1568 = vmax.xlane.f32.xlu0 %v1567
      %v1569 = vpop.xlane.xlu0 %1568
      %v1570 = vsub.f32 %v1537, %v1548
      %v1571 = vsub.f32 %v1538, %v1551
      %v1572 = vsub.f32 %v1539, %v1554
      %v1573 = vsub.f32 %v1540, %v1557
      %v1574 = vsub.f32 %v1541, %v1560
      %v1575 = vsub.f32 %v1542, %v1563
      %v1576 = vsub.f32 %v1543, %v1566
      %v1577 = vsub.f32 %v1544, %v1569
      %v1578 = vmul.f32 %v1570, 1.442695
      %v1579 = vpow.pop %v1578
      %v1580 = vmul.f32 %v1571, 1.442695
      %v1581 = vpow.pop %v1580
      %v1582 = vmul.f32 %v1572, 1.442695
      %v1583 = vpow.pop %v1582
      %v1584 = vmul.f32 %v1573, 1.442695
      %v1585 = vpow.pop %v1584
      %v1586 = vmul.f32 %v1574, 1.442695
      %v1587 = vpow.pop %v1586
      %v1588 = vmul.f32 %v1575, 1.442695
      %v1589 = vpow.pop %v1588
      %v1590 = vmul.f32 %v1576, 1.442695
      %v1591 = vpow.pop %v1590
      %v1592 = vmul.f32 %v1577, 1.442695
      %v1593 = vpow.pop %v1592
      %v1594 = vsel %vm1545, %v1579, 0.0
      %1595 = vadd.xlane.f32.xlu0 %v1594
      %v1596 = vpop.xlane.xlu0 %1595
      %v1597 = vsel %vm1545, %v1581, 0.0
      %1598 = vadd.xlane.f32.xlu0 %v1597
      %v1599 = vpop.xlane.xlu0 %1598
      %v1600 = vsel %vm1545, %v1583, 0.0
      %1601 = vadd.xlane.f32.xlu0 %v1600
      %v1602 = vpop.xlane.xlu0 %1601
      %v1603 = vsel %vm1545, %v1585, 0.0
      %1604 = vadd.xlane.f32.xlu0 %v1603
      %v1605 = vpop.xlane.xlu0 %1604
      %v1606 = vsel %vm1545, %v1587, 0.0
      %1607 = vadd.xlane.f32.xlu0 %v1606
      %v1608 = vpop.xlane.xlu0 %1607
      %v1609 = vsel %vm1545, %v1589, 0.0
      %1610 = vadd.xlane.f32.xlu0 %v1609
      %v1611 = vpop.xlane.xlu0 %1610
      %v1612 = vsel %vm1545, %v1591, 0.0
      %1613 = vadd.xlane.f32.xlu0 %v1612
      %v1614 = vpop.xlane.xlu0 %1613
      %v1615 = vsel %vm1545, %v1593, 0.0
      %1616 = vadd.xlane.f32.xlu0 %v1615
      %v1617 = vpop.xlane.xlu0 %1616
      %v1618 = vrcp.pop %v1596
      %v1619 = vmul.f32 %v1579, %v1618
      %v1620 = vrcp.pop %v1599
      %v1621 = vmul.f32 %v1581, %v1620
      %v1622 = vrcp.pop %v1602
      %v1623 = vmul.f32 %v1583, %v1622
      %v1624 = vrcp.pop %v1605
      %v1625 = vmul.f32 %v1585, %v1624
      %v1626 = vrcp.pop %v1608
      %v1627 = vmul.f32 %v1587, %v1626
      %v1628 = vrcp.pop %v1611
      %v1629 = vmul.f32 %v1589, %v1628
      %v1630 = vrcp.pop %v1614
      %v1631 = vmul.f32 %v1591, %v1630
      %v1632 = vrcp.pop %v1617
      %v1633 = vmul.f32 %v1593, %v1632
      %v1634 = vmax.f32 %v1619, 1e-08
      %v1635 = vmax.f32 %v1621, 1e-08
      %v1636 = vmax.f32 %v1623, 1e-08
      %v1637 = vmax.f32 %v1625, 1e-08
      %v1638 = vmax.f32 %v1627, 1e-08
      %v1639 = vmax.f32 %v1629, 1e-08
      %v1640 = vmax.f32 %v1631, 1e-08
      %v1641 = vmax.f32 %v1633, 1e-08
      %v1642 = vld [vmem:[%s158] sm:$0xff]
      %v1643 = vld [vmem:[%s158 + $0x8] sm:$0x1]
      %v1644 = vld [vmem:[%s158 + $0x10] sm:$0xff]
      %v1645 = vld [vmem:[%s158 + $0x18] sm:$0x1]
      %v1646 = vld [vmem:[%s158 + $0x20] sm:$0xff]
      %v1647 = vld [vmem:[%s158 + $0x28] sm:$0x1]
      %v1648 = vld [vmem:[%s158 + $0x30] sm:$0xff]
      %v1649 = vld [vmem:[%s158 + $0x38] sm:$0x1]
      %v1650 = vld [vmem:[%s158 + $0x40] sm:$0xff]
      %v1651 = vld [vmem:[%s158 + $0x48] sm:$0x1]
      %v1652 = vld [vmem:[%s158 + $0x50] sm:$0xff]
      %v1653 = vld [vmem:[%s158 + $0x58] sm:$0x1]
      %v1654 = vld [vmem:[%s158 + $0x60] sm:$0xff]
      %v1655 = vld [vmem:[%s158 + $0x68] sm:$0x1]
      %v1656 = vld [vmem:[%s158 + $0x70] sm:$0xff]
      %v1657 = vld [vmem:[%s158 + $0x78] sm:$0x1]
      %v1658 = vld [vmem:[%s158 + $0x80] sm:$0xff]
      %v1659 = vld [vmem:[%s158 + $0x88] sm:$0x1]
      %v1660 = vld [vmem:[%s158 + $0x90] sm:$0xff]
      %v1661 = vld [vmem:[%s158 + $0x98] sm:$0x1]
      %v1662 = vld [vmem:[%s158 + $0xa0] sm:$0xff]
      %v1663 = vld [vmem:[%s158 + $0xa8] sm:$0x1]
      %v1664 = vld [vmem:[%s158 + $0xb0] sm:$0xff]
      %v1665 = vld [vmem:[%s158 + $0xb8] sm:$0x1]
      %v1666 = vld [vmem:[%s158 + $0xc0] sm:$0xff]
      %v1667 = vld [vmem:[%s158 + $0xc8] sm:$0x1]
      %v1668 = vld [vmem:[%s158 + $0xd0] sm:$0xff]
      %v1669 = vld [vmem:[%s158 + $0xd8] sm:$0x1]
      %v1670 = vld [vmem:[%s158 + $0xe0] sm:$0xff]
      %v1671 = vld [vmem:[%s158 + $0xe8] sm:$0x1]
      %v1672 = vld [vmem:[%s158 + $0xf0] sm:$0xff]
      %v1673 = vld [vmem:[%s158 + $0xf8] sm:$0x1]
      %v1674 = vld [vmem:[%s158 + $0x100] sm:$0xff]
      %v1675 = vld [vmem:[%s158 + $0x108] sm:$0x1]
      %v1676 = vld [vmem:[%s158 + $0x110] sm:$0xff]
      %v1677 = vld [vmem:[%s158 + $0x118] sm:$0x1]
      %v1678 = vld [vmem:[%s158 + $0x120] sm:$0xff]
      %v1679 = vld [vmem:[%s158 + $0x128] sm:$0x1]
      %v1680 = vld [vmem:[%s158 + $0x130] sm:$0xff]
      %v1681 = vld [vmem:[%s158 + $0x138] sm:$0x1]
      %v1682 = vld [vmem:[%s158 + $0x140] sm:$0xff]
      %v1683 = vld [vmem:[%s158 + $0x148] sm:$0x1]
      %v1684 = vld [vmem:[%s158 + $0x150] sm:$0xff]
      %v1685 = vld [vmem:[%s158 + $0x158] sm:$0x1]
      %v1686 = vld [vmem:[%s158 + $0x160] sm:$0xff]
      %v1687 = vld [vmem:[%s158 + $0x168] sm:$0x1]
      %v1688 = vld [vmem:[%s158 + $0x170] sm:$0xff]
      %v1689 = vld [vmem:[%s158 + $0x178] sm:$0x1]
      %v1690 = vld [vmem:[%s158 + $0x180] sm:$0xff]
      %v1691 = vld [vmem:[%s158 + $0x188] sm:$0x1]
      %v1692 = vld [vmem:[%s158 + $0x190] sm:$0xff]
      %v1693 = vld [vmem:[%s158 + $0x198] sm:$0x1]
      %v1694 = vld [vmem:[%s158 + $0x1a0] sm:$0xff]
      %v1695 = vld [vmem:[%s158 + $0x1a8] sm:$0x1]
      %v1696 = vld [vmem:[%s158 + $0x1b0] sm:$0xff]
      %v1697 = vld [vmem:[%s158 + $0x1b8] sm:$0x1]
      %v1698 = vld [vmem:[%s158 + $0x1c0] sm:$0xff]
      %v1699 = vld [vmem:[%s158 + $0x1c8] sm:$0x1]
      %v1700 = vld [vmem:[%s158 + $0x1d0] sm:$0xff]
      %v1701 = vld [vmem:[%s158 + $0x1d8] sm:$0x1]
      %v1702 = vld [vmem:[%s158 + $0x1e0] sm:$0xff]
      %v1703 = vld [vmem:[%s158 + $0x1e8] sm:$0x1]
      %v1704 = vld [vmem:[%s158 + $0x1f0] sm:$0xff]
      %v1705 = vld [vmem:[%s158 + $0x1f8] sm:$0x1]
      %v1706 = vld [vmem:[%s158 + $0x200] sm:$0xff]
      %v1707 = vld [vmem:[%s158 + $0x208] sm:$0x1]
      %v1708 = vld [vmem:[%s158 + $0x210] sm:$0xff]
      %v1709 = vld [vmem:[%s158 + $0x218] sm:$0x1]
      %v1710 = vld [vmem:[%s158 + $0x220] sm:$0xff]
      %v1711 = vld [vmem:[%s158 + $0x228] sm:$0x1]
      %v1712 = vld [vmem:[%s158 + $0x230] sm:$0xff]
      %v1713 = vld [vmem:[%s158 + $0x238] sm:$0x1]
      %v1730 = vrot.slane %v1642, 1
      %v1731 = vrot.slane %v1643, 1
      %v1732 = vsel %vm200, %v1730, %v1731
      %v1733 = vrot.slane %v1644, 1
      %v1734 = vrot.slane %v1645, 1
      %v1735 = vsel %vm200, %v1733, %v1734
      %v1736 = vrot.slane %v1646, 1
      %v1737 = vrot.slane %v1647, 1
      %v1738 = vsel %vm200, %v1736, %v1737
      %v1739 = vrot.slane %v1648, 1
      %v1740 = vrot.slane %v1649, 1
      %v1741 = vsel %vm200, %v1739, %v1740
      %v1742 = vrot.slane %v1650, 1
      %v1743 = vrot.slane %v1651, 1
      %v1744 = vsel %vm200, %v1742, %v1743
      %v1745 = vrot.slane %v1652, 1
      %v1746 = vrot.slane %v1653, 1
      %v1747 = vsel %vm200, %v1745, %v1746
      %v1748 = vrot.slane %v1654, 1
      %v1749 = vrot.slane %v1655, 1
      %v1750 = vsel %vm200, %v1748, %v1749
      %v1751 = vrot.slane %v1656, 1
      %v1752 = vrot.slane %v1657, 1
      %v1753 = vsel %vm200, %v1751, %v1752
      %v1770 = vrot.slane %v1660, 1
      %v1771 = vrot.slane %v1661, 1
      %v1772 = vsel %vm200, %v1770, %v1771
      %v1773 = vrot.slane %v1662, 1
      %v1774 = vrot.slane %v1663, 1
      %v1775 = vsel %vm200, %v1773, %v1774
      %v1776 = vrot.slane %v1664, 1
      %v1777 = vrot.slane %v1665, 1
      %v1778 = vsel %vm200, %v1776, %v1777
      %v1779 = vrot.slane %v1666, 1
      %v1780 = vrot.slane %v1667, 1
      %v1781 = vsel %vm200, %v1779, %v1780
      %v1782 = vrot.slane %v1668, 1
      %v1783 = vrot.slane %v1669, 1
      %v1784 = vsel %vm200, %v1782, %v1783
      %v1785 = vrot.slane %v1670, 1
      %v1786 = vrot.slane %v1671, 1
      %v1787 = vsel %vm200, %v1785, %v1786
      %v1788 = vrot.slane %v1672, 1
      %v1789 = vrot.slane %v1673, 1
      %v1790 = vsel %vm200, %v1788, %v1789
      %v1791 = vrot.slane %v1674, 1
      %v1792 = vrot.slane %v1675, 1
      %v1793 = vsel %vm200, %v1791, %v1792
      %v1810 = vrot.slane %v1678, 1
      %v1811 = vrot.slane %v1679, 1
      %v1812 = vsel %vm200, %v1810, %v1811
      %v1813 = vrot.slane %v1680, 1
      %v1814 = vrot.slane %v1681, 1
      %v1815 = vsel %vm200, %v1813, %v1814
      %v1816 = vrot.slane %v1682, 1
      %v1817 = vrot.slane %v1683, 1
      %v1818 = vsel %vm200, %v1816, %v1817
      %v1819 = vrot.slane %v1684, 1
      %v1820 = vrot.slane %v1685, 1
      %v1821 = vsel %vm200, %v1819, %v1820
      %v1822 = vrot.slane %v1686, 1
      %v1823 = vrot.slane %v1687, 1
      %v1824 = vsel %vm200, %v1822, %v1823
      %v1825 = vrot.slane %v1688, 1
      %v1826 = vrot.slane %v1689, 1
      %v1827 = vsel %vm200, %v1825, %v1826
      %v1828 = vrot.slane %v1690, 1
      %v1829 = vrot.slane %v1691, 1
      %v1830 = vsel %vm200, %v1828, %v1829
      %v1831 = vrot.slane %v1692, 1
      %v1832 = vrot.slane %v1693, 1
      %v1833 = vsel %vm200, %v1831, %v1832
      %v1850 = vrot.slane %v1696, 1
      %v1851 = vrot.slane %v1697, 1
      %v1852 = vsel %vm200, %v1850, %v1851
      %v1853 = vrot.slane %v1698, 1
      %v1854 = vrot.slane %v1699, 1
      %v1855 = vsel %vm200, %v1853, %v1854
      %v1856 = vrot.slane %v1700, 1
      %v1857 = vrot.slane %v1701, 1
      %v1858 = vsel %vm200, %v1856, %v1857
      %v1859 = vrot.slane %v1702, 1
      %v1860 = vrot.slane %v1703, 1
      %v1861 = vsel %vm200, %v1859, %v1860
      %v1862 = vrot.slane %v1704, 1
      %v1863 = vrot.slane %v1705, 1
      %v1864 = vsel %vm200, %v1862, %v1863
      %v1865 = vrot.slane %v1706, 1
      %v1866 = vrot.slane %v1707, 1
      %v1867 = vsel %vm200, %v1865, %v1866
      %v1868 = vrot.slane %v1708, 1
      %v1869 = vrot.slane %v1709, 1
      %v1870 = vsel %vm200, %v1868, %v1869
      %v1871 = vrot.slane %v1710, 1
      %v1872 = vrot.slane %v1711, 1
      %v1873 = vsel %vm200, %v1871, %v1872
      %v1876 = vrot.slane %v1658, 1
      %v1877 = vrot.slane %v1659, 1
      %v1878 = vsel %vm200, %v1876, %v1877
      %v1881 = vrot.slane %v1676, 1
      %v1882 = vrot.slane %v1677, 1
      %v1883 = vsel %vm200, %v1881, %v1882
      %v1886 = vrot.slane %v1694, 1
      %v1887 = vrot.slane %v1695, 1
      %v1888 = vsel %vm200, %v1886, %v1887
      %v1891 = vrot.slane %v1712, 1
      %v1892 = vrot.slane %v1713, 1
      %v1893 = vsel %vm200, %v1891, %v1892
      %1894 = vrot.lane.b32.xlu0 %v1660, 4
      %v1895 = vpop.permute.xlu0 %1894
      %1896 = vrot.lane.b32.xlu0 %v1662, 4
      %v1897 = vpop.permute.xlu0 %1896
      %1898 = vrot.lane.b32.xlu0 %v1664, 4
      %v1899 = vpop.permute.xlu0 %1898
      %1900 = vrot.lane.b32.xlu0 %v1666, 4
      %v1901 = vpop.permute.xlu0 %1900
      %1902 = vrot.lane.b32.xlu0 %v1668, 4
      %v1903 = vpop.permute.xlu0 %1902
      %1904 = vrot.lane.b32.xlu0 %v1670, 4
      %v1905 = vpop.permute.xlu0 %1904
      %1906 = vrot.lane.b32.xlu0 %v1672, 4
      %v1907 = vpop.permute.xlu0 %1906
      %1908 = vrot.lane.b32.xlu0 %v1674, 4
      %v1909 = vpop.permute.xlu0 %1908
      %1918 = vrot.lane.b32.xlu0 %v1732, 8
      %v1919 = vpop.permute.xlu0 %1918
      %1920 = vrot.lane.b32.xlu0 %v1735, 8
      %v1921 = vpop.permute.xlu0 %1920
      %1922 = vrot.lane.b32.xlu0 %v1738, 8
      %v1923 = vpop.permute.xlu0 %1922
      %1924 = vrot.lane.b32.xlu0 %v1741, 8
      %v1925 = vpop.permute.xlu0 %1924
      %1926 = vrot.lane.b32.xlu0 %v1744, 8
      %v1927 = vpop.permute.xlu0 %1926
      %1928 = vrot.lane.b32.xlu0 %v1747, 8
      %v1929 = vpop.permute.xlu0 %1928
      %1930 = vrot.lane.b32.xlu0 %v1750, 8
      %v1931 = vpop.permute.xlu0 %1930
      %1932 = vrot.lane.b32.xlu0 %v1753, 8
      %v1933 = vpop.permute.xlu0 %1932
      %1942 = vrot.lane.b32.xlu0 %v1772, 12
      %v1943 = vpop.permute.xlu0 %1942
      %1944 = vrot.lane.b32.xlu0 %v1775, 12
      %v1945 = vpop.permute.xlu0 %1944
      %1946 = vrot.lane.b32.xlu0 %v1778, 12
      %v1947 = vpop.permute.xlu0 %1946
      %1948 = vrot.lane.b32.xlu0 %v1781, 12
      %v1949 = vpop.permute.xlu0 %1948
      %1950 = vrot.lane.b32.xlu0 %v1784, 12
      %v1951 = vpop.permute.xlu0 %1950
      %1952 = vrot.lane.b32.xlu0 %v1787, 12
      %v1953 = vpop.permute.xlu0 %1952
      %1954 = vrot.lane.b32.xlu0 %v1790, 12
      %v1955 = vpop.permute.xlu0 %1954
      %1956 = vrot.lane.b32.xlu0 %v1793, 12
      %v1957 = vpop.permute.xlu0 %1956
      %1966 = vrot.lane.b32.xlu0 %v1678, 16
      %v1967 = vpop.permute.xlu0 %1966
      %1968 = vrot.lane.b32.xlu0 %v1680, 16
      %v1969 = vpop.permute.xlu0 %1968
      %1970 = vrot.lane.b32.xlu0 %v1682, 16
      %v1971 = vpop.permute.xlu0 %1970
      %1972 = vrot.lane.b32.xlu0 %v1684, 16
      %v1973 = vpop.permute.xlu0 %1972
      %1974 = vrot.lane.b32.xlu0 %v1686, 16
      %v1975 = vpop.permute.xlu0 %1974
      %1976 = vrot.lane.b32.xlu0 %v1688, 16
      %v1977 = vpop.permute.xlu0 %1976
      %1978 = vrot.lane.b32.xlu0 %v1690, 16
      %v1979 = vpop.permute.xlu0 %1978
      %1980 = vrot.lane.b32.xlu0 %v1692, 16
      %v1981 = vpop.permute.xlu0 %1980
      %1990 = vrot.lane.b32.xlu0 %v1696, 20
      %v1991 = vpop.permute.xlu0 %1990
      %1992 = vrot.lane.b32.xlu0 %v1698, 20
      %v1993 = vpop.permute.xlu0 %1992
      %1994 = vrot.lane.b32.xlu0 %v1700, 20
      %v1995 = vpop.permute.xlu0 %1994
      %1996 = vrot.lane.b32.xlu0 %v1702, 20
      %v1997 = vpop.permute.xlu0 %1996
      %1998 = vrot.lane.b32.xlu0 %v1704, 20
      %v1999 = vpop.permute.xlu0 %1998
      %2000 = vrot.lane.b32.xlu0 %v1706, 20
      %v2001 = vpop.permute.xlu0 %2000
      %2002 = vrot.lane.b32.xlu0 %v1708, 20
      %v2003 = vpop.permute.xlu0 %2002
      %2004 = vrot.lane.b32.xlu0 %v1710, 20
      %v2005 = vpop.permute.xlu0 %2004
      %2014 = vrot.lane.b32.xlu0 %v1812, 24
      %v2015 = vpop.permute.xlu0 %2014
      %2016 = vrot.lane.b32.xlu0 %v1815, 24
      %v2017 = vpop.permute.xlu0 %2016
      %2018 = vrot.lane.b32.xlu0 %v1818, 24
      %v2019 = vpop.permute.xlu0 %2018
      %2020 = vrot.lane.b32.xlu0 %v1821, 24
      %v2021 = vpop.permute.xlu0 %2020
      %2022 = vrot.lane.b32.xlu0 %v1824, 24
      %v2023 = vpop.permute.xlu0 %2022
      %2024 = vrot.lane.b32.xlu0 %v1827, 24
      %v2025 = vpop.permute.xlu0 %2024
      %2026 = vrot.lane.b32.xlu0 %v1830, 24
      %v2027 = vpop.permute.xlu0 %2026
      %2028 = vrot.lane.b32.xlu0 %v1833, 24
      %v2029 = vpop.permute.xlu0 %2028
      %2038 = vrot.lane.b32.xlu0 %v1852, 28
      %v2039 = vpop.permute.xlu0 %2038
      %2040 = vrot.lane.b32.xlu0 %v1855, 28
      %v2041 = vpop.permute.xlu0 %2040
      %2042 = vrot.lane.b32.xlu0 %v1858, 28
      %v2043 = vpop.permute.xlu0 %2042
      %2044 = vrot.lane.b32.xlu0 %v1861, 28
      %v2045 = vpop.permute.xlu0 %2044
      %2046 = vrot.lane.b32.xlu0 %v1864, 28
      %v2047 = vpop.permute.xlu0 %2046
      %2048 = vrot.lane.b32.xlu0 %v1867, 28
      %v2049 = vpop.permute.xlu0 %2048
      %2050 = vrot.lane.b32.xlu0 %v1870, 28
      %v2051 = vpop.permute.xlu0 %2050
      %2052 = vrot.lane.b32.xlu0 %v1873, 28
      %v2053 = vpop.permute.xlu0 %2052
      %2062 = vrot.lane.b32.xlu0 %v1644, 32
      %v2063 = vpop.permute.xlu0 %2062
      %2064 = vrot.lane.b32.xlu0 %v1646, 32
      %v2065 = vpop.permute.xlu0 %2064
      %2066 = vrot.lane.b32.xlu0 %v1648, 32
      %v2067 = vpop.permute.xlu0 %2066
      %2068 = vrot.lane.b32.xlu0 %v1650, 32
      %v2069 = vpop.permute.xlu0 %2068
      %2070 = vrot.lane.b32.xlu0 %v1652, 32
      %v2071 = vpop.permute.xlu0 %2070
      %2072 = vrot.lane.b32.xlu0 %v1654, 32
      %v2073 = vpop.permute.xlu0 %2072
      %2074 = vrot.lane.b32.xlu0 %v1656, 32
      %v2075 = vpop.permute.xlu0 %2074
      %2076 = vrot.lane.b32.xlu0 %v1658, 32
      %v2077 = vpop.permute.xlu0 %2076
      %2086 = vrot.lane.b32.xlu0 %v1662, 36
      %v2087 = vpop.permute.xlu0 %2086
      %2088 = vrot.lane.b32.xlu0 %v1664, 36
      %v2089 = vpop.permute.xlu0 %2088
      %2090 = vrot.lane.b32.xlu0 %v1666, 36
      %v2091 = vpop.permute.xlu0 %2090
      %2092 = vrot.lane.b32.xlu0 %v1668, 36
      %v2093 = vpop.permute.xlu0 %2092
      %2094 = vrot.lane.b32.xlu0 %v1670, 36
      %v2095 = vpop.permute.xlu0 %2094
      %2096 = vrot.lane.b32.xlu0 %v1672, 36
      %v2097 = vpop.permute.xlu0 %2096
      %2098 = vrot.lane.b32.xlu0 %v1674, 36
      %v2099 = vpop.permute.xlu0 %2098
      %2100 = vrot.lane.b32.xlu0 %v1676, 36
      %v2101 = vpop.permute.xlu0 %2100
      %2110 = vrot.lane.b32.xlu0 %v1735, 40
      %v2111 = vpop.permute.xlu0 %2110
      %2112 = vrot.lane.b32.xlu0 %v1738, 40
      %v2113 = vpop.permute.xlu0 %2112
      %2114 = vrot.lane.b32.xlu0 %v1741, 40
      %v2115 = vpop.permute.xlu0 %2114
      %2116 = vrot.lane.b32.xlu0 %v1744, 40
      %v2117 = vpop.permute.xlu0 %2116
      %2118 = vrot.lane.b32.xlu0 %v1747, 40
      %v2119 = vpop.permute.xlu0 %2118
      %2120 = vrot.lane.b32.xlu0 %v1750, 40
      %v2121 = vpop.permute.xlu0 %2120
      %2122 = vrot.lane.b32.xlu0 %v1753, 40
      %v2123 = vpop.permute.xlu0 %2122
      %2124 = vrot.lane.b32.xlu0 %v1878, 40
      %v2125 = vpop.permute.xlu0 %2124
      %2134 = vrot.lane.b32.xlu0 %v1775, 44
      %v2135 = vpop.permute.xlu0 %2134
      %2136 = vrot.lane.b32.xlu0 %v1778, 44
      %v2137 = vpop.permute.xlu0 %2136
      %2138 = vrot.lane.b32.xlu0 %v1781, 44
      %v2139 = vpop.permute.xlu0 %2138
      %2140 = vrot.lane.b32.xlu0 %v1784, 44
      %v2141 = vpop.permute.xlu0 %2140
      %2142 = vrot.lane.b32.xlu0 %v1787, 44
      %v2143 = vpop.permute.xlu0 %2142
      %2144 = vrot.lane.b32.xlu0 %v1790, 44
      %v2145 = vpop.permute.xlu0 %2144
      %2146 = vrot.lane.b32.xlu0 %v1793, 44
      %v2147 = vpop.permute.xlu0 %2146
      %2148 = vrot.lane.b32.xlu0 %v1883, 44
      %v2149 = vpop.permute.xlu0 %2148
      %2158 = vrot.lane.b32.xlu0 %v1680, 48
      %v2159 = vpop.permute.xlu0 %2158
      %2160 = vrot.lane.b32.xlu0 %v1682, 48
      %v2161 = vpop.permute.xlu0 %2160
      %2162 = vrot.lane.b32.xlu0 %v1684, 48
      %v2163 = vpop.permute.xlu0 %2162
      %2164 = vrot.lane.b32.xlu0 %v1686, 48
      %v2165 = vpop.permute.xlu0 %2164
      %2166 = vrot.lane.b32.xlu0 %v1688, 48
      %v2167 = vpop.permute.xlu0 %2166
      %2168 = vrot.lane.b32.xlu0 %v1690, 48
      %v2169 = vpop.permute.xlu0 %2168
      %2170 = vrot.lane.b32.xlu0 %v1692, 48
      %v2171 = vpop.permute.xlu0 %2170
      %2172 = vrot.lane.b32.xlu0 %v1694, 48
      %v2173 = vpop.permute.xlu0 %2172
      %2182 = vrot.lane.b32.xlu0 %v1698, 52
      %v2183 = vpop.permute.xlu0 %2182
      %2184 = vrot.lane.b32.xlu0 %v1700, 52
      %v2185 = vpop.permute.xlu0 %2184
      %2186 = vrot.lane.b32.xlu0 %v1702, 52
      %v2187 = vpop.permute.xlu0 %2186
      %2188 = vrot.lane.b32.xlu0 %v1704, 52
      %v2189 = vpop.permute.xlu0 %2188
      %2190 = vrot.lane.b32.xlu0 %v1706, 52
      %v2191 = vpop.permute.xlu0 %2190
      %2192 = vrot.lane.b32.xlu0 %v1708, 52
      %v2193 = vpop.permute.xlu0 %2192
      %2194 = vrot.lane.b32.xlu0 %v1710, 52
      %v2195 = vpop.permute.xlu0 %2194
      %2196 = vrot.lane.b32.xlu0 %v1712, 52
      %v2197 = vpop.permute.xlu0 %2196
      %2206 = vrot.lane.b32.xlu0 %v1815, 56
      %v2207 = vpop.permute.xlu0 %2206
      %2208 = vrot.lane.b32.xlu0 %v1818, 56
      %v2209 = vpop.permute.xlu0 %2208
      %2210 = vrot.lane.b32.xlu0 %v1821, 56
      %v2211 = vpop.permute.xlu0 %2210
      %2212 = vrot.lane.b32.xlu0 %v1824, 56
      %v2213 = vpop.permute.xlu0 %2212
      %2214 = vrot.lane.b32.xlu0 %v1827, 56
      %v2215 = vpop.permute.xlu0 %2214
      %2216 = vrot.lane.b32.xlu0 %v1830, 56
      %v2217 = vpop.permute.xlu0 %2216
      %2218 = vrot.lane.b32.xlu0 %v1833, 56
      %v2219 = vpop.permute.xlu0 %2218
      %2220 = vrot.lane.b32.xlu0 %v1888, 56
      %v2221 = vpop.permute.xlu0 %2220
      %2230 = vrot.lane.b32.xlu0 %v1855, 60
      %v2231 = vpop.permute.xlu0 %2230
      %2232 = vrot.lane.b32.xlu0 %v1858, 60
      %v2233 = vpop.permute.xlu0 %2232
      %2234 = vrot.lane.b32.xlu0 %v1861, 60
      %v2235 = vpop.permute.xlu0 %2234
      %2236 = vrot.lane.b32.xlu0 %v1864, 60
      %v2237 = vpop.permute.xlu0 %2236
      %2238 = vrot.lane.b32.xlu0 %v1867, 60
      %v2239 = vpop.permute.xlu0 %2238
      %2240 = vrot.lane.b32.xlu0 %v1870, 60
      %v2241 = vpop.permute.xlu0 %2240
      %2242 = vrot.lane.b32.xlu0 %v1873, 60
      %v2243 = vpop.permute.xlu0 %2242
      %2244 = vrot.lane.b32.xlu0 %v1893, 60
      %v2245 = vpop.permute.xlu0 %2244
      %v2254 = vsel %vm458, %v1642, %v1895
      %v2255 = vsel %vm458, %v1644, %v1897
      %v2256 = vsel %vm458, %v1646, %v1899
      %v2257 = vsel %vm458, %v1648, %v1901
      %v2258 = vsel %vm458, %v1650, %v1903
      %v2259 = vsel %vm458, %v1652, %v1905
      %v2260 = vsel %vm458, %v1654, %v1907
      %v2261 = vsel %vm458, %v1656, %v1909
      %v2262 = vsel %vm467, %v2254, %v1919
      %v2263 = vsel %vm467, %v2255, %v1921
      %v2264 = vsel %vm467, %v2256, %v1923
      %v2265 = vsel %vm467, %v2257, %v1925
      %v2266 = vsel %vm467, %v2258, %v1927
      %v2267 = vsel %vm467, %v2259, %v1929
      %v2268 = vsel %vm467, %v2260, %v1931
      %v2269 = vsel %vm467, %v2261, %v1933
      %v2270 = vsel %vm476, %v2262, %v1943
      %v2271 = vsel %vm476, %v2263, %v1945
      %v2272 = vsel %vm476, %v2264, %v1947
      %v2273 = vsel %vm476, %v2265, %v1949
      %v2274 = vsel %vm476, %v2266, %v1951
      %v2275 = vsel %vm476, %v2267, %v1953
      %v2276 = vsel %vm476, %v2268, %v1955
      %v2277 = vsel %vm476, %v2269, %v1957
      %v2278 = vsel %vm485, %v2270, %v1967
      %v2279 = vsel %vm485, %v2271, %v1969
      %v2280 = vsel %vm485, %v2272, %v1971
      %v2281 = vsel %vm485, %v2273, %v1973
      %v2282 = vsel %vm485, %v2274, %v1975
      %v2283 = vsel %vm485, %v2275, %v1977
      %v2284 = vsel %vm485, %v2276, %v1979
      %v2285 = vsel %vm485, %v2277, %v1981
      %v2286 = vsel %vm494, %v2278, %v1991
      %v2287 = vsel %vm494, %v2279, %v1993
      %v2288 = vsel %vm494, %v2280, %v1995
      %v2289 = vsel %vm494, %v2281, %v1997
      %v2290 = vsel %vm494, %v2282, %v1999
      %v2291 = vsel %vm494, %v2283, %v2001
      %v2292 = vsel %vm494, %v2284, %v2003
      %v2293 = vsel %vm494, %v2285, %v2005
      %v2294 = vsel %vm503, %v2286, %v2015
      %v2295 = vsel %vm503, %v2287, %v2017
      %v2296 = vsel %vm503, %v2288, %v2019
      %v2297 = vsel %vm503, %v2289, %v2021
      %v2298 = vsel %vm503, %v2290, %v2023
      %v2299 = vsel %vm503, %v2291, %v2025
      %v2300 = vsel %vm503, %v2292, %v2027
      %v2301 = vsel %vm503, %v2293, %v2029
      %v2302 = vsel %vm512, %v2294, %v2039
      %v2303 = vsel %vm512, %v2295, %v2041
      %v2304 = vsel %vm512, %v2296, %v2043
      %v2305 = vsel %vm512, %v2297, %v2045
      %v2306 = vsel %vm512, %v2298, %v2047
      %v2307 = vsel %vm512, %v2299, %v2049
      %v2308 = vsel %vm512, %v2300, %v2051
      %v2309 = vsel %vm512, %v2301, %v2053
      %v2310 = vsel %vm521, %v2302, %v2063
      %v2311 = vsel %vm521, %v2303, %v2065
      %v2312 = vsel %vm521, %v2304, %v2067
      %v2313 = vsel %vm521, %v2305, %v2069
      %v2314 = vsel %vm521, %v2306, %v2071
      %v2315 = vsel %vm521, %v2307, %v2073
      %v2316 = vsel %vm521, %v2308, %v2075
      %v2317 = vsel %vm521, %v2309, %v2077
      %v2318 = vsel %vm538, %v2310, %v2087
      %v2319 = vsel %vm538, %v2311, %v2089
      %v2320 = vsel %vm538, %v2312, %v2091
      %v2321 = vsel %vm538, %v2313, %v2093
      %v2322 = vsel %vm538, %v2314, %v2095
      %v2323 = vsel %vm538, %v2315, %v2097
      %v2324 = vsel %vm538, %v2316, %v2099
      %v2325 = vsel %vm538, %v2317, %v2101
      %vm2326 = vcmask 326656
      %v2327 = vsel %vm2326, %v2318, %v2111
      %v2328 = vsel %vm2326, %v2319, %v2113
      %v2329 = vsel %vm2326, %v2320, %v2115
      %v2330 = vsel %vm2326, %v2321, %v2117
      %v2331 = vsel %vm2326, %v2322, %v2119
      %v2332 = vsel %vm2326, %v2323, %v2121
      %v2333 = vsel %vm2326, %v2324, %v2123
      %v2334 = vsel %vm2326, %v2325, %v2125
      %vm2335 = vcmask 359424
      %v2336 = vsel %vm2335, %v2327, %v2135
      %v2337 = vsel %vm2335, %v2328, %v2137
      %v2338 = vsel %vm2335, %v2329, %v2139
      %v2339 = vsel %vm2335, %v2330, %v2141
      %v2340 = vsel %vm2335, %v2331, %v2143
      %v2341 = vsel %vm2335, %v2332, %v2145
      %v2342 = vsel %vm2335, %v2333, %v2147
      %v2343 = vsel %vm2335, %v2334, %v2149
      %vm2344 = vcmask 392192
      %v2345 = vsel %vm2344, %v2336, %v2159
      %v2346 = vsel %vm2344, %v2337, %v2161
      %v2347 = vsel %vm2344, %v2338, %v2163
      %v2348 = vsel %vm2344, %v2339, %v2165
      %v2349 = vsel %vm2344, %v2340, %v2167
      %v2350 = vsel %vm2344, %v2341, %v2169
      %v2351 = vsel %vm2344, %v2342, %v2171
      %v2352 = vsel %vm2344, %v2343, %v2173
      %vm2353 = vcmask 424960
      %v2354 = vsel %vm2353, %v2345, %v2183
      %v2355 = vsel %vm2353, %v2346, %v2185
      %v2356 = vsel %vm2353, %v2347, %v2187
      %v2357 = vsel %vm2353, %v2348, %v2189
      %v2358 = vsel %vm2353, %v2349, %v2191
      %v2359 = vsel %vm2353, %v2350, %v2193
      %v2360 = vsel %vm2353, %v2351, %v2195
      %v2361 = vsel %vm2353, %v2352, %v2197
      %vm2362 = vcmask 457728
      %v2363 = vsel %vm2362, %v2354, %v2207
      %v2364 = vsel %vm2362, %v2355, %v2209
      %v2365 = vsel %vm2362, %v2356, %v2211
      %v2366 = vsel %vm2362, %v2357, %v2213
      %v2367 = vsel %vm2362, %v2358, %v2215
      %v2368 = vsel %vm2362, %v2359, %v2217
      %v2369 = vsel %vm2362, %v2360, %v2219
      %v2370 = vsel %vm2362, %v2361, %v2221
      %vm2371 = vcmask 490496
      %v2372 = vsel %vm2371, %v2363, %v2231
      %v2373 = vsel %vm2371, %v2364, %v2233
      %v2374 = vsel %vm2371, %v2365, %v2235
      %v2375 = vsel %vm2371, %v2366, %v2237
      %v2376 = vsel %vm2371, %v2367, %v2239
      %v2377 = vsel %vm2371, %v2368, %v2241
      %v2378 = vsel %vm2371, %v2369, %v2243
      %v2379 = vsel %vm2371, %v2370, %v2245
      %v2381 = vsel %vm1545, %v1634, 0
      %v2384 = vsel %vm1545, %v1635, 0
      %v2387 = vsel %vm1545, %v1636, 0
      %v2390 = vsel %vm1545, %v1637, 0
      %v2393 = vsel %vm1545, %v1638, 0
      %v2396 = vsel %vm1545, %v1639, 0
      %v2399 = vsel %vm1545, %v1640, 0
      %v2402 = vsel %vm1545, %v1641, 0
      %2404 = vmatprep.subr.mxu0 0.0
      %2405 = vmatpush1.msra.mxu0 0.0
      %2406 = vmatprep.subr.mxu0 0.0
      %2407 = vmatpush1.msra.mxu0 0.0
      %2408 = vmatprep.subr.mxu0 0.0
      %2409 = vmatpush1.msra.mxu0 0.0
      %2410 = vmatprep.subr.mxu0 0.0
      %2411 = vmatpush1.msra.mxu0 0.0
      %2412 = vmatprep.subr.mxu0 0.0
      %2413 = vmatpush1.msra.mxu0 0.0
      %2414 = vmatprep.subr.mxu0 0.0
      %2415 = vmatpush1.msra.mxu0 0.0
      %2416 = vmatprep.subr.mxu0 0.0
      %2417 = vmatpush1.msra.mxu0 0.0
      %2418 = vmatprep.subr.mxu0 0.0
      %2419 = vmatpush1.msra.mxu0 0.0
      %2420 = vmatprep.subr.mxu0 0.0
      %v2421 = vand.u32 %v2379, 4294901760
      %2422 = vmatpush1.msra.mxu0 %v2421
      %2423 = vmatprep.subr.mxu0 0.0
      %v2424 = vand.u32 %v2378, 4294901760
      %2425 = vmatpush1.msra.mxu0 %v2424
      %2426 = vmatprep.subr.mxu0 0.0
      %v2427 = vand.u32 %v2377, 4294901760
      %2428 = vmatpush1.msra.mxu0 %v2427
      %2429 = vmatprep.subr.mxu0 0.0
      %v2430 = vand.u32 %v2376, 4294901760
      %2431 = vmatpush1.msra.mxu0 %v2430
      %2432 = vmatprep.subr.mxu0 0.0
      %v2433 = vand.u32 %v2375, 4294901760
      %2434 = vmatpush1.msra.mxu0 %v2433
      %2435 = vmatprep.subr.mxu0 0.0
      %v2436 = vand.u32 %v2374, 4294901760
      %2437 = vmatpush1.msra.mxu0 %v2436
      %2438 = vmatprep.subr.mxu0 0.0
      %v2439 = vand.u32 %v2373, 4294901760
      %2440 = vmatpush1.msra.mxu0 %v2439
      %2441 = vmatprep.subr.mxu0 0.0
      %v2442 = vand.u32 %v2372, 4294901760
      %2443 = vmatpush1.msra.mxu0 %v2442
      %2444 = vmatprep.subr.mxu0 0.0
      %2445 = vmatpush2.msra.mxu0 0.0
      %2446 = vmatprep.subr.mxu0 0.0
      %2447 = vmatpush2.msra.mxu0 0.0
      %2448 = vmatprep.subr.mxu0 0.0
      %2449 = vmatpush2.msra.mxu0 0.0
      %2450 = vmatprep.subr.mxu0 0.0
      %2451 = vmatpush2.msra.mxu0 0.0
      %2452 = vmatprep.subr.mxu0 0.0
      %2453 = vmatpush2.msra.mxu0 0.0
      %2454 = vmatprep.subr.mxu0 0.0
      %2455 = vmatpush2.msra.mxu0 0.0
      %2456 = vmatprep.subr.mxu0 0.0
      %2457 = vmatpush2.msra.mxu0 0.0
      %2458 = vmatprep.subr.mxu0 0.0
      %2459 = vmatpush2.msra.mxu0 0.0
      %2460 = vmatprep.subr.mxu0 0.0
      %2461 = vmatpush2.msra.mxu0 0.0
      %2462 = vmatprep.subr.mxu0 0.0
      %2463 = vmatpush2.msra.mxu0 0.0
      %2464 = vmatprep.subr.mxu0 0.0
      %2465 = vmatpush2.msra.mxu0 0.0
      %2466 = vmatprep.subr.mxu0 0.0
      %2467 = vmatpush2.msra.mxu0 0.0
      %2468 = vmatprep.subr.mxu0 0.0
      %2469 = vmatpush2.msra.mxu0 0.0
      %2470 = vmatprep.subr.mxu0 0.0
      %2471 = vmatpush2.msra.mxu0 0.0
      %2472 = vmatprep.subr.mxu0 0.0
      %2473 = vmatpush2.msra.mxu0 0.0
      %2474 = vmatprep.subr.mxu0 0.0
      %2475 = vmatpush2.msra.mxu0 0.0
      %2476 = vmatprep.mubr.f32.mxu0 0.0
      %v2477 = vand.u32 %v2381, 4294901760
      %v2478 = vsub.f32 %v2381, %v2477
      %v2479 = vand.u32 %v2478, 4294901760
      %v2480 = vsub.f32 %v2478, %v2479
      %v2481 = vand.u32 %v2480, 4294901760
      %2482 = vmatmul.mubr.f32.gmra.mxu0 %v2481
      %v2483 = vpop.f32.mrf.mxu0
      %v2484 = vadd.f32 0.0, %v2483
      %v2485 = vpop.f32.mrf.mxu0
      %2486 = vmatprep.mubr.f32.mxu0 0.0
      %v2487 = vand.u32 %v2384, 4294901760
      %v2488 = vsub.f32 %v2384, %v2487
      %v2489 = vand.u32 %v2488, 4294901760
      %v2490 = vsub.f32 %v2488, %v2489
      %v2491 = vand.u32 %v2490, 4294901760
      %2492 = vmatmul.mubr.f32.gmra.mxu0 %v2491
      %v2493 = vpop.f32.mrf.mxu0
      %v2494 = vadd.f32 0.0, %v2493
      %v2495 = vpop.f32.mrf.mxu0
      %2496 = vmatprep.mubr.f32.mxu0 0.0
      %v2497 = vand.u32 %v2387, 4294901760
      %v2498 = vsub.f32 %v2387, %v2497
      %v2499 = vand.u32 %v2498, 4294901760
      %v2500 = vsub.f32 %v2498, %v2499
      %v2501 = vand.u32 %v2500, 4294901760
      %2502 = vmatmul.mubr.f32.gmra.mxu0 %v2501
      %v2503 = vpop.f32.mrf.mxu0
      %v2504 = vadd.f32 0.0, %v2503
      %v2505 = vpop.f32.mrf.mxu0
      %2506 = vmatprep.mubr.f32.mxu0 0.0
      %v2507 = vand.u32 %v2390, 4294901760
      %v2508 = vsub.f32 %v2390, %v2507
      %v2509 = vand.u32 %v2508, 4294901760
      %v2510 = vsub.f32 %v2508, %v2509
      %v2511 = vand.u32 %v2510, 4294901760
      %2512 = vmatmul.mubr.f32.gmra.mxu0 %v2511
      %v2513 = vpop.f32.mrf.mxu0
      %v2514 = vadd.f32 0.0, %v2513
      %v2515 = vpop.f32.mrf.mxu0
      %2516 = vmatprep.mubr.f32.mxu0 0.0
      %v2517 = vand.u32 %v2393, 4294901760
      %v2518 = vsub.f32 %v2393, %v2517
      %v2519 = vand.u32 %v2518, 4294901760
      %v2520 = vsub.f32 %v2518, %v2519
      %v2521 = vand.u32 %v2520, 4294901760
      %2522 = vmatmul.mubr.f32.gmra.mxu0 %v2521
      %v2523 = vpop.f32.mrf.mxu0
      %v2524 = vadd.f32 0.0, %v2523
      %v2525 = vpop.f32.mrf.mxu0
      %2526 = vmatprep.mubr.f32.mxu0 0.0
      %v2527 = vand.u32 %v2396, 4294901760
      %v2528 = vsub.f32 %v2396, %v2527
      %v2529 = vand.u32 %v2528, 4294901760
      %v2530 = vsub.f32 %v2528, %v2529
      %v2531 = vand.u32 %v2530, 4294901760
      %2532 = vmatmul.mubr.f32.gmra.mxu0 %v2531
      %v2533 = vpop.f32.mrf.mxu0
      %v2534 = vadd.f32 0.0, %v2533
      %v2535 = vpop.f32.mrf.mxu0
      %2536 = vmatprep.mubr.f32.mxu0 0.0
      %v2537 = vand.u32 %v2399, 4294901760
      %v2538 = vsub.f32 %v2399, %v2537
      %v2539 = vand.u32 %v2538, 4294901760
      %v2540 = vsub.f32 %v2538, %v2539
      %v2541 = vand.u32 %v2540, 4294901760
      %2542 = vmatmul.mubr.f32.gmra.mxu0 %v2541
      %v2543 = vpop.f32.mrf.mxu0
      %v2544 = vadd.f32 0.0, %v2543
      %v2545 = vpop.f32.mrf.mxu0
      %2546 = vmatprep.mubr.f32.mxu0 0.0
      %v2547 = vand.u32 %v2402, 4294901760
      %v2548 = vsub.f32 %v2402, %v2547
      %v2549 = vand.u32 %v2548, 4294901760
      %v2550 = vsub.f32 %v2548, %v2549
      %v2551 = vand.u32 %v2550, 4294901760
      %2552 = vmatmul.mubr.f32.gmra.mxu0 %v2551
      %v2553 = vpop.f32.mrf.mxu0
      %v2554 = vadd.f32 0.0, %v2553
      %v2555 = vpop.f32.mrf.mxu0
      %2556 = vdwg.mxu0
      %2557 = vmatprep.subr.mxu0 0.0
      %2558 = vmatpush1.msra.mxu0 0.0
      %2559 = vmatprep.subr.mxu0 0.0
      %2560 = vmatpush1.msra.mxu0 0.0
      %2561 = vmatprep.subr.mxu0 0.0
      %2562 = vmatpush1.msra.mxu0 0.0
      %2563 = vmatprep.subr.mxu0 0.0
      %2564 = vmatpush1.msra.mxu0 0.0
      %2565 = vmatprep.subr.mxu0 0.0
      %2566 = vmatpush1.msra.mxu0 0.0
      %2567 = vmatprep.subr.mxu0 0.0
      %2568 = vmatpush1.msra.mxu0 0.0
      %2569 = vmatprep.subr.mxu0 0.0
      %2570 = vmatpush1.msra.mxu0 0.0
      %2571 = vmatprep.subr.mxu0 0.0
      %2572 = vmatpush1.msra.mxu0 0.0
      %2573 = vmatprep.subr.mxu0 0.0
      %v2574 = vand.u32 %v2379, 4294901760
      %v2575 = vsub.f32 %v2379, %v2574
      %v2576 = vand.u32 %v2575, 4294901760
      %v2577 = vsub.f32 %v2575, %v2576
      %v2578 = vand.u32 %v2577, 4294901760
      %2579 = vmatpush1.msra.mxu0 %v2578
      %2580 = vmatprep.subr.mxu0 0.0
      %v2581 = vand.u32 %v2378, 4294901760
      %v2582 = vsub.f32 %v2378, %v2581
      %v2583 = vand.u32 %v2582, 4294901760
      %v2584 = vsub.f32 %v2582, %v2583
      %v2585 = vand.u32 %v2584, 4294901760
      %2586 = vmatpush1.msra.mxu0 %v2585
      %2587 = vmatprep.subr.mxu0 0.0
      %v2588 = vand.u32 %v2377, 4294901760
      %v2589 = vsub.f32 %v2377, %v2588
      %v2590 = vand.u32 %v2589, 4294901760
      %v2591 = vsub.f32 %v2589, %v2590
      %v2592 = vand.u32 %v2591, 4294901760
      %2593 = vmatpush1.msra.mxu0 %v2592
      %2594 = vmatprep.subr.mxu0 0.0
      %v2595 = vand.u32 %v2376, 4294901760
      %v2596 = vsub.f32 %v2376, %v2595
      %v2597 = vand.u32 %v2596, 4294901760
      %v2598 = vsub.f32 %v2596, %v2597
      %v2599 = vand.u32 %v2598, 4294901760
      %2600 = vmatpush1.msra.mxu0 %v2599
      %2601 = vmatprep.subr.mxu0 0.0
      %v2602 = vand.u32 %v2375, 4294901760
      %v2603 = vsub.f32 %v2375, %v2602
      %v2604 = vand.u32 %v2603, 4294901760
      %v2605 = vsub.f32 %v2603, %v2604
      %v2606 = vand.u32 %v2605, 4294901760
      %2607 = vmatpush1.msra.mxu0 %v2606
      %2608 = vmatprep.subr.mxu0 0.0
      %v2609 = vand.u32 %v2374, 4294901760
      %v2610 = vsub.f32 %v2374, %v2609
      %v2611 = vand.u32 %v2610, 4294901760
      %v2612 = vsub.f32 %v2610, %v2611
      %v2613 = vand.u32 %v2612, 4294901760
      %2614 = vmatpush1.msra.mxu0 %v2613
      %2615 = vmatprep.subr.mxu0 0.0
      %v2616 = vand.u32 %v2373, 4294901760
      %v2617 = vsub.f32 %v2373, %v2616
      %v2618 = vand.u32 %v2617, 4294901760
      %v2619 = vsub.f32 %v2617, %v2618
      %v2620 = vand.u32 %v2619, 4294901760
      %2621 = vmatpush1.msra.mxu0 %v2620
      %2622 = vmatprep.subr.mxu0 0.0
      %v2623 = vand.u32 %v2372, 4294901760
      %v2624 = vsub.f32 %v2372, %v2623
      %v2625 = vand.u32 %v2624, 4294901760
      %v2626 = vsub.f32 %v2624, %v2625
      %v2627 = vand.u32 %v2626, 4294901760
      %2628 = vmatpush1.msra.mxu0 %v2627
      %2629 = vmatprep.subr.mxu0 0.0
      %2630 = vmatpush2.msra.mxu0 0.0
      %2631 = vmatprep.subr.mxu0 0.0
      %2632 = vmatpush2.msra.mxu0 0.0
      %2633 = vmatprep.subr.mxu0 0.0
      %2634 = vmatpush2.msra.mxu0 0.0
      %2635 = vmatprep.subr.mxu0 0.0
      %2636 = vmatpush2.msra.mxu0 0.0
      %2637 = vmatprep.subr.mxu0 0.0
      %2638 = vmatpush2.msra.mxu0 0.0
      %2639 = vmatprep.subr.mxu0 0.0
      %2640 = vmatpush2.msra.mxu0 0.0
      %2641 = vmatprep.subr.mxu0 0.0
      %2642 = vmatpush2.msra.mxu0 0.0
      %2643 = vmatprep.subr.mxu0 0.0
      %2644 = vmatpush2.msra.mxu0 0.0
      %2645 = vmatprep.subr.mxu0 0.0
      %2646 = vmatpush2.msra.mxu0 0.0
      %2647 = vmatprep.subr.mxu0 0.0
      %2648 = vmatpush2.msra.mxu0 0.0
      %2649 = vmatprep.subr.mxu0 0.0
      %2650 = vmatpush2.msra.mxu0 0.0
      %2651 = vmatprep.subr.mxu0 0.0
      %2652 = vmatpush2.msra.mxu0 0.0
      %2653 = vmatprep.subr.mxu0 0.0
      %2654 = vmatpush2.msra.mxu0 0.0
      %2655 = vmatprep.subr.mxu0 0.0
      %2656 = vmatpush2.msra.mxu0 0.0
      %2657 = vmatprep.subr.mxu0 0.0
      %2658 = vmatpush2.msra.mxu0 0.0
      %2659 = vmatprep.subr.mxu0 0.0
      %2660 = vmatpush2.msra.mxu0 0.0
      %2661 = vmatprep.mubr.f32.mxu0 0.0
      %v2662 = vand.u32 %v2381, 4294901760
      %2663 = vmatmul.mubr.f32.gmra.mxu0 %v2662
      %v2664 = vpop.f32.mrf.mxu0
      %v2665 = vadd.f32 %v2484, %v2664
      %v2666 = vpop.f32.mrf.mxu0
      %2667 = vmatprep.mubr.f32.mxu0 0.0
      %v2668 = vand.u32 %v2384, 4294901760
      %2669 = vmatmul.mubr.f32.gmra.mxu0 %v2668
      %v2670 = vpop.f32.mrf.mxu0
      %v2671 = vadd.f32 %v2494, %v2670
      %v2672 = vpop.f32.mrf.mxu0
      %2673 = vmatprep.mubr.f32.mxu0 0.0
      %v2674 = vand.u32 %v2387, 4294901760
      %2675 = vmatmul.mubr.f32.gmra.mxu0 %v2674
      %v2676 = vpop.f32.mrf.mxu0
      %v2677 = vadd.f32 %v2504, %v2676
      %v2678 = vpop.f32.mrf.mxu0
      %2679 = vmatprep.mubr.f32.mxu0 0.0
      %v2680 = vand.u32 %v2390, 4294901760
      %2681 = vmatmul.mubr.f32.gmra.mxu0 %v2680
      %v2682 = vpop.f32.mrf.mxu0
      %v2683 = vadd.f32 %v2514, %v2682
      %v2684 = vpop.f32.mrf.mxu0
      %2685 = vmatprep.mubr.f32.mxu0 0.0
      %v2686 = vand.u32 %v2393, 4294901760
      %2687 = vmatmul.mubr.f32.gmra.mxu0 %v2686
      %v2688 = vpop.f32.mrf.mxu0
      %v2689 = vadd.f32 %v2524, %v2688
      %v2690 = vpop.f32.mrf.mxu0
      %2691 = vmatprep.mubr.f32.mxu0 0.0
      %v2692 = vand.u32 %v2396, 4294901760
      %2693 = vmatmul.mubr.f32.gmra.mxu0 %v2692
      %v2694 = vpop.f32.mrf.mxu0
      %v2695 = vadd.f32 %v2534, %v2694
      %v2696 = vpop.f32.mrf.mxu0
      %2697 = vmatprep.mubr.f32.mxu0 0.0
      %v2698 = vand.u32 %v2399, 4294901760
      %2699 = vmatmul.mubr.f32.gmra.mxu0 %v2698
      %v2700 = vpop.f32.mrf.mxu0
      %v2701 = vadd.f32 %v2544, %v2700
      %v2702 = vpop.f32.mrf.mxu0
      %2703 = vmatprep.mubr.f32.mxu0 0.0
      %v2704 = vand.u32 %v2402, 4294901760
      %2705 = vmatmul.mubr.f32.gmra.mxu0 %v2704
      %v2706 = vpop.f32.mrf.mxu0
      %v2707 = vadd.f32 %v2554, %v2706
      %v2708 = vpop.f32.mrf.mxu0
      %2709 = vdwg.mxu0
      %2710 = vmatprep.subr.mxu0 0.0
      %2711 = vmatpush1.msra.mxu0 0.0
      %2712 = vmatprep.subr.mxu0 0.0
      %2713 = vmatpush1.msra.mxu0 0.0
      %2714 = vmatprep.subr.mxu0 0.0
      %2715 = vmatpush1.msra.mxu0 0.0
      %2716 = vmatprep.subr.mxu0 0.0
      %2717 = vmatpush1.msra.mxu0 0.0
      %2718 = vmatprep.subr.mxu0 0.0
      %2719 = vmatpush1.msra.mxu0 0.0
      %2720 = vmatprep.subr.mxu0 0.0
      %2721 = vmatpush1.msra.mxu0 0.0
      %2722 = vmatprep.subr.mxu0 0.0
      %2723 = vmatpush1.msra.mxu0 0.0
      %2724 = vmatprep.subr.mxu0 0.0
      %2725 = vmatpush1.msra.mxu0 0.0
      %2726 = vmatprep.subr.mxu0 0.0
      %v2727 = vand.u32 %v2379, 4294901760
      %v2728 = vsub.f32 %v2379, %v2727
      %2729 = vmatpush1.msra.mxu0 %v2728
      %2730 = vmatprep.subr.mxu0 0.0
      %v2731 = vand.u32 %v2378, 4294901760
      %v2732 = vsub.f32 %v2378, %v2731
      %2733 = vmatpush1.msra.mxu0 %v2732
      %2734 = vmatprep.subr.mxu0 0.0
      %v2735 = vand.u32 %v2377, 4294901760
      %v2736 = vsub.f32 %v2377, %v2735
      %2737 = vmatpush1.msra.mxu0 %v2736
      %2738 = vmatprep.subr.mxu0 0.0
      %v2739 = vand.u32 %v2376, 4294901760
      %v2740 = vsub.f32 %v2376, %v2739
      %2741 = vmatpush1.msra.mxu0 %v2740
      %2742 = vmatprep.subr.mxu0 0.0
      %v2743 = vand.u32 %v2375, 4294901760
      %v2744 = vsub.f32 %v2375, %v2743
      %2745 = vmatpush1.msra.mxu0 %v2744
      %2746 = vmatprep.subr.mxu0 0.0
      %v2747 = vand.u32 %v2374, 4294901760
      %v2748 = vsub.f32 %v2374, %v2747
      %2749 = vmatpush1.msra.mxu0 %v2748
      %2750 = vmatprep.subr.mxu0 0.0
      %v2751 = vand.u32 %v2373, 4294901760
      %v2752 = vsub.f32 %v2373, %v2751
      %2753 = vmatpush1.msra.mxu0 %v2752
      %2754 = vmatprep.subr.mxu0 0.0
      %v2755 = vand.u32 %v2372, 4294901760
      %v2756 = vsub.f32 %v2372, %v2755
      %2757 = vmatpush1.msra.mxu0 %v2756
      %2758 = vmatprep.subr.mxu0 0.0
      %2759 = vmatpush2.msra.mxu0 0.0
      %2760 = vmatprep.subr.mxu0 0.0
      %2761 = vmatpush2.msra.mxu0 0.0
      %2762 = vmatprep.subr.mxu0 0.0
      %2763 = vmatpush2.msra.mxu0 0.0
      %2764 = vmatprep.subr.mxu0 0.0
      %2765 = vmatpush2.msra.mxu0 0.0
      %2766 = vmatprep.subr.mxu0 0.0
      %2767 = vmatpush2.msra.mxu0 0.0
      %2768 = vmatprep.subr.mxu0 0.0
      %2769 = vmatpush2.msra.mxu0 0.0
      %2770 = vmatprep.subr.mxu0 0.0
      %2771 = vmatpush2.msra.mxu0 0.0
      %2772 = vmatprep.subr.mxu0 0.0
      %2773 = vmatpush2.msra.mxu0 0.0
      %2774 = vmatprep.subr.mxu0 0.0
      %2775 = vmatpush2.msra.mxu0 0.0
      %2776 = vmatprep.subr.mxu0 0.0
      %2777 = vmatpush2.msra.mxu0 0.0
      %2778 = vmatprep.subr.mxu0 0.0
      %2779 = vmatpush2.msra.mxu0 0.0
      %2780 = vmatprep.subr.mxu0 0.0
      %2781 = vmatpush2.msra.mxu0 0.0
      %2782 = vmatprep.subr.mxu0 0.0
      %2783 = vmatpush2.msra.mxu0 0.0
      %2784 = vmatprep.subr.mxu0 0.0
      %2785 = vmatpush2.msra.mxu0 0.0
      %2786 = vmatprep.subr.mxu0 0.0
      %2787 = vmatpush2.msra.mxu0 0.0
      %2788 = vmatprep.subr.mxu0 0.0
      %2789 = vmatpush2.msra.mxu0 0.0
      %2790 = vmatprep.mubr.f32.mxu0 0.0
      %v2791 = vand.u32 %v2381, 4294901760
      %v2792 = vsub.f32 %v2381, %v2791
      %2793 = vmatmul.mubr.f32.gmra.mxu0 %v2792
      %v2794 = vpop.f32.mrf.mxu0
      %v2795 = vadd.f32 %v2665, %v2794
      %v2796 = vpop.f32.mrf.mxu0
      %2797 = vmatprep.mubr.f32.mxu0 0.0
      %v2798 = vand.u32 %v2384, 4294901760
      %v2799 = vsub.f32 %v2384, %v2798
      %2800 = vmatmul.mubr.f32.gmra.mxu0 %v2799
      %v2801 = vpop.f32.mrf.mxu0
      %v2802 = vadd.f32 %v2671, %v2801
      %v2803 = vpop.f32.mrf.mxu0
      %2804 = vmatprep.mubr.f32.mxu0 0.0
      %v2805 = vand.u32 %v2387, 4294901760
      %v2806 = vsub.f32 %v2387, %v2805
      %2807 = vmatmul.mubr.f32.gmra.mxu0 %v2806
      %v2808 = vpop.f32.mrf.mxu0
      %v2809 = vadd.f32 %v2677, %v2808
      %v2810 = vpop.f32.mrf.mxu0
      %2811 = vmatprep.mubr.f32.mxu0 0.0
      %v2812 = vand.u32 %v2390, 4294901760
      %v2813 = vsub.f32 %v2390, %v2812
      %2814 = vmatmul.mubr.f32.gmra.mxu0 %v2813
      %v2815 = vpop.f32.mrf.mxu0
      %v2816 = vadd.f32 %v2683, %v2815
      %v2817 = vpop.f32.mrf.mxu0
      %2818 = vmatprep.mubr.f32.mxu0 0.0
      %v2819 = vand.u32 %v2393, 4294901760
      %v2820 = vsub.f32 %v2393, %v2819
      %2821 = vmatmul.mubr.f32.gmra.mxu0 %v2820
      %v2822 = vpop.f32.mrf.mxu0
      %v2823 = vadd.f32 %v2689, %v2822
      %v2824 = vpop.f32.mrf.mxu0
      %2825 = vmatprep.mubr.f32.mxu0 0.0
      %v2826 = vand.u32 %v2396, 4294901760
      %v2827 = vsub.f32 %v2396, %v2826
      %2828 = vmatmul.mubr.f32.gmra.mxu0 %v2827
      %v2829 = vpop.f32.mrf.mxu0
      %v2830 = vadd.f32 %v2695, %v2829
      %v2831 = vpop.f32.mrf.mxu0
      %2832 = vmatprep.mubr.f32.mxu0 0.0
      %v2833 = vand.u32 %v2399, 4294901760
      %v2834 = vsub.f32 %v2399, %v2833
      %2835 = vmatmul.mubr.f32.gmra.mxu0 %v2834
      %v2836 = vpop.f32.mrf.mxu0
      %v2837 = vadd.f32 %v2701, %v2836
      %v2838 = vpop.f32.mrf.mxu0
      %2839 = vmatprep.mubr.f32.mxu0 0.0
      %v2840 = vand.u32 %v2402, 4294901760
      %v2841 = vsub.f32 %v2402, %v2840
      %2842 = vmatmul.mubr.f32.gmra.mxu0 %v2841
      %v2843 = vpop.f32.mrf.mxu0
      %v2844 = vadd.f32 %v2707, %v2843
      %v2845 = vpop.f32.mrf.mxu0
      %2846 = vdwg.mxu0
      %2847 = vmatprep.subr.mxu0 0.0
      %2848 = vmatpush1.msra.mxu0 0.0
      %2849 = vmatprep.subr.mxu0 0.0
      %2850 = vmatpush1.msra.mxu0 0.0
      %2851 = vmatprep.subr.mxu0 0.0
      %2852 = vmatpush1.msra.mxu0 0.0
      %2853 = vmatprep.subr.mxu0 0.0
      %2854 = vmatpush1.msra.mxu0 0.0
      %2855 = vmatprep.subr.mxu0 0.0
      %2856 = vmatpush1.msra.mxu0 0.0
      %2857 = vmatprep.subr.mxu0 0.0
      %2858 = vmatpush1.msra.mxu0 0.0
      %2859 = vmatprep.subr.mxu0 0.0
      %2860 = vmatpush1.msra.mxu0 0.0
      %2861 = vmatprep.subr.mxu0 0.0
      %2862 = vmatpush1.msra.mxu0 0.0
      %2863 = vmatprep.subr.mxu0 0.0
      %v2864 = vand.u32 %v2379, 4294901760
      %2865 = vmatpush1.msra.mxu0 %v2864
      %2866 = vmatprep.subr.mxu0 0.0
      %v2867 = vand.u32 %v2378, 4294901760
      %2868 = vmatpush1.msra.mxu0 %v2867
      %2869 = vmatprep.subr.mxu0 0.0
      %v2870 = vand.u32 %v2377, 4294901760
      %2871 = vmatpush1.msra.mxu0 %v2870
      %2872 = vmatprep.subr.mxu0 0.0
      %v2873 = vand.u32 %v2376, 4294901760
      %2874 = vmatpush1.msra.mxu0 %v2873
      %2875 = vmatprep.subr.mxu0 0.0
      %v2876 = vand.u32 %v2375, 4294901760
      %2877 = vmatpush1.msra.mxu0 %v2876
      %2878 = vmatprep.subr.mxu0 0.0
      %v2879 = vand.u32 %v2374, 4294901760
      %2880 = vmatpush1.msra.mxu0 %v2879
      %2881 = vmatprep.subr.mxu0 0.0
      %v2882 = vand.u32 %v2373, 4294901760
      %2883 = vmatpush1.msra.mxu0 %v2882
      %2884 = vmatprep.subr.mxu0 0.0
      %v2885 = vand.u32 %v2372, 4294901760
      %2886 = vmatpush1.msra.mxu0 %v2885
      %2887 = vmatprep.subr.mxu0 0.0
      %2888 = vmatpush2.msra.mxu0 0.0
      %2889 = vmatprep.subr.mxu0 0.0
      %2890 = vmatpush2.msra.mxu0 0.0
      %2891 = vmatprep.subr.mxu0 0.0
      %2892 = vmatpush2.msra.mxu0 0.0
      %2893 = vmatprep.subr.mxu0 0.0
      %2894 = vmatpush2.msra.mxu0 0.0
      %2895 = vmatprep.subr.mxu0 0.0
      %2896 = vmatpush2.msra.mxu0 0.0
      %2897 = vmatprep.subr.mxu0 0.0
      %2898 = vmatpush2.msra.mxu0 0.0
      %2899 = vmatprep.subr.mxu0 0.0
      %2900 = vmatpush2.msra.mxu0 0.0
      %2901 = vmatprep.subr.mxu0 0.0
      %2902 = vmatpush2.msra.mxu0 0.0
      %2903 = vmatprep.subr.mxu0 0.0
      %2904 = vmatpush2.msra.mxu0 0.0
      %2905 = vmatprep.subr.mxu0 0.0
      %2906 = vmatpush2.msra.mxu0 0.0
      %2907 = vmatprep.subr.mxu0 0.0
      %2908 = vmatpush2.msra.mxu0 0.0
      %2909 = vmatprep.subr.mxu0 0.0
      %2910 = vmatpush2.msra.mxu0 0.0
      %2911 = vmatprep.subr.mxu0 0.0
      %2912 = vmatpush2.msra.mxu0 0.0
      %2913 = vmatprep.subr.mxu0 0.0
      %2914 = vmatpush2.msra.mxu0 0.0
      %2915 = vmatprep.subr.mxu0 0.0
      %2916 = vmatpush2.msra.mxu0 0.0
      %2917 = vmatprep.subr.mxu0 0.0
      %2918 = vmatpush2.msra.mxu0 0.0
      %2919 = vmatprep.mubr.f32.mxu0 0.0
      %v2920 = vand.u32 %v2381, 4294901760
      %v2921 = vsub.f32 %v2381, %v2920
      %v2922 = vand.u32 %v2921, 4294901760
      %2923 = vmatmul.mubr.f32.gmra.mxu0 %v2922
      %v2924 = vpop.f32.mrf.mxu0
      %v2925 = vadd.f32 %v2795, %v2924
      %v2926 = vpop.f32.mrf.mxu0
      %2927 = vmatprep.mubr.f32.mxu0 0.0
      %v2928 = vand.u32 %v2384, 4294901760
      %v2929 = vsub.f32 %v2384, %v2928
      %v2930 = vand.u32 %v2929, 4294901760
      %2931 = vmatmul.mubr.f32.gmra.mxu0 %v2930
      %v2932 = vpop.f32.mrf.mxu0
      %v2933 = vadd.f32 %v2802, %v2932
      %v2934 = vpop.f32.mrf.mxu0
      %2935 = vmatprep.mubr.f32.mxu0 0.0
      %v2936 = vand.u32 %v2387, 4294901760
      %v2937 = vsub.f32 %v2387, %v2936
      %v2938 = vand.u32 %v2937, 4294901760
      %2939 = vmatmul.mubr.f32.gmra.mxu0 %v2938
      %v2940 = vpop.f32.mrf.mxu0
      %v2941 = vadd.f32 %v2809, %v2940
      %v2942 = vpop.f32.mrf.mxu0
      %2943 = vmatprep.mubr.f32.mxu0 0.0
      %v2944 = vand.u32 %v2390, 4294901760
      %v2945 = vsub.f32 %v2390, %v2944
      %v2946 = vand.u32 %v2945, 4294901760
      %2947 = vmatmul.mubr.f32.gmra.mxu0 %v2946
      %v2948 = vpop.f32.mrf.mxu0
      %v2949 = vadd.f32 %v2816, %v2948
      %v2950 = vpop.f32.mrf.mxu0
      %2951 = vmatprep.mubr.f32.mxu0 0.0
      %v2952 = vand.u32 %v2393, 4294901760
      %v2953 = vsub.f32 %v2393, %v2952
      %v2954 = vand.u32 %v2953, 4294901760
      %2955 = vmatmul.mubr.f32.gmra.mxu0 %v2954
      %v2956 = vpop.f32.mrf.mxu0
      %v2957 = vadd.f32 %v2823, %v2956
      %v2958 = vpop.f32.mrf.mxu0
      %2959 = vmatprep.mubr.f32.mxu0 0.0
      %v2960 = vand.u32 %v2396, 4294901760
      %v2961 = vsub.f32 %v2396, %v2960
      %v2962 = vand.u32 %v2961, 4294901760
      %2963 = vmatmul.mubr.f32.gmra.mxu0 %v2962
      %v2964 = vpop.f32.mrf.mxu0
      %v2965 = vadd.f32 %v2830, %v2964
      %v2966 = vpop.f32.mrf.mxu0
      %2967 = vmatprep.mubr.f32.mxu0 0.0
      %v2968 = vand.u32 %v2399, 4294901760
      %v2969 = vsub.f32 %v2399, %v2968
      %v2970 = vand.u32 %v2969, 4294901760
      %2971 = vmatmul.mubr.f32.gmra.mxu0 %v2970
      %v2972 = vpop.f32.mrf.mxu0
      %v2973 = vadd.f32 %v2837, %v2972
      %v2974 = vpop.f32.mrf.mxu0
      %2975 = vmatprep.mubr.f32.mxu0 0.0
      %v2976 = vand.u32 %v2402, 4294901760
      %v2977 = vsub.f32 %v2402, %v2976
      %v2978 = vand.u32 %v2977, 4294901760
      %2979 = vmatmul.mubr.f32.gmra.mxu0 %v2978
      %v2980 = vpop.f32.mrf.mxu0
      %v2981 = vadd.f32 %v2844, %v2980
      %v2982 = vpop.f32.mrf.mxu0
      %2983 = vdwg.mxu0
      %2984 = vmatprep.subr.mxu0 0.0
      %2985 = vmatpush1.msra.mxu0 0.0
      %2986 = vmatprep.subr.mxu0 0.0
      %2987 = vmatpush1.msra.mxu0 0.0
      %2988 = vmatprep.subr.mxu0 0.0
      %2989 = vmatpush1.msra.mxu0 0.0
      %2990 = vmatprep.subr.mxu0 0.0
      %2991 = vmatpush1.msra.mxu0 0.0
      %2992 = vmatprep.subr.mxu0 0.0
      %2993 = vmatpush1.msra.mxu0 0.0
      %2994 = vmatprep.subr.mxu0 0.0
      %2995 = vmatpush1.msra.mxu0 0.0
      %2996 = vmatprep.subr.mxu0 0.0
      %2997 = vmatpush1.msra.mxu0 0.0
      %2998 = vmatprep.subr.mxu0 0.0
      %2999 = vmatpush1.msra.mxu0 0.0
      %3000 = vmatprep.subr.mxu0 0.0
      %v3001 = vand.u32 %v2379, 4294901760
      %v3002 = vsub.f32 %v2379, %v3001
      %v3003 = vand.u32 %v3002, 4294901760
      %3004 = vmatpush1.msra.mxu0 %v3003
      %3005 = vmatprep.subr.mxu0 0.0
      %v3006 = vand.u32 %v2378, 4294901760
      %v3007 = vsub.f32 %v2378, %v3006
      %v3008 = vand.u32 %v3007, 4294901760
      %3009 = vmatpush1.msra.mxu0 %v3008
      %3010 = vmatprep.subr.mxu0 0.0
      %v3011 = vand.u32 %v2377, 4294901760
      %v3012 = vsub.f32 %v2377, %v3011
      %v3013 = vand.u32 %v3012, 4294901760
      %3014 = vmatpush1.msra.mxu0 %v3013
      %3015 = vmatprep.subr.mxu0 0.0
      %v3016 = vand.u32 %v2376, 4294901760
      %v3017 = vsub.f32 %v2376, %v3016
      %v3018 = vand.u32 %v3017, 4294901760
      %3019 = vmatpush1.msra.mxu0 %v3018
      %3020 = vmatprep.subr.mxu0 0.0
      %v3021 = vand.u32 %v2375, 4294901760
      %v3022 = vsub.f32 %v2375, %v3021
      %v3023 = vand.u32 %v3022, 4294901760
      %3024 = vmatpush1.msra.mxu0 %v3023
      %3025 = vmatprep.subr.mxu0 0.0
      %v3026 = vand.u32 %v2374, 4294901760
      %v3027 = vsub.f32 %v2374, %v3026
      %v3028 = vand.u32 %v3027, 4294901760
      %3029 = vmatpush1.msra.mxu0 %v3028
      %3030 = vmatprep.subr.mxu0 0.0
      %v3031 = vand.u32 %v2373, 4294901760
      %v3032 = vsub.f32 %v2373, %v3031
      %v3033 = vand.u32 %v3032, 4294901760
      %3034 = vmatpush1.msra.mxu0 %v3033
      %3035 = vmatprep.subr.mxu0 0.0
      %v3036 = vand.u32 %v2372, 4294901760
      %v3037 = vsub.f32 %v2372, %v3036
      %v3038 = vand.u32 %v3037, 4294901760
      %3039 = vmatpush1.msra.mxu0 %v3038
      %3040 = vmatprep.subr.mxu0 0.0
      %3041 = vmatpush2.msra.mxu0 0.0
      %3042 = vmatprep.subr.mxu0 0.0
      %3043 = vmatpush2.msra.mxu0 0.0
      %3044 = vmatprep.subr.mxu0 0.0
      %3045 = vmatpush2.msra.mxu0 0.0
      %3046 = vmatprep.subr.mxu0 0.0
      %3047 = vmatpush2.msra.mxu0 0.0
      %3048 = vmatprep.subr.mxu0 0.0
      %3049 = vmatpush2.msra.mxu0 0.0
      %3050 = vmatprep.subr.mxu0 0.0
      %3051 = vmatpush2.msra.mxu0 0.0
      %3052 = vmatprep.subr.mxu0 0.0
      %3053 = vmatpush2.msra.mxu0 0.0
      %3054 = vmatprep.subr.mxu0 0.0
      %3055 = vmatpush2.msra.mxu0 0.0
      %3056 = vmatprep.subr.mxu0 0.0
      %3057 = vmatpush2.msra.mxu0 0.0
      %3058 = vmatprep.subr.mxu0 0.0
      %3059 = vmatpush2.msra.mxu0 0.0
      %3060 = vmatprep.subr.mxu0 0.0
      %3061 = vmatpush2.msra.mxu0 0.0
      %3062 = vmatprep.subr.mxu0 0.0
      %3063 = vmatpush2.msra.mxu0 0.0
      %3064 = vmatprep.subr.mxu0 0.0
      %3065 = vmatpush2.msra.mxu0 0.0
      %3066 = vmatprep.subr.mxu0 0.0
      %3067 = vmatpush2.msra.mxu0 0.0
      %3068 = vmatprep.subr.mxu0 0.0
      %3069 = vmatpush2.msra.mxu0 0.0
      %3070 = vmatprep.subr.mxu0 0.0
      %3071 = vmatpush2.msra.mxu0 0.0
      %3072 = vmatprep.mubr.f32.mxu0 0.0
      %v3073 = vand.u32 %v2381, 4294901760
      %3074 = vmatmul.mubr.f32.gmra.mxu0 %v3073
      %v3075 = vpop.f32.mrf.mxu0
      %v3076 = vadd.f32 %v2925, %v3075
      %v3077 = vpop.f32.mrf.mxu0
      %3078 = vmatprep.mubr.f32.mxu0 0.0
      %v3079 = vand.u32 %v2384, 4294901760
      %3080 = vmatmul.mubr.f32.gmra.mxu0 %v3079
      %v3081 = vpop.f32.mrf.mxu0
      %v3082 = vadd.f32 %v2933, %v3081
      %v3083 = vpop.f32.mrf.mxu0
      %3084 = vmatprep.mubr.f32.mxu0 0.0
      %v3085 = vand.u32 %v2387, 4294901760
      %3086 = vmatmul.mubr.f32.gmra.mxu0 %v3085
      %v3087 = vpop.f32.mrf.mxu0
      %v3088 = vadd.f32 %v2941, %v3087
      %v3089 = vpop.f32.mrf.mxu0
      %3090 = vmatprep.mubr.f32.mxu0 0.0
      %v3091 = vand.u32 %v2390, 4294901760
      %3092 = vmatmul.mubr.f32.gmra.mxu0 %v3091
      %v3093 = vpop.f32.mrf.mxu0
      %v3094 = vadd.f32 %v2949, %v3093
      %v3095 = vpop.f32.mrf.mxu0
      %3096 = vmatprep.mubr.f32.mxu0 0.0
      %v3097 = vand.u32 %v2393, 4294901760
      %3098 = vmatmul.mubr.f32.gmra.mxu0 %v3097
      %v3099 = vpop.f32.mrf.mxu0
      %v3100 = vadd.f32 %v2957, %v3099
      %v3101 = vpop.f32.mrf.mxu0
      %3102 = vmatprep.mubr.f32.mxu0 0.0
      %v3103 = vand.u32 %v2396, 4294901760
      %3104 = vmatmul.mubr.f32.gmra.mxu0 %v3103
      %v3105 = vpop.f32.mrf.mxu0
      %v3106 = vadd.f32 %v2965, %v3105
      %v3107 = vpop.f32.mrf.mxu0
      %3108 = vmatprep.mubr.f32.mxu0 0.0
      %v3109 = vand.u32 %v2399, 4294901760
      %3110 = vmatmul.mubr.f32.gmra.mxu0 %v3109
      %v3111 = vpop.f32.mrf.mxu0
      %v3112 = vadd.f32 %v2973, %v3111
      %v3113 = vpop.f32.mrf.mxu0
      %3114 = vmatprep.mubr.f32.mxu0 0.0
      %v3115 = vand.u32 %v2402, 4294901760
      %3116 = vmatmul.mubr.f32.gmra.mxu0 %v3115
      %v3117 = vpop.f32.mrf.mxu0
      %v3118 = vadd.f32 %v2981, %v3117
      %v3119 = vpop.f32.mrf.mxu0
      %3120 = vdwg.mxu0
      %3121 = vmatprep.subr.mxu0 0.0
      %3122 = vmatpush1.msra.mxu0 0.0
      %3123 = vmatprep.subr.mxu0 0.0
      %3124 = vmatpush1.msra.mxu0 0.0
      %3125 = vmatprep.subr.mxu0 0.0
      %3126 = vmatpush1.msra.mxu0 0.0
      %3127 = vmatprep.subr.mxu0 0.0
      %3128 = vmatpush1.msra.mxu0 0.0
      %3129 = vmatprep.subr.mxu0 0.0
      %3130 = vmatpush1.msra.mxu0 0.0
      %3131 = vmatprep.subr.mxu0 0.0
      %3132 = vmatpush1.msra.mxu0 0.0
      %3133 = vmatprep.subr.mxu0 0.0
      %3134 = vmatpush1.msra.mxu0 0.0
      %3135 = vmatprep.subr.mxu0 0.0
      %3136 = vmatpush1.msra.mxu0 0.0
      %3137 = vmatprep.subr.mxu0 0.0
      %v3138 = vand.u32 %v2379, 4294901760
      %3139 = vmatpush1.msra.mxu0 %v3138
      %3140 = vmatprep.subr.mxu0 0.0
      %v3141 = vand.u32 %v2378, 4294901760
      %3142 = vmatpush1.msra.mxu0 %v3141
      %3143 = vmatprep.subr.mxu0 0.0
      %v3144 = vand.u32 %v2377, 4294901760
      %3145 = vmatpush1.msra.mxu0 %v3144
      %3146 = vmatprep.subr.mxu0 0.0
      %v3147 = vand.u32 %v2376, 4294901760
      %3148 = vmatpush1.msra.mxu0 %v3147
      %3149 = vmatprep.subr.mxu0 0.0
      %v3150 = vand.u32 %v2375, 4294901760
      %3151 = vmatpush1.msra.mxu0 %v3150
      %3152 = vmatprep.subr.mxu0 0.0
      %v3153 = vand.u32 %v2374, 4294901760
      %3154 = vmatpush1.msra.mxu0 %v3153
      %3155 = vmatprep.subr.mxu0 0.0
      %v3156 = vand.u32 %v2373, 4294901760
      %3157 = vmatpush1.msra.mxu0 %v3156
      %3158 = vmatprep.subr.mxu0 0.0
      %v3159 = vand.u32 %v2372, 4294901760
      %3160 = vmatpush1.msra.mxu0 %v3159
      %3161 = vmatprep.subr.mxu0 0.0
      %3162 = vmatpush2.msra.mxu0 0.0
      %3163 = vmatprep.subr.mxu0 0.0
      %3164 = vmatpush2.msra.mxu0 0.0
      %3165 = vmatprep.subr.mxu0 0.0
      %3166 = vmatpush2.msra.mxu0 0.0
      %3167 = vmatprep.subr.mxu0 0.0
      %3168 = vmatpush2.msra.mxu0 0.0
      %3169 = vmatprep.subr.mxu0 0.0
      %3170 = vmatpush2.msra.mxu0 0.0
      %3171 = vmatprep.subr.mxu0 0.0
      %3172 = vmatpush2.msra.mxu0 0.0
      %3173 = vmatprep.subr.mxu0 0.0
      %3174 = vmatpush2.msra.mxu0 0.0
      %3175 = vmatprep.subr.mxu0 0.0
      %3176 = vmatpush2.msra.mxu0 0.0
      %3177 = vmatprep.subr.mxu0 0.0
      %3178 = vmatpush2.msra.mxu0 0.0
      %3179 = vmatprep.subr.mxu0 0.0
      %3180 = vmatpush2.msra.mxu0 0.0
      %3181 = vmatprep.subr.mxu0 0.0
      %3182 = vmatpush2.msra.mxu0 0.0
      %3183 = vmatprep.subr.mxu0 0.0
      %3184 = vmatpush2.msra.mxu0 0.0
      %3185 = vmatprep.subr.mxu0 0.0
      %3186 = vmatpush2.msra.mxu0 0.0
      %3187 = vmatprep.subr.mxu0 0.0
      %3188 = vmatpush2.msra.mxu0 0.0
      %3189 = vmatprep.subr.mxu0 0.0
      %3190 = vmatpush2.msra.mxu0 0.0
      %3191 = vmatprep.subr.mxu0 0.0
      %3192 = vmatpush2.msra.mxu0 0.0
      %3193 = vmatprep.mubr.f32.mxu0 0.0
      %v3194 = vand.u32 %v2381, 4294901760
      %3195 = vmatmul.mubr.f32.gmra.mxu0 %v3194
      %v3196 = vpop.f32.mrf.mxu0
      %v3197 = vadd.f32 %v3076, %v3196
      %v3198 = vpop.f32.mrf.mxu0
      %3199 = vmatprep.mubr.f32.mxu0 0.0
      %v3200 = vand.u32 %v2384, 4294901760
      %3201 = vmatmul.mubr.f32.gmra.mxu0 %v3200
      %v3202 = vpop.f32.mrf.mxu0
      %v3203 = vadd.f32 %v3082, %v3202
      %v3204 = vpop.f32.mrf.mxu0
      %3205 = vmatprep.mubr.f32.mxu0 0.0
      %v3206 = vand.u32 %v2387, 4294901760
      %3207 = vmatmul.mubr.f32.gmra.mxu0 %v3206
      %v3208 = vpop.f32.mrf.mxu0
      %v3209 = vadd.f32 %v3088, %v3208
      %v3210 = vpop.f32.mrf.mxu0
      %3211 = vmatprep.mubr.f32.mxu0 0.0
      %v3212 = vand.u32 %v2390, 4294901760
      %3213 = vmatmul.mubr.f32.gmra.mxu0 %v3212
      %v3214 = vpop.f32.mrf.mxu0
      %v3215 = vadd.f32 %v3094, %v3214
      %v3216 = vpop.f32.mrf.mxu0
      %3217 = vmatprep.mubr.f32.mxu0 0.0
      %v3218 = vand.u32 %v2393, 4294901760
      %3219 = vmatmul.mubr.f32.gmra.mxu0 %v3218
      %v3220 = vpop.f32.mrf.mxu0
      %v3221 = vadd.f32 %v3100, %v3220
      %v3222 = vpop.f32.mrf.mxu0
      %3223 = vmatprep.mubr.f32.mxu0 0.0
      %v3224 = vand.u32 %v2396, 4294901760
      %3225 = vmatmul.mubr.f32.gmra.mxu0 %v3224
      %v3226 = vpop.f32.mrf.mxu0
      %v3227 = vadd.f32 %v3106, %v3226
      %v3228 = vpop.f32.mrf.mxu0
      %3229 = vmatprep.mubr.f32.mxu0 0.0
      %v3230 = vand.u32 %v2399, 4294901760
      %3231 = vmatmul.mubr.f32.gmra.mxu0 %v3230
      %v3232 = vpop.f32.mrf.mxu0
      %v3233 = vadd.f32 %v3112, %v3232
      %v3234 = vpop.f32.mrf.mxu0
      %3235 = vmatprep.mubr.f32.mxu0 0.0
      %v3236 = vand.u32 %v2402, 4294901760
      %3237 = vmatmul.mubr.f32.gmra.mxu0 %v3236
      %v3238 = vpop.f32.mrf.mxu0
      %v3239 = vadd.f32 %v3118, %v3238
      %v3240 = vpop.f32.mrf.mxu0
      %3241 = vdwg.mxu0
      %v3250 = vrot.slane %v3197, 7
      %v3251 = vrot.slane %v3203, 7
      %v3252 = vrot.slane %v3209, 7
      %v3253 = vrot.slane %v3215, 7
      %v3254 = vrot.slane %v3221, 7
      %v3255 = vrot.slane %v3227, 7
      %v3256 = vrot.slane %v3233, 7
      %v3257 = vrot.slane %v3239, 7
      %3258 = vrot.lane.b32.xlu0 %v3250, 100
      %v3259 = vpop.permute.xlu0 %3258
      %3260 = vrot.lane.b32.xlu0 %v3251, 100
      %v3261 = vpop.permute.xlu0 %3260
      %3262 = vrot.lane.b32.xlu0 %v3252, 100
      %v3263 = vpop.permute.xlu0 %3262
      %3264 = vrot.lane.b32.xlu0 %v3253, 100
      %v3265 = vpop.permute.xlu0 %3264
      %3266 = vrot.lane.b32.xlu0 %v3254, 100
      %v3267 = vpop.permute.xlu0 %3266
      %3268 = vrot.lane.b32.xlu0 %v3255, 100
      %v3269 = vpop.permute.xlu0 %3268
      %3270 = vrot.lane.b32.xlu0 %v3256, 100
      %v3271 = vpop.permute.xlu0 %3270
      %3272 = vrot.lane.b32.xlu0 %v3257, 100
      %v3273 = vpop.permute.xlu0 %3272
      %vm3282 = vcmask 1040384
      %v3283 = vsel %vm3282, 0.0, %v3259
      %v3284 = vsel %vm3282, 0.0, %v3261
      %v3285 = vsel %vm3282, 0.0, %v3263
      %v3286 = vsel %vm3282, 0.0, %v3265
      %v3287 = vsel %vm3282, 0.0, %v3267
      %v3288 = vsel %vm3282, 0.0, %v3269
      %v3289 = vsel %vm3282, 0.0, %v3271
      %v3290 = vsel %vm3282, 0.0, %v3273
      %3291 = vrot.lane.b32.xlu0 %v3197, 76
      %v3292 = vpop.permute.xlu0 %3291
      %3293 = vrot.lane.b32.xlu0 %v3203, 76
      %v3294 = vpop.permute.xlu0 %3293
      %3295 = vrot.lane.b32.xlu0 %v3209, 76
      %v3296 = vpop.permute.xlu0 %3295
      %3297 = vrot.lane.b32.xlu0 %v3215, 76
      %v3298 = vpop.permute.xlu0 %3297
      %3299 = vrot.lane.b32.xlu0 %v3221, 76
      %v3300 = vpop.permute.xlu0 %3299
      %3301 = vrot.lane.b32.xlu0 %v3227, 76
      %v3302 = vpop.permute.xlu0 %3301
      %3303 = vrot.lane.b32.xlu0 %v3233, 76
      %v3304 = vpop.permute.xlu0 %3303
      %3305 = vrot.lane.b32.xlu0 %v3197, 68
      %v3306 = vpop.permute.xlu0 %3305
      %3307 = vrot.lane.b32.xlu0 %v3203, 68
      %v3308 = vpop.permute.xlu0 %3307
      %3309 = vrot.lane.b32.xlu0 %v3209, 68
      %v3310 = vpop.permute.xlu0 %3309
      %3311 = vrot.lane.b32.xlu0 %v3215, 68
      %v3312 = vpop.permute.xlu0 %3311
      %3313 = vrot.lane.b32.xlu0 %v3221, 68
      %v3314 = vpop.permute.xlu0 %3313
      %3315 = vrot.lane.b32.xlu0 %v3227, 68
      %v3316 = vpop.permute.xlu0 %3315
      %3317 = vrot.lane.b32.xlu0 %v3233, 68
      %v3318 = vpop.permute.xlu0 %3317
      %v3320 = vrot.slane 0.0, 7
      %v3321 = vrot.slane %v3306, 7
      %v3322 = vrot.slane %v3308, 7
      %v3323 = vrot.slane %v3310, 7
      %v3324 = vrot.slane %v3312, 7
      %v3325 = vrot.slane %v3314, 7
      %v3326 = vrot.slane %v3316, 7
      %v3327 = vrot.slane %v3318, 7
      %v3336 = vsel %vm3282, 0.0, %v3320
      %v3337 = vsel %vm3282, 0.0, %v3321
      %v3338 = vsel %vm3282, 0.0, %v3322
      %v3339 = vsel %vm3282, 0.0, %v3323
      %v3340 = vsel %vm3282, 0.0, %v3324
      %v3341 = vsel %vm3282, 0.0, %v3325
      %v3342 = vsel %vm3282, 0.0, %v3326
      %v3343 = vsel %vm3282, 0.0, %v3327
      %3352 = vrot.lane.b32.xlu0 %v3283, 20
      %v3353 = vpop.permute.xlu0 %3352
      %3354 = vrot.lane.b32.xlu0 %v3284, 20
      %v3355 = vpop.permute.xlu0 %3354
      %3356 = vrot.lane.b32.xlu0 %v3285, 20
      %v3357 = vpop.permute.xlu0 %3356
      %3358 = vrot.lane.b32.xlu0 %v3286, 20
      %v3359 = vpop.permute.xlu0 %3358
      %3360 = vrot.lane.b32.xlu0 %v3287, 20
      %v3361 = vpop.permute.xlu0 %3360
      %3362 = vrot.lane.b32.xlu0 %v3288, 20
      %v3363 = vpop.permute.xlu0 %3362
      %3364 = vrot.lane.b32.xlu0 %v3289, 20
      %v3365 = vpop.permute.xlu0 %3364
      %3366 = vrot.lane.b32.xlu0 %v3290, 20
      %v3367 = vpop.permute.xlu0 %3366
      %v3376 = vadd.f32 %v3197, %v3353
      %v3377 = vadd.f32 %v3203, %v3355
      %v3378 = vadd.f32 %v3209, %v3357
      %v3379 = vadd.f32 %v3215, %v3359
      %v3380 = vadd.f32 %v3221, %v3361
      %v3381 = vadd.f32 %v3227, %v3363
      %v3382 = vadd.f32 %v3233, %v3365
      %v3383 = vadd.f32 %v3239, %v3367
      %3384 = vrot.lane.b32.xlu0 0.0, 20
      %v3385 = vpop.permute.xlu0 %3384
      %3386 = vrot.lane.b32.xlu0 %v3292, 20
      %v3387 = vpop.permute.xlu0 %3386
      %3388 = vrot.lane.b32.xlu0 %v3294, 20
      %v3389 = vpop.permute.xlu0 %3388
      %3390 = vrot.lane.b32.xlu0 %v3296, 20
      %v3391 = vpop.permute.xlu0 %3390
      %3392 = vrot.lane.b32.xlu0 %v3298, 20
      %v3393 = vpop.permute.xlu0 %3392
      %3394 = vrot.lane.b32.xlu0 %v3300, 20
      %v3395 = vpop.permute.xlu0 %3394
      %3396 = vrot.lane.b32.xlu0 %v3302, 20
      %v3397 = vpop.permute.xlu0 %3396
      %3398 = vrot.lane.b32.xlu0 %v3304, 20
      %v3399 = vpop.permute.xlu0 %3398
      %v3408 = vadd.f32 %v3376, %v3385
      %v3409 = vadd.f32 %v3377, %v3387
      %v3410 = vadd.f32 %v3378, %v3389
      %v3411 = vadd.f32 %v3379, %v3391
      %v3412 = vadd.f32 %v3380, %v3393
      %v3413 = vadd.f32 %v3381, %v3395
      %v3414 = vadd.f32 %v3382, %v3397
      %v3415 = vadd.f32 %v3383, %v3399
      %3424 = vrot.lane.b32.xlu0 %v3336, 20
      %v3425 = vpop.permute.xlu0 %3424
      %3426 = vrot.lane.b32.xlu0 %v3337, 20
      %v3427 = vpop.permute.xlu0 %3426
      %3428 = vrot.lane.b32.xlu0 %v3338, 20
      %v3429 = vpop.permute.xlu0 %3428
      %3430 = vrot.lane.b32.xlu0 %v3339, 20
      %v3431 = vpop.permute.xlu0 %3430
      %3432 = vrot.lane.b32.xlu0 %v3340, 20
      %v3433 = vpop.permute.xlu0 %3432
      %3434 = vrot.lane.b32.xlu0 %v3341, 20
      %v3435 = vpop.permute.xlu0 %3434
      %3436 = vrot.lane.b32.xlu0 %v3342, 20
      %v3437 = vpop.permute.xlu0 %3436
      %3438 = vrot.lane.b32.xlu0 %v3343, 20
      %v3439 = vpop.permute.xlu0 %3438
      %v3448 = vadd.f32 %v3408, %v3425
      %v3449 = vadd.f32 %v3409, %v3427
      %v3450 = vadd.f32 %v3410, %v3429
      %v3451 = vadd.f32 %v3411, %v3431
      %v3452 = vadd.f32 %v3412, %v3433
      %v3453 = vadd.f32 %v3413, %v3435
      %v3454 = vadd.f32 %v3414, %v3437
      %v3455 = vadd.f32 %v3415, %v3439
      %v3456 = vmul.f32 %v3448, 0.25
      %v3457 = vmul.f32 %v3449, 0.25
      %v3458 = vmul.f32 %v3450, 0.25
      %v3459 = vmul.f32 %v3451, 0.25
      %v3460 = vmul.f32 %v3452, 0.25
      %v3461 = vmul.f32 %v3453, 0.25
      %v3462 = vmul.f32 %v3454, 0.25
      %v3463 = vmul.f32 %v3455, 0.25
      %3472 = vrot.lane.b32.xlu0 %v3456, 108
      %v3473 = vpop.permute.xlu0 %3472
      %3474 = vrot.lane.b32.xlu0 %v3457, 108
      %v3475 = vpop.permute.xlu0 %3474
      %3476 = vrot.lane.b32.xlu0 %v3458, 108
      %v3477 = vpop.permute.xlu0 %3476
      %3478 = vrot.lane.b32.xlu0 %v3459, 108
      %v3479 = vpop.permute.xlu0 %3478
      %3480 = vrot.lane.b32.xlu0 %v3460, 108
      %v3481 = vpop.permute.xlu0 %3480
      %3482 = vrot.lane.b32.xlu0 %v3461, 108
      %v3483 = vpop.permute.xlu0 %3482
      %3484 = vrot.lane.b32.xlu0 %v3462, 108
      %v3485 = vpop.permute.xlu0 %3484
      %3486 = vrot.lane.b32.xlu0 %v3463, 108
      %v3487 = vpop.permute.xlu0 %3486
      %3496 = vst.msk [vmem:[%s163] sm:$0xff] %vm458, %v3473
      %3497 = vst.msk [vmem:[%s163 + $0x8] sm:$0xff] %vm458, %v3475
      %3498 = vst.msk [vmem:[%s163 + $0x10] sm:$0xff] %vm458, %v3477
      %3499 = vst.msk [vmem:[%s163 + $0x18] sm:$0xff] %vm458, %v3479
      %3500 = vst.msk [vmem:[%s163 + $0x20] sm:$0xff] %vm458, %v3481
      %3501 = vst.msk [vmem:[%s163 + $0x28] sm:$0xff] %vm458, %v3483
      %3502 = vst.msk [vmem:[%s163 + $0x30] sm:$0xff] %vm458, %v3485
      %3503 = vst.msk [vmem:[%s163 + $0x38] sm:$0xff] %vm458, %v3487
      %v3504 = vrot.slane %v3197, 1
      %v3505 = vrot.slane %v3203, 1
      %v3506 = vrot.slane %v3209, 1
      %v3507 = vrot.slane %v3215, 1
      %v3508 = vrot.slane %v3221, 1
      %v3509 = vrot.slane %v3227, 1
      %v3510 = vrot.slane %v3233, 1
      %v3511 = vrot.slane %v3239, 1
      %v3520 = vsel %vm200, %v3504, 0.0
      %v3521 = vsel %vm200, %v3505, 0.0
      %v3522 = vsel %vm200, %v3506, 0.0
      %v3523 = vsel %vm200, %v3507, 0.0
      %v3524 = vsel %vm200, %v3508, 0.0
      %v3525 = vsel %vm200, %v3509, 0.0
      %v3526 = vsel %vm200, %v3510, 0.0
      %v3527 = vsel %vm200, %v3511, 0.0
      %3528 = vrot.lane.b32.xlu0 %v3197, 80
      %v3529 = vpop.permute.xlu0 %3528
      %3530 = vrot.lane.b32.xlu0 %v3203, 80
      %v3531 = vpop.permute.xlu0 %3530
      %3532 = vrot.lane.b32.xlu0 %v3209, 80
      %v3533 = vpop.permute.xlu0 %3532
      %3534 = vrot.lane.b32.xlu0 %v3215, 80
      %v3535 = vpop.permute.xlu0 %3534
      %3536 = vrot.lane.b32.xlu0 %v3221, 80
      %v3537 = vpop.permute.xlu0 %3536
      %3538 = vrot.lane.b32.xlu0 %v3227, 80
      %v3539 = vpop.permute.xlu0 %3538
      %3540 = vrot.lane.b32.xlu0 %v3233, 80
      %v3541 = vpop.permute.xlu0 %3540
      %v3542 = vrot.slane 0.0, 1
      %v3543 = vrot.slane %v3529, 1
      %v3544 = vrot.slane %v3531, 1
      %v3545 = vrot.slane %v3533, 1
      %v3546 = vrot.slane %v3535, 1
      %v3547 = vrot.slane %v3537, 1
      %v3548 = vrot.slane %v3539, 1
      %v3549 = vrot.slane %v3541, 1
      %v3558 = vsel %vm200, %v3542, 0.0
      %v3559 = vsel %vm200, %v3543, 0.0
      %v3560 = vsel %vm200, %v3544, 0.0
      %v3561 = vsel %vm200, %v3545, 0.0
      %v3562 = vsel %vm200, %v3546, 0.0
      %v3563 = vsel %vm200, %v3547, 0.0
      %v3564 = vsel %vm200, %v3548, 0.0
      %v3565 = vsel %vm200, %v3549, 0.0
      %3566 = vrot.lane.b32.xlu0 %v3197, 72
      %v3567 = vpop.permute.xlu0 %3566
      %3568 = vrot.lane.b32.xlu0 %v3203, 72
      %v3569 = vpop.permute.xlu0 %3568
      %3570 = vrot.lane.b32.xlu0 %v3209, 72
      %v3571 = vpop.permute.xlu0 %3570
      %3572 = vrot.lane.b32.xlu0 %v3215, 72
      %v3573 = vpop.permute.xlu0 %3572
      %3574 = vrot.lane.b32.xlu0 %v3221, 72
      %v3575 = vpop.permute.xlu0 %3574
      %3576 = vrot.lane.b32.xlu0 %v3227, 72
      %v3577 = vpop.permute.xlu0 %3576
      %3578 = vrot.lane.b32.xlu0 %v3233, 72
      %v3579 = vpop.permute.xlu0 %3578
      %3580 = vrot.lane.b32.xlu0 %v3197, 120
      %v3581 = vpop.permute.xlu0 %3580
      %3582 = vrot.lane.b32.xlu0 %v3203, 120
      %v3583 = vpop.permute.xlu0 %3582
      %3584 = vrot.lane.b32.xlu0 %v3209, 120
      %v3585 = vpop.permute.xlu0 %3584
      %3586 = vrot.lane.b32.xlu0 %v3215, 120
      %v3587 = vpop.permute.xlu0 %3586
      %3588 = vrot.lane.b32.xlu0 %v3221, 120
      %v3589 = vpop.permute.xlu0 %3588
      %3590 = vrot.lane.b32.xlu0 %v3227, 120
      %v3591 = vpop.permute.xlu0 %3590
      %3592 = vrot.lane.b32.xlu0 %v3233, 120
      %v3593 = vpop.permute.xlu0 %3592
      %3594 = vrot.lane.b32.xlu0 %v3239, 120
      %v3595 = vpop.permute.xlu0 %3594
      %v3604 = vadd.f32 %v3520, %v3581
      %v3605 = vadd.f32 %v3521, %v3583
      %v3606 = vadd.f32 %v3522, %v3585
      %v3607 = vadd.f32 %v3523, %v3587
      %v3608 = vadd.f32 %v3524, %v3589
      %v3609 = vadd.f32 %v3525, %v3591
      %v3610 = vadd.f32 %v3526, %v3593
      %v3611 = vadd.f32 %v3527, %v3595
      %3620 = vrot.lane.b32.xlu0 %v3558, 16
      %v3621 = vpop.permute.xlu0 %3620
      %3622 = vrot.lane.b32.xlu0 %v3559, 16
      %v3623 = vpop.permute.xlu0 %3622
      %3624 = vrot.lane.b32.xlu0 %v3560, 16
      %v3625 = vpop.permute.xlu0 %3624
      %3626 = vrot.lane.b32.xlu0 %v3561, 16
      %v3627 = vpop.permute.xlu0 %3626
      %3628 = vrot.lane.b32.xlu0 %v3562, 16
      %v3629 = vpop.permute.xlu0 %3628
      %3630 = vrot.lane.b32.xlu0 %v3563, 16
      %v3631 = vpop.permute.xlu0 %3630
      %3632 = vrot.lane.b32.xlu0 %v3564, 16
      %v3633 = vpop.permute.xlu0 %3632
      %3634 = vrot.lane.b32.xlu0 %v3565, 16
      %v3635 = vpop.permute.xlu0 %3634
      %v3644 = vadd.f32 %v3604, %v3621
      %v3645 = vadd.f32 %v3605, %v3623
      %v3646 = vadd.f32 %v3606, %v3625
      %v3647 = vadd.f32 %v3607, %v3627
      %v3648 = vadd.f32 %v3608, %v3629
      %v3649 = vadd.f32 %v3609, %v3631
      %v3650 = vadd.f32 %v3610, %v3633
      %v3651 = vadd.f32 %v3611, %v3635
      %3652 = vrot.lane.b32.xlu0 0.0, 16
      %v3653 = vpop.permute.xlu0 %3652
      %3654 = vrot.lane.b32.xlu0 %v3567, 16
      %v3655 = vpop.permute.xlu0 %3654
      %3656 = vrot.lane.b32.xlu0 %v3569, 16
      %v3657 = vpop.permute.xlu0 %3656
      %3658 = vrot.lane.b32.xlu0 %v3571, 16
      %v3659 = vpop.permute.xlu0 %3658
      %3660 = vrot.lane.b32.xlu0 %v3573, 16
      %v3661 = vpop.permute.xlu0 %3660
      %3662 = vrot.lane.b32.xlu0 %v3575, 16
      %v3663 = vpop.permute.xlu0 %3662
      %3664 = vrot.lane.b32.xlu0 %v3577, 16
      %v3665 = vpop.permute.xlu0 %3664
      %3666 = vrot.lane.b32.xlu0 %v3579, 16
      %v3667 = vpop.permute.xlu0 %3666
      %v3676 = vadd.f32 %v3644, %v3653
      %v3677 = vadd.f32 %v3645, %v3655
      %v3678 = vadd.f32 %v3646, %v3657
      %v3679 = vadd.f32 %v3647, %v3659
      %v3680 = vadd.f32 %v3648, %v3661
      %v3681 = vadd.f32 %v3649, %v3663
      %v3682 = vadd.f32 %v3650, %v3665
      %v3683 = vadd.f32 %v3651, %v3667
      %v3684 = vmul.f32 %v3676, 0.25
      %v3685 = vmul.f32 %v3677, 0.25
      %v3686 = vmul.f32 %v3678, 0.25
      %v3687 = vmul.f32 %v3679, 0.25
      %v3688 = vmul.f32 %v3680, 0.25
      %v3689 = vmul.f32 %v3681, 0.25
      %v3690 = vmul.f32 %v3682, 0.25
      %v3691 = vmul.f32 %v3683, 0.25
      %3700 = vrot.lane.b32.xlu0 %v3684, 112
      %v3701 = vpop.permute.xlu0 %3700
      %3702 = vrot.lane.b32.xlu0 %v3685, 112
      %v3703 = vpop.permute.xlu0 %3702
      %3704 = vrot.lane.b32.xlu0 %v3686, 112
      %v3705 = vpop.permute.xlu0 %3704
      %3706 = vrot.lane.b32.xlu0 %v3687, 112
      %v3707 = vpop.permute.xlu0 %3706
      %3708 = vrot.lane.b32.xlu0 %v3688, 112
      %v3709 = vpop.permute.xlu0 %3708
      %3710 = vrot.lane.b32.xlu0 %v3689, 112
      %v3711 = vpop.permute.xlu0 %3710
      %3712 = vrot.lane.b32.xlu0 %v3690, 112
      %v3713 = vpop.permute.xlu0 %3712
      %3714 = vrot.lane.b32.xlu0 %v3691, 112
      %v3715 = vpop.permute.xlu0 %3714
      %s3724 = scalar_lea.vmem %s163, 64
      %3725 = vst.msk [vmem:[%s3724] sm:$0xff] %vm458, %v3701
      %3726 = vst.msk [vmem:[%s3724 + $0x8] sm:$0xff] %vm458, %v3703
      %3727 = vst.msk [vmem:[%s3724 + $0x10] sm:$0xff] %vm458, %v3705
      %3728 = vst.msk [vmem:[%s3724 + $0x18] sm:$0xff] %vm458, %v3707
      %3729 = vst.msk [vmem:[%s3724 + $0x20] sm:$0xff] %vm458, %v3709
      %3730 = vst.msk [vmem:[%s3724 + $0x28] sm:$0xff] %vm458, %v3711
      %3731 = vst.msk [vmem:[%s3724 + $0x30] sm:$0xff] %vm458, %v3713
      %3732 = vst.msk [vmem:[%s3724 + $0x38] sm:$0xff] %vm458, %v3715
      %3733 = vrot.lane.b32.xlu0 %v3251, 116
      %v3734 = vpop.permute.xlu0 %3733
      %3735 = vrot.lane.b32.xlu0 %v3252, 116
      %v3736 = vpop.permute.xlu0 %3735
      %3737 = vrot.lane.b32.xlu0 %v3253, 116
      %v3738 = vpop.permute.xlu0 %3737
      %3739 = vrot.lane.b32.xlu0 %v3254, 116
      %v3740 = vpop.permute.xlu0 %3739
      %3741 = vrot.lane.b32.xlu0 %v3255, 116
      %v3742 = vpop.permute.xlu0 %3741
      %3743 = vrot.lane.b32.xlu0 %v3256, 116
      %v3744 = vpop.permute.xlu0 %3743
      %3745 = vrot.lane.b32.xlu0 %v3257, 116
      %v3746 = vpop.permute.xlu0 %3745
      %3747 = vrot.lane.b32.xlu0 %v3320, 116
      %v3748 = vpop.permute.xlu0 %3747
      %v3757 = vsel %vm3282, 0.0, %v3734
      %v3758 = vsel %vm3282, 0.0, %v3736
      %v3759 = vsel %vm3282, 0.0, %v3738
      %v3760 = vsel %vm3282, 0.0, %v3740
      %v3761 = vsel %vm3282, 0.0, %v3742
      %v3762 = vsel %vm3282, 0.0, %v3744
      %v3763 = vsel %vm3282, 0.0, %v3746
      %v3764 = vsel %vm3282, 0.0, %v3748
      %3765 = vrot.lane.b32.xlu0 %v3250, 84
      %v3766 = vpop.permute.xlu0 %3765
      %3767 = vrot.lane.b32.xlu0 %v3251, 84
      %v3768 = vpop.permute.xlu0 %3767
      %3769 = vrot.lane.b32.xlu0 %v3252, 84
      %v3770 = vpop.permute.xlu0 %3769
      %3771 = vrot.lane.b32.xlu0 %v3253, 84
      %v3772 = vpop.permute.xlu0 %3771
      %3773 = vrot.lane.b32.xlu0 %v3254, 84
      %v3774 = vpop.permute.xlu0 %3773
      %3775 = vrot.lane.b32.xlu0 %v3255, 84
      %v3776 = vpop.permute.xlu0 %3775
      %3777 = vrot.lane.b32.xlu0 %v3256, 84
      %v3778 = vpop.permute.xlu0 %3777
      %3779 = vrot.lane.b32.xlu0 %v3257, 84
      %v3780 = vpop.permute.xlu0 %3779
      %v3789 = vsel %vm3282, 0.0, %v3766
      %v3790 = vsel %vm3282, 0.0, %v3768
      %v3791 = vsel %vm3282, 0.0, %v3770
      %v3792 = vsel %vm3282, 0.0, %v3772
      %v3793 = vsel %vm3282, 0.0, %v3774
      %v3794 = vsel %vm3282, 0.0, %v3776
      %v3795 = vsel %vm3282, 0.0, %v3778
      %v3796 = vsel %vm3282, 0.0, %v3780
      %3805 = vrot.lane.b32.xlu0 %v3757, 4
      %v3806 = vpop.permute.xlu0 %3805
      %3807 = vrot.lane.b32.xlu0 %v3758, 4
      %v3808 = vpop.permute.xlu0 %3807
      %3809 = vrot.lane.b32.xlu0 %v3759, 4
      %v3810 = vpop.permute.xlu0 %3809
      %3811 = vrot.lane.b32.xlu0 %v3760, 4
      %v3812 = vpop.permute.xlu0 %3811
      %3813 = vrot.lane.b32.xlu0 %v3761, 4
      %v3814 = vpop.permute.xlu0 %3813
      %3815 = vrot.lane.b32.xlu0 %v3762, 4
      %v3816 = vpop.permute.xlu0 %3815
      %3817 = vrot.lane.b32.xlu0 %v3763, 4
      %v3818 = vpop.permute.xlu0 %3817
      %3819 = vrot.lane.b32.xlu0 %v3764, 4
      %v3820 = vpop.permute.xlu0 %3819
      %v3829 = vadd.f32 %v3203, %v3806
      %v3830 = vadd.f32 %v3209, %v3808
      %v3831 = vadd.f32 %v3215, %v3810
      %v3832 = vadd.f32 %v3221, %v3812
      %v3833 = vadd.f32 %v3227, %v3814
      %v3834 = vadd.f32 %v3233, %v3816
      %v3835 = vadd.f32 %v3239, %v3818
      %v3836 = vadd.f32 %v3820, 0.0
      %3837 = vrot.lane.b32.xlu0 %v3197, 96
      %v3838 = vpop.permute.xlu0 %3837
      %3839 = vrot.lane.b32.xlu0 %v3203, 96
      %v3840 = vpop.permute.xlu0 %3839
      %3841 = vrot.lane.b32.xlu0 %v3209, 96
      %v3842 = vpop.permute.xlu0 %3841
      %3843 = vrot.lane.b32.xlu0 %v3215, 96
      %v3844 = vpop.permute.xlu0 %3843
      %3845 = vrot.lane.b32.xlu0 %v3221, 96
      %v3846 = vpop.permute.xlu0 %3845
      %3847 = vrot.lane.b32.xlu0 %v3227, 96
      %v3848 = vpop.permute.xlu0 %3847
      %3849 = vrot.lane.b32.xlu0 %v3233, 96
      %v3850 = vpop.permute.xlu0 %3849
      %3851 = vrot.lane.b32.xlu0 %v3239, 96
      %v3852 = vpop.permute.xlu0 %3851
      %v3861 = vadd.f32 %v3829, %v3838
      %v3862 = vadd.f32 %v3830, %v3840
      %v3863 = vadd.f32 %v3831, %v3842
      %v3864 = vadd.f32 %v3832, %v3844
      %v3865 = vadd.f32 %v3833, %v3846
      %v3866 = vadd.f32 %v3834, %v3848
      %v3867 = vadd.f32 %v3835, %v3850
      %v3868 = vadd.f32 %v3836, %v3852
      %3877 = vrot.lane.b32.xlu0 %v3789, 4
      %v3878 = vpop.permute.xlu0 %3877
      %3879 = vrot.lane.b32.xlu0 %v3790, 4
      %v3880 = vpop.permute.xlu0 %3879
      %3881 = vrot.lane.b32.xlu0 %v3791, 4
      %v3882 = vpop.permute.xlu0 %3881
      %3883 = vrot.lane.b32.xlu0 %v3792, 4
      %v3884 = vpop.permute.xlu0 %3883
      %3885 = vrot.lane.b32.xlu0 %v3793, 4
      %v3886 = vpop.permute.xlu0 %3885
      %3887 = vrot.lane.b32.xlu0 %v3794, 4
      %v3888 = vpop.permute.xlu0 %3887
      %3889 = vrot.lane.b32.xlu0 %v3795, 4
      %v3890 = vpop.permute.xlu0 %3889
      %3891 = vrot.lane.b32.xlu0 %v3796, 4
      %v3892 = vpop.permute.xlu0 %3891
      %v3901 = vadd.f32 %v3861, %v3878
      %v3902 = vadd.f32 %v3862, %v3880
      %v3903 = vadd.f32 %v3863, %v3882
      %v3904 = vadd.f32 %v3864, %v3884
      %v3905 = vadd.f32 %v3865, %v3886
      %v3906 = vadd.f32 %v3866, %v3888
      %v3907 = vadd.f32 %v3867, %v3890
      %v3908 = vadd.f32 %v3868, %v3892
      %v3909 = vmul.f32 %v3901, 0.25
      %v3910 = vmul.f32 %v3902, 0.25
      %v3911 = vmul.f32 %v3903, 0.25
      %v3912 = vmul.f32 %v3904, 0.25
      %v3913 = vmul.f32 %v3905, 0.25
      %v3914 = vmul.f32 %v3906, 0.25
      %v3915 = vmul.f32 %v3907, 0.25
      %v3916 = vmul.f32 %v3908, 0.25
      %3925 = vrot.lane.b32.xlu0 %v3909, 124
      %v3926 = vpop.permute.xlu0 %3925
      %3927 = vrot.lane.b32.xlu0 %v3910, 124
      %v3928 = vpop.permute.xlu0 %3927
      %3929 = vrot.lane.b32.xlu0 %v3911, 124
      %v3930 = vpop.permute.xlu0 %3929
      %3931 = vrot.lane.b32.xlu0 %v3912, 124
      %v3932 = vpop.permute.xlu0 %3931
      %3933 = vrot.lane.b32.xlu0 %v3913, 124
      %v3934 = vpop.permute.xlu0 %3933
      %3935 = vrot.lane.b32.xlu0 %v3914, 124
      %v3936 = vpop.permute.xlu0 %3935
      %3937 = vrot.lane.b32.xlu0 %v3915, 124
      %v3938 = vpop.permute.xlu0 %3937
      %3939 = vrot.lane.b32.xlu0 %v3916, 124
      %v3940 = vpop.permute.xlu0 %3939
      %s3949 = scalar_lea.vmem %s163, 128
      %3950 = vst.msk [vmem:[%s3949] sm:$0xff] %vm458, %v3926
      %3951 = vst.msk [vmem:[%s3949 + $0x8] sm:$0xff] %vm458, %v3928
      %3952 = vst.msk [vmem:[%s3949 + $0x10] sm:$0xff] %vm458, %v3930
      %3953 = vst.msk [vmem:[%s3949 + $0x18] sm:$0xff] %vm458, %v3932
      %3954 = vst.msk [vmem:[%s3949 + $0x20] sm:$0xff] %vm458, %v3934
      %3955 = vst.msk [vmem:[%s3949 + $0x28] sm:$0xff] %vm458, %v3936
      %3956 = vst.msk [vmem:[%s3949 + $0x30] sm:$0xff] %vm458, %v3938
      %3957 = vst.msk [vmem:[%s3949 + $0x38] sm:$0xff] %vm458, %v3940
      %3958 = vrot.lane.b32.xlu0 0.0, 120
      %v3959 = vpop.permute.xlu0 %3958
      %v3961 = vadd.f32 %v3558, %v3959
      %3970 = vrot.lane.b32.xlu0 %v3520, 96
      %v3971 = vpop.permute.xlu0 %3970
      %3972 = vrot.lane.b32.xlu0 %v3521, 96
      %v3973 = vpop.permute.xlu0 %3972
      %3974 = vrot.lane.b32.xlu0 %v3522, 96
      %v3975 = vpop.permute.xlu0 %3974
      %3976 = vrot.lane.b32.xlu0 %v3523, 96
      %v3977 = vpop.permute.xlu0 %3976
      %3978 = vrot.lane.b32.xlu0 %v3524, 96
      %v3979 = vpop.permute.xlu0 %3978
      %3980 = vrot.lane.b32.xlu0 %v3525, 96
      %v3981 = vpop.permute.xlu0 %3980
      %3982 = vrot.lane.b32.xlu0 %v3526, 96
      %v3983 = vpop.permute.xlu0 %3982
      %3984 = vrot.lane.b32.xlu0 %v3527, 96
      %v3985 = vpop.permute.xlu0 %3984
      %v3994 = vadd.f32 %v3605, %v3971
      %v3995 = vadd.f32 %v3606, %v3973
      %v3996 = vadd.f32 %v3607, %v3975
      %v3997 = vadd.f32 %v3608, %v3977
      %v3998 = vadd.f32 %v3609, %v3979
      %v3999 = vadd.f32 %v3610, %v3981
      %v4000 = vadd.f32 %v3611, %v3983
      %v4001 = vadd.f32 %v3961, %v3985
      %4002 = vrot.lane.b32.xlu0 %v3197, 88
      %v4003 = vpop.permute.xlu0 %4002
      %4004 = vrot.lane.b32.xlu0 %v3203, 88
      %v4005 = vpop.permute.xlu0 %4004
      %4006 = vrot.lane.b32.xlu0 %v3209, 88
      %v4007 = vpop.permute.xlu0 %4006
      %4008 = vrot.lane.b32.xlu0 %v3215, 88
      %v4009 = vpop.permute.xlu0 %4008
      %4010 = vrot.lane.b32.xlu0 %v3221, 88
      %v4011 = vpop.permute.xlu0 %4010
      %4012 = vrot.lane.b32.xlu0 %v3227, 88
      %v4013 = vpop.permute.xlu0 %4012
      %4014 = vrot.lane.b32.xlu0 %v3233, 88
      %v4015 = vpop.permute.xlu0 %4014
      %4016 = vrot.lane.b32.xlu0 %v3239, 88
      %v4017 = vpop.permute.xlu0 %4016
      %v4026 = vadd.f32 %v3994, %v4003
      %v4027 = vadd.f32 %v3995, %v4005
      %v4028 = vadd.f32 %v3996, %v4007
      %v4029 = vadd.f32 %v3997, %v4009
      %v4030 = vadd.f32 %v3998, %v4011
      %v4031 = vadd.f32 %v3999, %v4013
      %v4032 = vadd.f32 %v4000, %v4015
      %v4033 = vadd.f32 %v4001, %v4017
      %v4034 = vmul.f32 %v4026, 0.25
      %v4035 = vmul.f32 %v4027, 0.25
      %v4036 = vmul.f32 %v4028, 0.25
      %v4037 = vmul.f32 %v4029, 0.25
      %v4038 = vmul.f32 %v4030, 0.25
      %v4039 = vmul.f32 %v4031, 0.25
      %v4040 = vmul.f32 %v4032, 0.25
      %v4041 = vmul.f32 %v4033, 0.25
      %s4042 = scalar_lea.vmem %s163, 192
      %4043 = vst.msk [vmem:[%s4042] sm:$0xff] %vm458, %v4034
      %4044 = vst.msk [vmem:[%s4042 + $0x8] sm:$0xff] %vm458, %v4035
      %4045 = vst.msk [vmem:[%s4042 + $0x10] sm:$0xff] %vm458, %v4036
      %4046 = vst.msk [vmem:[%s4042 + $0x18] sm:$0xff] %vm458, %v4037
      %4047 = vst.msk [vmem:[%s4042 + $0x20] sm:$0xff] %vm458, %v4038
      %4048 = vst.msk [vmem:[%s4042 + $0x28] sm:$0xff] %vm458, %v4039
      %4049 = vst.msk [vmem:[%s4042 + $0x30] sm:$0xff] %vm458, %v4040
      %4050 = vst.msk [vmem:[%s4042 + $0x38] sm:$0xff] %vm458, %v4041
      %p4051 = scmp.lt.s32.totalorder %s13, 1
      %s4052 = scalar_select %p4051, %s13, 1
      %s4053 = smul.addr %s4052, 32
      %s4054 = smul.addr %s4053, 8
      %s4055 = scalar_lea.vmem %s2, %s4054
      // Predicated region
      $region29: #{ral_forward.1} parent=27 // pred_check
        %p4056 = pneg %p83
      $region30: #{ral_forward.1} parent=27 // pred_check_branch
        %4058 = sbr.rel (%p4056) target = $region32
      $region31: #{ral_forward.1} parent=27 // pred_region
        _
      $region32: #{ral_forward.1} parent=27 // pred_fallthru
        _
    $region28: #{ral_forward.1} parent=5 // pred_fallthru
      _
    %p4059 = scmp.le.s32.totalorder 2, %s8
    // Predicated region
    $region33: #{ral_forward.1} parent=5 // pred_check
      %p4060 = pneg %p4059
    $region34: #{ral_forward.1} parent=5 // pred_check_branch
      %4062 = sbr.rel (%p4060) target = $region36
    $region35: #{ral_forward.1} parent=5 // pred_region
      %s4063 = ssub.s32 %s8, 2
      // Predicated region
      $region37: #{ral_forward.1} parent=35 // pred_check
        %p4064 = pneg %p89
      $region38: #{ral_forward.1} parent=35 // pred_check_branch
        %4066 = sbr.rel (%p4064) target = $region40
      $region39: #{ral_forward.1} parent=35 // pred_region
        %p4067 = scmp.lt.s32.totalorder %s14, 1
        %s4068 = scalar_select %p4067, %s14, 1
        %s4069 = smul.addr %s4068, 32
        %s4070 = smul.addr %s4069, 8
        %s4071 = scalar_lea.vmem %s2, %s4070
      $region40: #{ral_forward.1} parent=35 // pred_fallthru
        _
    $region36: #{ral_forward.1} parent=5 // pred_fallthru
      _
  $region6: #{ral_forward.1} parent=0 // loop_footer
    %s12 = sadd.s32 1, %s8
  $region7: #{ral_forward.1} parent=0 // loop_footer_branch
    %7 = sbr.rel target = $region3
  $region8: #{ral_forward.1} parent=0 // loop_exit
    _

</llo_original>
